<compile_context>
chip_gen: v5e
topology: v5e:2x2
jax: 0.10.0
libtpu: 0.0.40
codegen_flags: <defaults>
</compile_context>

<pallas_src>
import functools
import math

import jax
import jax.numpy as jnp
from jax.experimental import pallas as pl
from jax.experimental.pallas import tpu as pltpu  # noqa: F401  (TPU backend import)

D_MODEL = 32
N_HEADS = 4
D_HEAD = D_MODEL // N_HEADS
D_FF = 64
N_LAYERS = 2
EPS = 1e-5
_SCALE = 1.0 / math.sqrt(D_HEAD)
_NEG_INF = -1e9
_NEG_BIG = 1e9

# ---- packed weight slab column layout (starts 128-lane aligned) -------------
_C_QKV_S = 0      # width 192 : [wq*scale | wk | wvo (4 x 32)]
_C_Q_C = 256      # width 32  : wq_c * scale
_C_KVO_C = 384    # width 160 : [wk_c | wvo_c (4 x 32)]
_C_FF1 = 640      # width 64  : ff_w1
_WA_COLS = 768

# ---- packed bias / LN vector slab row layout (per layer, width 192) ---------
_R_BQKV_S = 0     # width 192
_R_BO_S = 1       # width 32
_R_BQ_C = 2       # width 32
_R_BKVO_C = 3     # width 160
_R_BO_C = 4       # width 32
_R_FB1 = 5        # width 64
_R_FB2 = 6        # width 32
_R_LNG = 7        # rows 7..9   (gamma for sublayers 0,1,2)
_R_LNB = 10       # rows 10..12 (beta  for sublayers 0,1,2)
_ROWS_PER_LAYER = 13
_VEC_COLS = 192


# ----------------------------- in-kernel helpers ---------------------------

def _layernorm(x2d, g, b):
    """x2d: (N, D); g/b: (1, D). Biased variance, eps=1e-5 (matches nn.LayerNorm)."""
    mu = jnp.mean(x2d, axis=-1, keepdims=True)
    var = jnp.mean(jnp.square(x2d - mu), axis=-1, keepdims=True)
    return (x2d - mu) * jax.lax.rsqrt(var + EPS) * g + b


def _attend(qmat, kvmat, q_off, k_off, vo_off, mask_add, B, Tq, Skv):
    """All-heads attention with the output projection pre-folded into V.

    qmat:  (B*Tq, >=q_off+D)  rows hold per-head Q blocks (8 lanes / head, scale folded in)
    kvmat: (B*Skv, ...)       rows hold per-head K blocks (8 lanes) and VO blocks (32 lanes)
    mask_add: (H*B, Tq, Skv) additive mask (0 / -1e9) or None.
    Returns (B*Tq, D) — already projected (sum over heads of p_h @ (v_h @ wo_h)).
    NOTE: relies on Tq, Skv being multiples of 8 so the head-batch reshapes stay
    tile-clean (true for the toy shapes used here).
    """
    H, D, Dh = N_HEADS, D_MODEL, D_HEAD
    # Gather heads into a leading batch dim ONCE (static lane slices, none cross a
    # 128-lane tile boundary; stack/reshape are tile-granularity relabelings).
    qh = jnp.stack([qmat[:, q_off + h * Dh:q_off + (h + 1) * Dh] for h in range(H)], axis=0)
    kh = jnp.stack([kvmat[:, k_off + h * Dh:k_off + (h + 1) * Dh] for h in range(H)], axis=0)
    voh = jnp.stack([kvmat[:, vo_off + h * D:vo_off + (h + 1) * D] for h in range(H)], axis=0)
    qh = qh.reshape(H * B, Tq, Dh)          # (H*B, Tq, Dh)
    kh = kh.reshape(H * B, Skv, Dh)         # (H*B, Skv, Dh)
    voh = voh.reshape(H * B, Skv, D)        # (H*B, Skv, D)   -- V already projected by wo

    # One score einsum + one softmax + one context einsum for ALL heads.
    s = jnp.einsum("ntd,nsd->nts", qh, kh, preferred_element_type=jnp.float32)
    if mask_add is not None:
        s = s + mask_add                    # additive mask (single VPU add)
    s = s - jnp.max(s, axis=-1, keepdims=True)
    p = jnp.exp(s)
    p = p * pl.reciprocal(jnp.sum(p, axis=-1, keepdims=True), approx=False)
    ctx = jnp.einsum("nts,nsd->ntd", p, voh, preferred_element_type=jnp.float32)

    # Sum the per-head (already-projected) contributions: (H, B*Tq, D) -> (B*Tq, D).
    ctx = ctx.reshape(H, B * Tq, D)
    out = ctx[0]
    for h in range(1, H):
        out = out + ctx[h]
    return out


# ----------------------------- fused decoder kernel ------------------------

def _mdecoder_kernel(B, T, Sr,
                     x_ref, sent_ref, mask_ref,
                     wa_ref, wb_ref, vec_ref, o_ref):
    D = D_MODEL
    x = x_ref[...].astype(jnp.float32)          # (B*T, D)
    sent = sent_ref[...].astype(jnp.float32)    # (B*Sr, D)

    # Additive mask, tiled across heads once; reused by every layer's self-attention.
    m_add = (mask_ref[...].astype(jnp.float32) - 1.0) * _NEG_BIG      # (B, T, T)
    m_add = jnp.concatenate([m_add] * N_HEADS, axis=0)                # (H*B, T, T)

    for l in range(N_LAYERS):                   # static unroll over layers
        r0 = l * _ROWS_PER_LAYER
        w0 = l * D
        wf = l * D_FF

        # --- sublayer 0: masked multi-head self-attention (pre-LN residual) ------
        xn = _layernorm(x, vec_ref[r0 + _R_LNG + 0:r0 + _R_LNG + 1, 0:D],
                        vec_ref[r0 + _R_LNB + 0:r0 + _R_LNB + 1, 0:D])
        qkv = jnp.dot(xn, wa_ref[w0:w0 + D, _C_QKV_S:_C_QKV_S + 192],
                      preferred_element_type=jnp.float32) + vec_ref[r0 + _R_BQKV_S:r0 + _R_BQKV_S + 1, 0:192]
        attn = _attend(qkv, qkv, 0, D, 2 * D, m_add, B, T, T)
        x = x + attn + vec_ref[r0 + _R_BO_S:r0 + _R_BO_S + 1, 0:D]

        # --- sublayer 1: dec_block == cross-attention over sent_repr -------------
        # TODO(synk): dec_block implemented as standard unmasked cross-attention.
        xn = _layernorm(x, vec_ref[r0 + _R_LNG + 1:r0 + _R_LNG + 2, 0:D],
                        vec_ref[r0 + _R_LNB + 1:r0 + _R_LNB + 2, 0:D])
        qc = jnp.dot(xn, wa_ref[w0:w0 + D, _C_Q_C:_C_Q_C + D],
                     preferred_element_type=jnp.float32) + vec_ref[r0 + _R_BQ_C:r0 + _R_BQ_C + 1, 0:D]
        kvo = jnp.dot(sent, wa_ref[w0:w0 + D, _C_KVO_C:_C_KVO_C + 160],
                      preferred_element_type=jnp.float32) + vec_ref[r0 + _R_BKVO_C:r0 + _R_BKVO_C + 1, 0:160]
        attn = _attend(qc, kvo, 0, 0, D, None, B, T, Sr)
        x = x + attn + vec_ref[r0 + _R_BO_C:r0 + _R_BO_C + 1, 0:D]

        # --- sublayer 2: position-wise feed-forward --------------------------
        xn = _layernorm(x, vec_ref[r0 + _R_LNG + 2:r0 + _R_LNG + 3, 0:D],
                        vec_ref[r0 + _R_LNB + 2:r0 + _R_LNB + 3, 0:D])
        h1 = jnp.maximum(
            jnp.dot(xn, wa_ref[w0:w0 + D, _C_FF1:_C_FF1 + D_FF],
                    preferred_element_type=jnp.float32)
            + vec_ref[r0 + _R_FB1:r0 + _R_FB1 + 1, 0:D_FF], 0.0)
        x = x + jnp.dot(h1, wb_ref[wf:wf + D_FF, :],
                        preferred_element_type=jnp.float32) \
              + vec_ref[r0 + _R_FB2:r0 + _R_FB2 + 1, 0:D]

    rf = N_LAYERS * _ROWS_PER_LAYER
    xf = _layernorm(x, vec_ref[rf:rf + 1, 0:D], vec_ref[rf + 1:rf + 2, 0:D])
    o_ref[...] = xf.astype(o_ref.dtype)


def mdecoder(packed, x, tgt_mask, sent_repr):
    B, T, D = x.shape
    Sr = sent_repr.shape[1]
    kernel = functools.partial(_mdecoder_kernel, B, T, Sr)
    out2 = pl.pallas_call(
        kernel,
        out_shape=jax.ShapeDtypeStruct((B * T, D), x.dtype),
    )(x.reshape(B * T, D), sent_repr.reshape(B * Sr, D), tgt_mask,
      packed["wa"], packed["wb"], packed["vec"])
    return out2.reshape(B, T, D)


# ----------------------------- offline parameter packing -------------------

def pack_params(p):
    """Pack the per-module parameters into 3 VMEM-friendly slabs (one-time, free)."""
    D, Dh, H = D_MODEL, D_HEAD, N_HEADS

    def pad_cols(a, width):
        return jnp.pad(a, ((0, 0), (0, width - a.shape[1])))

    def pad_row(v):
        v = v.reshape(1, -1)
        return jnp.pad(v, ((0, 0), (0, _VEC_COLS - v.shape[1])))

    wa_blocks, wb_blocks, vec_rows = [], [], []
    for l in range(N_LAYERS):
        wqkv = p["w_qkv_s"][l]
        wq, wk, wv = wqkv[:, :D] * _SCALE, wqkv[:, D:2 * D], wqkv[:, 2 * D:]
        wo = p["w_o_s"][l]
        wvo = jnp.concatenate(
            [wv[:, h * Dh:(h + 1) * Dh] @ wo[h * Dh:(h + 1) * Dh, :] for h in range(H)], axis=1)

        wq_c = p["w_q_c"][l] * _SCALE
        wkv_c = p["w_kv_c"][l]
        wk_c, wv_c = wkv_c[:, :D], wkv_c[:, D:]
        wo_c = p["w_o_c"][l]
        wvo_c = jnp.concatenate(
            [wv_c[:, h * Dh:(h + 1) * Dh] @ wo_c[h * Dh:(h + 1) * Dh, :] for h in range(H)], axis=1)

        wa_l = jnp.concatenate([
            pad_cols(jnp.concatenate([wq, wk, wvo], axis=1), 256),     # cols   0:256
            pad_cols(wq_c, 128),                                       # cols 256:384
            pad_cols(jnp.concatenate([wk_c, wvo_c], axis=1), 256),     # cols 384:640
            pad_cols(p["ff_w1"][l], 128),                              # cols 640:768
        ], axis=1)
        wa_blocks.append(wa_l)
        wb_blocks.append(p["ff_w2"][l])

        bqkv = p["b_qkv_s"][l].reshape(-1)
        bq, bk, bv = bqkv[:D] * _SCALE, bqkv[D:2 * D], bqkv[2 * D:]
        bvo = jnp.concatenate(
            [bv[h * Dh:(h + 1) * Dh] @ wo[h * Dh:(h + 1) * Dh, :] for h in range(H)])
        bkv_c = p["b_kv_c"][l].reshape(-1)
        bk_c, bv_c = bkv_c[:D], bkv_c[D:]
        bvo_c = jnp.concatenate(
            [bv_c[h * Dh:(h + 1) * Dh] @ wo_c[h * Dh:(h + 1) * Dh, :] for h in range(H)])

        rows = [
            jnp.concatenate([bq, bk, bvo]),                 # _R_BQKV_S
            p["b_o_s"][l].reshape(-1),                      # _R_BO_S
            p["b_q_c"][l].reshape(-1) * _SCALE,             # _R_BQ_C
            jnp.concatenate([bk_c, bvo_c]),                 # _R_BKVO_C
            p["b_o_c"][l].reshape(-1),                      # _R_BO_C
            p["ff_b1"][l].reshape(-1),                      # _R_FB1
            p["ff_b2"][l].reshape(-1),                      # _R_FB2
            p["ln_g"][l][0], p["ln_g"][l][1], p["ln_g"][l][2],
            p["ln_b"][l][0], p["ln_b"][l][1], p["ln_b"][l][2],
        ]
        vec_rows.extend(pad_row(r) for r in rows)

    vec_rows.append(pad_row(p["norm_g"].reshape(-1)))
    vec_rows.append(pad_row(p["norm_b"].reshape(-1)))

    return {
        "wa": jnp.concatenate(wa_blocks, axis=0),    # (N_LAYERS*32, 768)
        "wb": jnp.concatenate(wb_blocks, axis=0),    # (N_LAYERS*64, 32)
        "vec": jnp.concatenate(vec_rows, axis=0),    # (N_LAYERS*13 + 2, 192)
    }


# ----------------------------- pure-JAX reference --------------------------

def _ref_layernorm(x, g, b):
    mu = jnp.mean(x, -1, keepdims=True)
    var = jnp.mean((x - mu) ** 2, -1, keepdims=True)
    return (x - mu) / jnp.sqrt(var + EPS) * g + b


def _ref_mha(q2, k2, v2, mask, wo, bo, B, Tq, S):
    q = q2.reshape(B, Tq, N_HEADS, D_HEAD).transpose(0, 2, 1, 3)
    k = k2.reshape(B, S, N_HEADS, D_HEAD).transpose(0, 2, 1, 3)
    v = v2.reshape(B, S, N_HEADS, D_HEAD).transpose(0, 2, 1, 3)
    s = jnp.einsum("bhtd,bhsd->bhts", q, k) * _SCALE
    if mask is not None:
        s = jnp.where(mask[:, None] > 0, s, _NEG_INF)
    p = jax.nn.softmax(s, axis=-1)
    ctx = jnp.einsum("bhts,bhsd->bhtd", p, v)
    ctx = ctx.transpose(0, 2, 1, 3).reshape(B * Tq, D_MODEL)
    return ctx @ wo + bo


def mdecoder_ref(params, x, tgt_mask, sent_repr):
    B, T, D = x.shape
    Sr = sent_repr.shape[1]
    x2 = x.reshape(B * T, D).astype(jnp.float32)
    s2 = sent_repr.reshape(B * Sr, D).astype(jnp.float32)
    for l in range(N_LAYERS):
        lg, lb = params["ln_g"][l], params["ln_b"][l]
        xn = _ref_layernorm(x2, lg[0:1], lb[0:1])
        qkv = xn @ params["w_qkv_s"][l] + params["b_qkv_s"][l]
        x2 = x2 + _ref_mha(qkv[:, :D], qkv[:, D:2 * D], qkv[:, 2 * D:], tgt_mask,
                           params["w_o_s"][l], params["b_o_s"][l], B, T, T)
        xn = _ref_layernorm(x2, lg[1:2], lb[1:2])
        qc = xn @ params["w_q_c"][l] + params["b_q_c"][l]
        kv = s2 @ params["w_kv_c"][l] + params["b_kv_c"][l]
        x2 = x2 + _ref_mha(qc, kv[:, :D], kv[:, D:], None,
                           params["w_o_c"][l], params["b_o_c"][l], B, T, Sr)
        xn = _ref_layernorm(x2, lg[2:3], lb[2:3])
        h = jax.nn.relu(xn @ params["ff_w1"][l] + params["ff_b1"][l])
        x2 = x2 + h @ params["ff_w2"][l] + params["ff_b2"][l]
    return _ref_layernorm(x2, params["norm_g"], params["norm_b"]).reshape(B, T, D)


# ----------------------------- deterministic init --------------------------

def init_params(key):
    scale = 0.05
    stacks = {k: [] for k in ("w_qkv_s", "w_o_s", "w_q_c", "w_kv_c", "w_o_c",
                              "ff_w1", "ff_w2")}
    for lk in jax.random.split(key, N_LAYERS):
        ks = jax.random.split(lk, 10)
        wq = scale * jax.random.normal(ks[0], (D_MODEL, D_MODEL), jnp.float32)
        wk = scale * jax.random.normal(ks[1], (D_MODEL, D_MODEL), jnp.float32)
        wv = scale * jax.random.normal(ks[2], (D_MODEL, D_MODEL), jnp.float32)
        stacks["w_qkv_s"].append(jnp.concatenate([wq, wk, wv], axis=1))
        stacks["w_o_s"].append(scale * jax.random.normal(ks[3], (D_MODEL, D_MODEL), jnp.float32))
        stacks["w_q_c"].append(scale * jax.random.normal(ks[4], (D_MODEL, D_MODEL), jnp.float32))
        wkc = scale * jax.random.normal(ks[5], (D_MODEL, D_MODEL), jnp.float32)
        wvc = scale * jax.random.normal(ks[6], (D_MODEL, D_MODEL), jnp.float32)
        stacks["w_kv_c"].append(jnp.concatenate([wkc, wvc], axis=1))
        stacks["w_o_c"].append(scale * jax.random.normal(ks[7], (D_MODEL, D_MODEL), jnp.float32))
        stacks["ff_w1"].append(scale * jax.random.normal(ks[8], (D_MODEL, D_FF), jnp.float32))
        stacks["ff_w2"].append(scale * jax.random.normal(ks[9], (D_FF, D_MODEL), jnp.float32))

    p = {k: jnp.stack(v) for k, v in stacks.items()}
    p["b_qkv_s"] = jnp.zeros((N_LAYERS, 1, 3 * D_MODEL), jnp.float32)
    p["b_o_s"] = jnp.zeros((N_LAYERS, 1, D_MODEL), jnp.float32)
    p["b_q_c"] = jnp.zeros((N_LAYERS, 1, D_MODEL), jnp.float32)
    p["b_kv_c"] = jnp.zeros((N_LAYERS, 1, 2 * D_MODEL), jnp.float32)
    p["b_o_c"] = jnp.zeros((N_LAYERS, 1, D_MODEL), jnp.float32)
    p["ff_b1"] = jnp.zeros((N_LAYERS, 1, D_FF), jnp.float32)
    p["ff_b2"] = jnp.zeros((N_LAYERS, 1, D_MODEL), jnp.float32)
    p["ln_g"] = jnp.ones((N_LAYERS, 3, D_MODEL), jnp.float32)
    p["ln_b"] = jnp.zeros((N_LAYERS, 3, D_MODEL), jnp.float32)
    p["norm_g"] = jnp.ones((1, D_MODEL), jnp.float32)
    p["norm_b"] = jnp.zeros((1, D_MODEL), jnp.float32)
    return p


# ----------------------------- main ----------------------------------------

if __name__ == "__main__":
    B, T, Sr = 2, 8, 8
    key = jax.random.PRNGKey(0)
    k_x, k_s, k_p = jax.random.split(key, 3)

    x = jax.random.normal(k_x, (B, T, D_MODEL), jnp.float32)
    sent_repr = jax.random.normal(k_s, (B, Sr, D_MODEL), jnp.float32)
    # causal (subsequent) target mask, 1 = attend, 0 = blocked
    tgt_mask = jnp.tile(jnp.tril(jnp.ones((T, T), jnp.float32))[None], (B, 1, 1))

    params = init_params(k_p)
    packed = pack_params(params)

    out = jax.block_until_ready(mdecoder(packed, x, tgt_mask, sent_repr))

    assert out.shape == (B, T, D_MODEL), out.shape
    assert bool(jnp.all(jnp.isfinite(out)))

    ref = jax.block_until_ready(mdecoder_ref(params, x, tgt_mask, sent_repr))
    assert bool(jnp.allclose(out, ref, atol=1e-4, rtol=1e-4)), float(
        jnp.max(jnp.abs(out - ref)))

    print("KERNEL_OK")
</pallas_src>

<mosaic_0001>
module attributes {stable_mosaic.version = 11 : i64} {
  func.func @_mdecoder_kernel(%arg0: memref<16x32xf32, #tpu.memory_space<vmem>>, %arg1: memref<16x32xf32, #tpu.memory_space<vmem>>, %arg2: memref<2x8x8xf32, #tpu.memory_space<vmem>>, %arg3: memref<64x768xf32, #tpu.memory_space<vmem>>, %arg4: memref<128x32xf32, #tpu.memory_space<vmem>>, %arg5: memref<28x192xf32, #tpu.memory_space<vmem>>, %arg6: memref<16x32xf32, #tpu.memory_space<vmem>>) attributes {dimension_semantics = [], scalar_prefetch = 0 : i64, scratch_operands = 0 : i64, tpu.core_type = #tpu.core_type<tc>} {
    %c0 = arith.constant 0 : index
    %c0_0 = arith.constant 0 : index
    %0 = vector.load %arg0[%c0, %c0_0] : memref<16x32xf32, #tpu.memory_space<vmem>>, vector<16x32xf32>
    %c0_1 = arith.constant 0 : index
    %c0_2 = arith.constant 0 : index
    %1 = vector.load %arg1[%c0_1, %c0_2] : memref<16x32xf32, #tpu.memory_space<vmem>>, vector<16x32xf32>
    %c0_3 = arith.constant 0 : index
    %c0_4 = arith.constant 0 : index
    %c0_5 = arith.constant 0 : index
    %2 = vector.load %arg2[%c0_3, %c0_4, %c0_5] : memref<2x8x8xf32, #tpu.memory_space<vmem>>, vector<2x8x8xf32>
    %cst = arith.constant 1.000000e+00 : f32
    %3 = vector.broadcast %cst : f32 to vector<2x8x8xf32>
    %4 = arith.subf %2, %3 : vector<2x8x8xf32>
    %cst_6 = arith.constant 1.000000e+09 : f32
    %5 = vector.broadcast %cst_6 : f32 to vector<2x8x8xf32>
    %6 = arith.mulf %4, %5 : vector<2x8x8xf32>
    %7 = tpu.concatenate %6, %6, %6, %6 in 0 : vector<2x8x8xf32>, vector<2x8x8xf32>, vector<2x8x8xf32>, vector<2x8x8xf32> -> vector<8x8x8xf32>
    %c7 = arith.constant 7 : index
    %c0_7 = arith.constant 0 : index
    %8 = vector.load %arg5[%c7, %c0_7] : memref<28x192xf32, #tpu.memory_space<vmem>>, vector<1x32xf32>
    %c10 = arith.constant 10 : index
    %c0_8 = arith.constant 0 : index
    %9 = vector.load %arg5[%c10, %c0_8] : memref<28x192xf32, #tpu.memory_space<vmem>>, vector<1x32xf32>
    %cst_9 = arith.constant dense<0.000000e+00> : vector<16xf32>
    %10 = vector.multi_reduction <add>, %0, %cst_9 [1] : vector<16x32xf32> to vector<16xf32>
    %11 = vector.shape_cast %10 : vector<16xf32> to vector<16x1xf32>
    %cst_10 = arith.constant 3.200000e+01 : f32
    %12 = vector.broadcast %cst_10 : f32 to vector<16x1xf32>
    %13 = arith.divf %11, %12 : vector<16x1xf32>
    %14 = vector.broadcast %13 : vector<16x1xf32> to vector<16x32xf32>
    %15 = arith.subf %0, %14 : vector<16x32xf32>
    %16 = arith.mulf %15, %15 : vector<16x32xf32>
    %cst_11 = arith.constant dense<0.000000e+00> : vector<16xf32>
    %17 = vector.multi_reduction <add>, %16, %cst_11 [1] : vector<16x32xf32> to vector<16xf32>
    %18 = vector.shape_cast %17 : vector<16xf32> to vector<16x1xf32>
    %cst_12 = arith.constant 3.200000e+01 : f32
    %19 = vector.broadcast %cst_12 : f32 to vector<16x1xf32>
    %20 = arith.divf %18, %19 : vector<16x1xf32>
    %21 = vector.broadcast %13 : vector<16x1xf32> to vector<16x32xf32>
    %22 = arith.subf %0, %21 : vector<16x32xf32>
    %cst_13 = arith.constant 9.99999974E-6 : f32
    %23 = vector.broadcast %cst_13 : f32 to vector<16x1xf32>
    %24 = arith.addf %20, %23 : vector<16x1xf32>
    %25 = math.rsqrt %24 : vector<16x1xf32>
    %26 = vector.broadcast %25 : vector<16x1xf32> to vector<16x32xf32>
    %27 = arith.mulf %22, %26 : vector<16x32xf32>
    %28 = vector.broadcast %8 : vector<1x32xf32> to vector<16x32xf32>
    %29 = arith.mulf %27, %28 : vector<16x32xf32>
    %30 = vector.broadcast %9 : vector<1x32xf32> to vector<16x32xf32>
    %31 = arith.addf %29, %30 : vector<16x32xf32>
    %c0_14 = arith.constant 0 : index
    %c0_15 = arith.constant 0 : index
    %32 = vector.load %arg3[%c0_14, %c0_15] : memref<64x768xf32, #tpu.memory_space<vmem>>, vector<32x192xf32>
    %cst_16 = arith.constant dense<0.000000e+00> : vector<16x192xf32>
    %33 = tpu.matmul %31, %32, %cst_16 {dimension_numbers = #tpu.dot_dimension_numbers<[1], [0], [0], [1], [0, 0, 1, 1], [], []>} : vector<16x32xf32>, vector<32x192xf32>, vector<16x192xf32> -> vector<16x192xf32>
    %c0_17 = arith.constant 0 : index
    %c0_18 = arith.constant 0 : index
    %34 = vector.load %arg5[%c0_17, %c0_18] : memref<28x192xf32, #tpu.memory_space<vmem>>, vector<1x192xf32>
    %35 = vector.broadcast %34 : vector<1x192xf32> to vector<16x192xf32>
    %36 = arith.addf %33, %35 : vector<16x192xf32>
    %37 = vector.extract_strided_slice %36 {offsets = [0, 0], sizes = [16, 8], strides = [1, 1]} : vector<16x192xf32> to vector<16x8xf32>
    %38 = vector.extract_strided_slice %36 {offsets = [0, 8], sizes = [16, 8], strides = [1, 1]} : vector<16x192xf32> to vector<16x8xf32>
    %39 = vector.extract_strided_slice %36 {offsets = [0, 16], sizes = [16, 8], strides = [1, 1]} : vector<16x192xf32> to vector<16x8xf32>
    %40 = vector.extract_strided_slice %36 {offsets = [0, 24], sizes = [16, 8], strides = [1, 1]} : vector<16x192xf32> to vector<16x8xf32>
    %41 = vector.shape_cast %37 : vector<16x8xf32> to vector<1x16x8xf32>
    %42 = vector.shape_cast %38 : vector<16x8xf32> to vector<1x16x8xf32>
    %43 = vector.shape_cast %39 : vector<16x8xf32> to vector<1x16x8xf32>
    %44 = vector.shape_cast %40 : vector<16x8xf32> to vector<1x16x8xf32>
    %45 = tpu.concatenate %41, %42, %43, %44 in 0 : vector<1x16x8xf32>, vector<1x16x8xf32>, vector<1x16x8xf32>, vector<1x16x8xf32> -> vector<4x16x8xf32>
    %46 = vector.extract_strided_slice %36 {offsets = [0, 32], sizes = [16, 8], strides = [1, 1]} : vector<16x192xf32> to vector<16x8xf32>
    %47 = vector.extract_strided_slice %36 {offsets = [0, 40], sizes = [16, 8], strides = [1, 1]} : vector<16x192xf32> to vector<16x8xf32>
    %48 = vector.extract_strided_slice %36 {offsets = [0, 48], sizes = [16, 8], strides = [1, 1]} : vector<16x192xf32> to vector<16x8xf32>
    %49 = vector.extract_strided_slice %36 {offsets = [0, 56], sizes = [16, 8], strides = [1, 1]} : vector<16x192xf32> to vector<16x8xf32>
    %50 = vector.shape_cast %46 : vector<16x8xf32> to vector<1x16x8xf32>
    %51 = vector.shape_cast %47 : vector<16x8xf32> to vector<1x16x8xf32>
    %52 = vector.shape_cast %48 : vector<16x8xf32> to vector<1x16x8xf32>
    %53 = vector.shape_cast %49 : vector<16x8xf32> to vector<1x16x8xf32>
    %54 = tpu.concatenate %50, %51, %52, %53 in 0 : vector<1x16x8xf32>, vector<1x16x8xf32>, vector<1x16x8xf32>, vector<1x16x8xf32> -> vector<4x16x8xf32>
    %55 = vector.extract_strided_slice %36 {offsets = [0, 64], sizes = [16, 32], strides = [1, 1]} : vector<16x192xf32> to vector<16x32xf32>
    %56 = vector.extract_strided_slice %36 {offsets = [0, 96], sizes = [16, 32], strides = [1, 1]} : vector<16x192xf32> to vector<16x32xf32>
    %57 = vector.extract_strided_slice %36 {offsets = [0, 128], sizes = [16, 32], strides = [1, 1]} : vector<16x192xf32> to vector<16x32xf32>
    %58 = vector.extract_strided_slice %36 {offsets = [0, 160], sizes = [16, 32], strides = [1, 1]} : vector<16x192xf32> to vector<16x32xf32>
    %59 = vector.shape_cast %55 : vector<16x32xf32> to vector<1x16x32xf32>
    %60 = vector.shape_cast %56 : vector<16x32xf32> to vector<1x16x32xf32>
    %61 = vector.shape_cast %57 : vector<16x32xf32> to vector<1x16x32xf32>
    %62 = vector.shape_cast %58 : vector<16x32xf32> to vector<1x16x32xf32>
    %63 = tpu.concatenate %59, %60, %61, %62 in 0 : vector<1x16x32xf32>, vector<1x16x32xf32>, vector<1x16x32xf32>, vector<1x16x32xf32> -> vector<4x16x32xf32>
    %64 = vector.shape_cast %45 : vector<4x16x8xf32> to vector<8x8x8xf32>
    %65 = vector.shape_cast %54 : vector<4x16x8xf32> to vector<8x8x8xf32>
    %66 = vector.shape_cast %63 : vector<4x16x32xf32> to vector<8x8x32xf32>
    "tpu.trace_start"() <{level = 10 : i32, message = "ntd,nsd->nts"}> : () -> ()
    %cst_19 = arith.constant dense<0.000000e+00> : vector<8x8x8xf32>
    %67 = tpu.matmul %64, %65, %cst_19 {dimension_numbers = #tpu.dot_dimension_numbers<[2], [2], [1], [1], [0, 0, 0, 1, 1, 1], [0], [0]>} : vector<8x8x8xf32>, vector<8x8x8xf32>, vector<8x8x8xf32> -> vector<8x8x8xf32>
    "tpu.trace_stop"() : () -> ()
    %68 = arith.addf %67, %7 : vector<8x8x8xf32>
    %cst_20 = arith.constant dense<0xFF800000> : vector<8x8xf32>
    %69 = vector.multi_reduction <maximumf>, %68, %cst_20 [2] : vector<8x8x8xf32> to vector<8x8xf32>
    %70 = vector.shape_cast %69 : vector<8x8xf32> to vector<8x8x1xf32>
    %71 = vector.broadcast %70 : vector<8x8x1xf32> to vector<8x8x8xf32>
    %72 = arith.subf %68, %71 : vector<8x8x8xf32>
    %73 = math.exp %72 : vector<8x8x8xf32>
    %cst_21 = arith.constant dense<0.000000e+00> : vector<8x8xf32>
    %74 = vector.multi_reduction <add>, %73, %cst_21 [2] : vector<8x8x8xf32> to vector<8x8xf32>
    %75 = vector.shape_cast %74 : vector<8x8xf32> to vector<8x8x1xf32>
    %76 = tpu.reciprocal %75 : vector<8x8x1xf32> -> vector<8x8x1xf32>
    %77 = vector.broadcast %76 : vector<8x8x1xf32> to vector<8x8x8xf32>
    %78 = arith.mulf %73, %77 : vector<8x8x8xf32>
    "tpu.trace_start"() <{level = 10 : i32, message = "nts,nsd->ntd"}> : () -> ()
    %cst_22 = arith.constant dense<0.000000e+00> : vector<8x8x32xf32>
    %79 = tpu.matmul %78, %66, %cst_22 {dimension_numbers = #tpu.dot_dimension_numbers<[2], [1], [1], [2], [0, 0, 0, 1, 1, 2], [0], [0]>} : vector<8x8x8xf32>, vector<8x8x32xf32>, vector<8x8x32xf32> -> vector<8x8x32xf32>
    "tpu.trace_stop"() : () -> ()
    %80 = vector.shape_cast %79 : vector<8x8x32xf32> to vector<4x16x32xf32>
    %81 = vector.extract_strided_slice %80 {offsets = [0, 0, 0], sizes = [1, 16, 32], strides = [1, 1, 1]} : vector<4x16x32xf32> to vector<1x16x32xf32>
    %82 = vector.shape_cast %81 : vector<1x16x32xf32> to vector<16x32xf32>
    %83 = vector.extract_strided_slice %80 {offsets = [1, 0, 0], sizes = [1, 16, 32], strides = [1, 1, 1]} : vector<4x16x32xf32> to vector<1x16x32xf32>
    %84 = vector.shape_cast %83 : vector<1x16x32xf32> to vector<16x32xf32>
    %85 = arith.addf %82, %84 : vector<16x32xf32>
    %86 = vector.extract_strided_slice %80 {offsets = [2, 0, 0], sizes = [1, 16, 32], strides = [1, 1, 1]} : vector<4x16x32xf32> to vector<1x16x32xf32>
    %87 = vector.shape_cast %86 : vector<1x16x32xf32> to vector<16x32xf32>
    %88 = arith.addf %85, %87 : vector<16x32xf32>
    %89 = vector.extract_strided_slice %80 {offsets = [3, 0, 0], sizes = [1, 16, 32], strides = [1, 1, 1]} : vector<4x16x32xf32> to vector<1x16x32xf32>
    %90 = vector.shape_cast %89 : vector<1x16x32xf32> to vector<16x32xf32>
    %91 = arith.addf %88, %90 : vector<16x32xf32>
    %92 = arith.addf %0, %91 : vector<16x32xf32>
    %c1 = arith.constant 1 : index
    %c0_23 = arith.constant 0 : index
    %93 = vector.load %arg5[%c1, %c0_23] : memref<28x192xf32, #tpu.memory_space<vmem>>, vector<1x32xf32>
    %94 = vector.broadcast %93 : vector<1x32xf32> to vector<16x32xf32>
    %95 = arith.addf %92, %94 : vector<16x32xf32>
    %c8 = arith.constant 8 : index
    %c0_24 = arith.constant 0 : index
    %96 = vector.load %arg5[%c8, %c0_24] : memref<28x192xf32, #tpu.memory_space<vmem>>, vector<1x32xf32>
    %c11 = arith.constant 11 : index
    %c0_25 = arith.constant 0 : index
    %97 = vector.load %arg5[%c11, %c0_25] : memref<28x192xf32, #tpu.memory_space<vmem>>, vector<1x32xf32>
    %cst_26 = arith.constant dense<0.000000e+00> : vector<16xf32>
    %98 = vector.multi_reduction <add>, %95, %cst_26 [1] : vector<16x32xf32> to vector<16xf32>
    %99 = vector.shape_cast %98 : vector<16xf32> to vector<16x1xf32>
    %cst_27 = arith.constant 3.200000e+01 : f32
    %100 = vector.broadcast %cst_27 : f32 to vector<16x1xf32>
    %101 = arith.divf %99, %100 : vector<16x1xf32>
    %102 = vector.broadcast %101 : vector<16x1xf32> to vector<16x32xf32>
    %103 = arith.subf %95, %102 : vector<16x32xf32>
    %104 = arith.mulf %103, %103 : vector<16x32xf32>
    %cst_28 = arith.constant dense<0.000000e+00> : vector<16xf32>
    %105 = vector.multi_reduction <add>, %104, %cst_28 [1] : vector<16x32xf32> to vector<16xf32>
    %106 = vector.shape_cast %105 : vector<16xf32> to vector<16x1xf32>
    %cst_29 = arith.constant 3.200000e+01 : f32
    %107 = vector.broadcast %cst_29 : f32 to vector<16x1xf32>
    %108 = arith.divf %106, %107 : vector<16x1xf32>
    %109 = vector.broadcast %101 : vector<16x1xf32> to vector<16x32xf32>
    %110 = arith.subf %95, %109 : vector<16x32xf32>
    %cst_30 = arith.constant 9.99999974E-6 : f32
    %111 = vector.broadcast %cst_30 : f32 to vector<16x1xf32>
    %112 = arith.addf %108, %111 : vector<16x1xf32>
    %113 = math.rsqrt %112 : vector<16x1xf32>
    %114 = vector.broadcast %113 : vector<16x1xf32> to vector<16x32xf32>
    %115 = arith.mulf %110, %114 : vector<16x32xf32>
    %116 = vector.broadcast %96 : vector<1x32xf32> to vector<16x32xf32>
    %117 = arith.mulf %115, %116 : vector<16x32xf32>
    %118 = vector.broadcast %97 : vector<1x32xf32> to vector<16x32xf32>
    %119 = arith.addf %117, %118 : vector<16x32xf32>
    %c0_31 = arith.constant 0 : index
    %c256 = arith.constant 256 : index
    %120 = vector.load %arg3[%c0_31, %c256] : memref<64x768xf32, #tpu.memory_space<vmem>>, vector<32x32xf32>
    %cst_32 = arith.constant dense<0.000000e+00> : vector<16x32xf32>
    %121 = tpu.matmul %119, %120, %cst_32 {dimension_numbers = #tpu.dot_dimension_numbers<[1], [0], [0], [1], [0, 0, 1, 1], [], []>} : vector<16x32xf32>, vector<32x32xf32>, vector<16x32xf32> -> vector<16x32xf32>
    %c2 = arith.constant 2 : index
    %c0_33 = arith.constant 0 : index
    %122 = vector.load %arg5[%c2, %c0_33] : memref<28x192xf32, #tpu.memory_space<vmem>>, vector<1x32xf32>
    %123 = vector.broadcast %122 : vector<1x32xf32> to vector<16x32xf32>
    %124 = arith.addf %121, %123 : vector<16x32xf32>
    %c0_34 = arith.constant 0 : index
    %c384 = arith.constant 384 : index
    %125 = vector.load %arg3[%c0_34, %c384] : memref<64x768xf32, #tpu.memory_space<vmem>>, vector<32x160xf32>
    %cst_35 = arith.constant dense<0.000000e+00> : vector<16x160xf32>
    %126 = tpu.matmul %1, %125, %cst_35 {dimension_numbers = #tpu.dot_dimension_numbers<[1], [0], [0], [1], [0, 0, 1, 1], [], []>} : vector<16x32xf32>, vector<32x160xf32>, vector<16x160xf32> -> vector<16x160xf32>
    %c3 = arith.constant 3 : index
    %c0_36 = arith.constant 0 : index
    %127 = vector.load %arg5[%c3, %c0_36] : memref<28x192xf32, #tpu.memory_space<vmem>>, vector<1x160xf32>
    %128 = vector.broadcast %127 : vector<1x160xf32> to vector<16x160xf32>
    %129 = arith.addf %126, %128 : vector<16x160xf32>
    %130 = vector.extract_strided_slice %124 {offsets = [0, 0], sizes = [16, 8], strides = [1, 1]} : vector<16x32xf32> to vector<16x8xf32>
    %131 = vector.extract_strided_slice %124 {offsets = [0, 8], sizes = [16, 8], strides = [1, 1]} : vector<16x32xf32> to vector<16x8xf32>
    %132 = vector.extract_strided_slice %124 {offsets = [0, 16], sizes = [16, 8], strides = [1, 1]} : vector<16x32xf32> to vector<16x8xf32>
    %133 = vector.extract_strided_slice %124 {offsets = [0, 24], sizes = [16, 8], strides = [1, 1]} : vector<16x32xf32> to vector<16x8xf32>
    %134 = vector.shape_cast %130 : vector<16x8xf32> to vector<1x16x8xf32>
    %135 = vector.shape_cast %131 : vector<16x8xf32> to vector<1x16x8xf32>
    %136 = vector.shape_cast %132 : vector<16x8xf32> to vector<1x16x8xf32>
    %137 = vector.shape_cast %133 : vector<16x8xf32> to vector<1x16x8xf32>
    %138 = tpu.concatenate %134, %135, %136, %137 in 0 : vector<1x16x8xf32>, vector<1x16x8xf32>, vector<1x16x8xf32>, vector<1x16x8xf32> -> vector<4x16x8xf32>
    %139 = vector.extract_strided_slice %129 {offsets = [0, 0], sizes = [16, 8], strides = [1, 1]} : vector<16x160xf32> to vector<16x8xf32>
    %140 = vector.extract_strided_slice %129 {offsets = [0, 8], sizes = [16, 8], strides = [1, 1]} : vector<16x160xf32> to vector<16x8xf32>
    %141 = vector.extract_strided_slice %129 {offsets = [0, 16], sizes = [16, 8], strides = [1, 1]} : vector<16x160xf32> to vector<16x8xf32>
    %142 = vector.extract_strided_slice %129 {offsets = [0, 24], sizes = [16, 8], strides = [1, 1]} : vector<16x160xf32> to vector<16x8xf32>
    %143 = vector.shape_cast %139 : vector<16x8xf32> to vector<1x16x8xf32>
    %144 = vector.shape_cast %140 : vector<16x8xf32> to vector<1x16x8xf32>
    %145 = vector.shape_cast %141 : vector<16x8xf32> to vector<1x16x8xf32>
    %146 = vector.shape_cast %142 : vector<16x8xf32> to vector<1x16x8xf32>
    %147 = tpu.concatenate %143, %144, %145, %146 in 0 : vector<1x16x8xf32>, vector<1x16x8xf32>, vector<1x16x8xf32>, vector<1x16x8xf32> -> vector<4x16x8xf32>
    %148 = vector.extract_strided_slice %129 {offsets = [0, 32], sizes = [16, 32], strides = [1, 1]} : vector<16x160xf32> to vector<16x32xf32>
    %149 = vector.extract_strided_slice %129 {offsets = [0, 64], sizes = [16, 32], strides = [1, 1]} : vector<16x160xf32> to vector<16x32xf32>
    %150 = vector.extract_strided_slice %129 {offsets = [0, 96], sizes = [16, 32], strides = [1, 1]} : vector<16x160xf32> to vector<16x32xf32>
    %151 = vector.extract_strided_slice %129 {offsets = [0, 128], sizes = [16, 32], strides = [1, 1]} : vector<16x160xf32> to vector<16x32xf32>
    %152 = vector.shape_cast %148 : vector<16x32xf32> to vector<1x16x32xf32>
    %153 = vector.shape_cast %149 : vector<16x32xf32> to vector<1x16x32xf32>
    %154 = vector.shape_cast %150 : vector<16x32xf32> to vector<1x16x32xf32>
    %155 = vector.shape_cast %151 : vector<16x32xf32> to vector<1x16x32xf32>
    %156 = tpu.concatenate %152, %153, %154, %155 in 0 : vector<1x16x32xf32>, vector<1x16x32xf32>, vector<1x16x32xf32>, vector<1x16x32xf32> -> vector<4x16x32xf32>
    %157 = vector.shape_cast %138 : vector<4x16x8xf32> to vector<8x8x8xf32>
    %158 = vector.shape_cast %147 : vector<4x16x8xf32> to vector<8x8x8xf32>
    %159 = vector.shape_cast %156 : vector<4x16x32xf32> to vector<8x8x32xf32>
    "tpu.trace_start"() <{level = 10 : i32, message = "ntd,nsd->nts"}> : () -> ()
    %cst_37 = arith.constant dense<0.000000e+00> : vector<8x8x8xf32>
    %160 = tpu.matmul %157, %158, %cst_37 {dimension_numbers = #tpu.dot_dimension_numbers<[2], [2], [1], [1], [0, 0, 0, 1, 1, 1], [0], [0]>} : vector<8x8x8xf32>, vector<8x8x8xf32>, vector<8x8x8xf32> -> vector<8x8x8xf32>
    "tpu.trace_stop"() : () -> ()
    %cst_38 = arith.constant dense<0xFF800000> : vector<8x8xf32>
    %161 = vector.multi_reduction <maximumf>, %160, %cst_38 [2] : vector<8x8x8xf32> to vector<8x8xf32>
    %162 = vector.shape_cast %161 : vector<8x8xf32> to vector<8x8x1xf32>
    %163 = vector.broadcast %162 : vector<8x8x1xf32> to vector<8x8x8xf32>
    %164 = arith.subf %160, %163 : vector<8x8x8xf32>
    %165 = math.exp %164 : vector<8x8x8xf32>
    %cst_39 = arith.constant dense<0.000000e+00> : vector<8x8xf32>
    %166 = vector.multi_reduction <add>, %165, %cst_39 [2] : vector<8x8x8xf32> to vector<8x8xf32>
    %167 = vector.shape_cast %166 : vector<8x8xf32> to vector<8x8x1xf32>
    %168 = tpu.reciprocal %167 : vector<8x8x1xf32> -> vector<8x8x1xf32>
    %169 = vector.broadcast %168 : vector<8x8x1xf32> to vector<8x8x8xf32>
    %170 = arith.mulf %165, %169 : vector<8x8x8xf32>
    "tpu.trace_start"() <{level = 10 : i32, message = "nts,nsd->ntd"}> : () -> ()
    %cst_40 = arith.constant dense<0.000000e+00> : vector<8x8x32xf32>
    %171 = tpu.matmul %170, %159, %cst_40 {dimension_numbers = #tpu.dot_dimension_numbers<[2], [1], [1], [2], [0, 0, 0, 1, 1, 2], [0], [0]>} : vector<8x8x8xf32>, vector<8x8x32xf32>, vector<8x8x32xf32> -> vector<8x8x32xf32>
    "tpu.trace_stop"() : () -> ()
    %172 = vector.shape_cast %171 : vector<8x8x32xf32> to vector<4x16x32xf32>
    %173 = vector.extract_strided_slice %172 {offsets = [0, 0, 0], sizes = [1, 16, 32], strides = [1, 1, 1]} : vector<4x16x32xf32> to vector<1x16x32xf32>
    %174 = vector.shape_cast %173 : vector<1x16x32xf32> to vector<16x32xf32>
    %175 = vector.extract_strided_slice %172 {offsets = [1, 0, 0], sizes = [1, 16, 32], strides = [1, 1, 1]} : vector<4x16x32xf32> to vector<1x16x32xf32>
    %176 = vector.shape_cast %175 : vector<1x16x32xf32> to vector<16x32xf32>
    %177 = arith.addf %174, %176 : vector<16x32xf32>
    %178 = vector.extract_strided_slice %172 {offsets = [2, 0, 0], sizes = [1, 16, 32], strides = [1, 1, 1]} : vector<4x16x32xf32> to vector<1x16x32xf32>
    %179 = vector.shape_cast %178 : vector<1x16x32xf32> to vector<16x32xf32>
    %180 = arith.addf %177, %179 : vector<16x32xf32>
    %181 = vector.extract_strided_slice %172 {offsets = [3, 0, 0], sizes = [1, 16, 32], strides = [1, 1, 1]} : vector<4x16x32xf32> to vector<1x16x32xf32>
    %182 = vector.shape_cast %181 : vector<1x16x32xf32> to vector<16x32xf32>
    %183 = arith.addf %180, %182 : vector<16x32xf32>
    %184 = arith.addf %95, %183 : vector<16x32xf32>
    %c4 = arith.constant 4 : index
    %c0_41 = arith.constant 0 : index
    %185 = vector.load %arg5[%c4, %c0_41] : memref<28x192xf32, #tpu.memory_space<vmem>>, vector<1x32xf32>
    %186 = vector.broadcast %185 : vector<1x32xf32> to vector<16x32xf32>
    %187 = arith.addf %184, %186 : vector<16x32xf32>
    %c9 = arith.constant 9 : index
    %c0_42 = arith.constant 0 : index
    %188 = vector.load %arg5[%c9, %c0_42] : memref<28x192xf32, #tpu.memory_space<vmem>>, vector<1x32xf32>
    %c12 = arith.constant 12 : index
    %c0_43 = arith.constant 0 : index
    %189 = vector.load %arg5[%c12, %c0_43] : memref<28x192xf32, #tpu.memory_space<vmem>>, vector<1x32xf32>
    %cst_44 = arith.constant dense<0.000000e+00> : vector<16xf32>
    %190 = vector.multi_reduction <add>, %187, %cst_44 [1] : vector<16x32xf32> to vector<16xf32>
    %191 = vector.shape_cast %190 : vector<16xf32> to vector<16x1xf32>
    %cst_45 = arith.constant 3.200000e+01 : f32
    %192 = vector.broadcast %cst_45 : f32 to vector<16x1xf32>
    %193 = arith.divf %191, %192 : vector<16x1xf32>
    %194 = vector.broadcast %193 : vector<16x1xf32> to vector<16x32xf32>
    %195 = arith.subf %187, %194 : vector<16x32xf32>
    %196 = arith.mulf %195, %195 : vector<16x32xf32>
    %cst_46 = arith.constant dense<0.000000e+00> : vector<16xf32>
    %197 = vector.multi_reduction <add>, %196, %cst_46 [1] : vector<16x32xf32> to vector<16xf32>
    %198 = vector.shape_cast %197 : vector<16xf32> to vector<16x1xf32>
    %cst_47 = arith.constant 3.200000e+01 : f32
    %199 = vector.broadcast %cst_47 : f32 to vector<16x1xf32>
    %200 = arith.divf %198, %199 : vector<16x1xf32>
    %201 = vector.broadcast %193 : vector<16x1xf32> to vector<16x32xf32>
    %202 = arith.subf %187, %201 : vector<16x32xf32>
    %cst_48 = arith.constant 9.99999974E-6 : f32
    %203 = vector.broadcast %cst_48 : f32 to vector<16x1xf32>
    %204 = arith.addf %200, %203 : vector<16x1xf32>
    %205 = math.rsqrt %204 : vector<16x1xf32>
    %206 = vector.broadcast %205 : vector<16x1xf32> to vector<16x32xf32>
    %207 = arith.mulf %202, %206 : vector<16x32xf32>
    %208 = vector.broadcast %188 : vector<1x32xf32> to vector<16x32xf32>
    %209 = arith.mulf %207, %208 : vector<16x32xf32>
    %210 = vector.broadcast %189 : vector<1x32xf32> to vector<16x32xf32>
    %211 = arith.addf %209, %210 : vector<16x32xf32>
    %c0_49 = arith.constant 0 : index
    %c640 = arith.constant 640 : index
    %212 = vector.load %arg3[%c0_49, %c640] : memref<64x768xf32, #tpu.memory_space<vmem>>, vector<32x64xf32>
    %cst_50 = arith.constant dense<0.000000e+00> : vector<16x64xf32>
    %213 = tpu.matmul %211, %212, %cst_50 {dimension_numbers = #tpu.dot_dimension_numbers<[1], [0], [0], [1], [0, 0, 1, 1], [], []>} : vector<16x32xf32>, vector<32x64xf32>, vector<16x64xf32> -> vector<16x64xf32>
    %c5 = arith.constant 5 : index
    %c0_51 = arith.constant 0 : index
    %214 = vector.load %arg5[%c5, %c0_51] : memref<28x192xf32, #tpu.memory_space<vmem>>, vector<1x64xf32>
    %215 = vector.broadcast %214 : vector<1x64xf32> to vector<16x64xf32>
    %216 = arith.addf %213, %215 : vector<16x64xf32>
    %cst_52 = arith.constant 0.000000e+00 : f32
    %217 = vector.broadcast %cst_52 : f32 to vector<16x64xf32>
    %218 = arith.maximumf %216, %217 : vector<16x64xf32>
    %c0_53 = arith.constant 0 : index
    %c0_54 = arith.constant 0 : index
    %219 = vector.load %arg4[%c0_53, %c0_54] : memref<128x32xf32, #tpu.memory_space<vmem>>, vector<64x32xf32>
    %cst_55 = arith.constant dense<0.000000e+00> : vector<16x32xf32>
    %220 = tpu.matmul %218, %219, %cst_55 {dimension_numbers = #tpu.dot_dimension_numbers<[1], [0], [0], [1], [0, 0, 1, 1], [], []>} : vector<16x64xf32>, vector<64x32xf32>, vector<16x32xf32> -> vector<16x32xf32>
    %221 = arith.addf %187, %220 : vector<16x32xf32>
    %c6 = arith.constant 6 : index
    %c0_56 = arith.constant 0 : index
    %222 = vector.load %arg5[%c6, %c0_56] : memref<28x192xf32, #tpu.memory_space<vmem>>, vector<1x32xf32>
    %223 = vector.broadcast %222 : vector<1x32xf32> to vector<16x32xf32>
    %224 = arith.addf %221, %223 : vector<16x32xf32>
    %c20 = arith.constant 20 : index
    %c0_57 = arith.constant 0 : index
    %225 = vector.load %arg5[%c20, %c0_57] : memref<28x192xf32, #tpu.memory_space<vmem>>, vector<1x32xf32>
    %c23 = arith.constant 23 : index
    %c0_58 = arith.constant 0 : index
    %226 = vector.load %arg5[%c23, %c0_58] : memref<28x192xf32, #tpu.memory_space<vmem>>, vector<1x32xf32>
    %cst_59 = arith.constant dense<0.000000e+00> : vector<16xf32>
    %227 = vector.multi_reduction <add>, %224, %cst_59 [1] : vector<16x32xf32> to vector<16xf32>
    %228 = vector.shape_cast %227 : vector<16xf32> to vector<16x1xf32>
    %cst_60 = arith.constant 3.200000e+01 : f32
    %229 = vector.broadcast %cst_60 : f32 to vector<16x1xf32>
    %230 = arith.divf %228, %229 : vector<16x1xf32>
    %231 = vector.broadcast %230 : vector<16x1xf32> to vector<16x32xf32>
    %232 = arith.subf %224, %231 : vector<16x32xf32>
    %233 = arith.mulf %232, %232 : vector<16x32xf32>
    %cst_61 = arith.constant dense<0.000000e+00> : vector<16xf32>
    %234 = vector.multi_reduction <add>, %233, %cst_61 [1] : vector<16x32xf32> to vector<16xf32>
    %235 = vector.shape_cast %234 : vector<16xf32> to vector<16x1xf32>
    %cst_62 = arith.constant 3.200000e+01 : f32
    %236 = vector.broadcast %cst_62 : f32 to vector<16x1xf32>
    %237 = arith.divf %235, %236 : vector<16x1xf32>
    %238 = vector.broadcast %230 : vector<16x1xf32> to vector<16x32xf32>
    %239 = arith.subf %224, %238 : vector<16x32xf32>
    %cst_63 = arith.constant 9.99999974E-6 : f32
    %240 = vector.broadcast %cst_63 : f32 to vector<16x1xf32>
    %241 = arith.addf %237, %240 : vector<16x1xf32>
    %242 = math.rsqrt %241 : vector<16x1xf32>
    %243 = vector.broadcast %242 : vector<16x1xf32> to vector<16x32xf32>
    %244 = arith.mulf %239, %243 : vector<16x32xf32>
    %245 = vector.broadcast %225 : vector<1x32xf32> to vector<16x32xf32>
    %246 = arith.mulf %244, %245 : vector<16x32xf32>
    %247 = vector.broadcast %226 : vector<1x32xf32> to vector<16x32xf32>
    %248 = arith.addf %246, %247 : vector<16x32xf32>
    %c32 = arith.constant 32 : index
    %c0_64 = arith.constant 0 : index
    %249 = vector.load %arg3[%c32, %c0_64] : memref<64x768xf32, #tpu.memory_space<vmem>>, vector<32x192xf32>
    %cst_65 = arith.constant dense<0.000000e+00> : vector<16x192xf32>
    %250 = tpu.matmul %248, %249, %cst_65 {dimension_numbers = #tpu.dot_dimension_numbers<[1], [0], [0], [1], [0, 0, 1, 1], [], []>} : vector<16x32xf32>, vector<32x192xf32>, vector<16x192xf32> -> vector<16x192xf32>
    %c13 = arith.constant 13 : index
    %c0_66 = arith.constant 0 : index
    %251 = vector.load %arg5[%c13, %c0_66] : memref<28x192xf32, #tpu.memory_space<vmem>>, vector<1x192xf32>
    %252 = vector.broadcast %251 : vector<1x192xf32> to vector<16x192xf32>
    %253 = arith.addf %250, %252 : vector<16x192xf32>
    %254 = vector.extract_strided_slice %253 {offsets = [0, 0], sizes = [16, 8], strides = [1, 1]} : vector<16x192xf32> to vector<16x8xf32>
    %255 = vector.extract_strided_slice %253 {offsets = [0, 8], sizes = [16, 8], strides = [1, 1]} : vector<16x192xf32> to vector<16x8xf32>
    %256 = vector.extract_strided_slice %253 {offsets = [0, 16], sizes = [16, 8], strides = [1, 1]} : vector<16x192xf32> to vector<16x8xf32>
    %257 = vector.extract_strided_slice %253 {offsets = [0, 24], sizes = [16, 8], strides = [1, 1]} : vector<16x192xf32> to vector<16x8xf32>
    %258 = vector.shape_cast %254 : vector<16x8xf32> to vector<1x16x8xf32>
    %259 = vector.shape_cast %255 : vector<16x8xf32> to vector<1x16x8xf32>
    %260 = vector.shape_cast %256 : vector<16x8xf32> to vector<1x16x8xf32>
    %261 = vector.shape_cast %257 : vector<16x8xf32> to vector<1x16x8xf32>
    %262 = tpu.concatenate %258, %259, %260, %261 in 0 : vector<1x16x8xf32>, vector<1x16x8xf32>, vector<1x16x8xf32>, vector<1x16x8xf32> -> vector<4x16x8xf32>
    %263 = vector.extract_strided_slice %253 {offsets = [0, 32], sizes = [16, 8], strides = [1, 1]} : vector<16x192xf32> to vector<16x8xf32>
    %264 = vector.extract_strided_slice %253 {offsets = [0, 40], sizes = [16, 8], strides = [1, 1]} : vector<16x192xf32> to vector<16x8xf32>
    %265 = vector.extract_strided_slice %253 {offsets = [0, 48], sizes = [16, 8], strides = [1, 1]} : vector<16x192xf32> to vector<16x8xf32>
    %266 = vector.extract_strided_slice %253 {offsets = [0, 56], sizes = [16, 8], strides = [1, 1]} : vector<16x192xf32> to vector<16x8xf32>
    %267 = vector.shape_cast %263 : vector<16x8xf32> to vector<1x16x8xf32>
    %268 = vector.shape_cast %264 : vector<16x8xf32> to vector<1x16x8xf32>
    %269 = vector.shape_cast %265 : vector<16x8xf32> to vector<1x16x8xf32>
    %270 = vector.shape_cast %266 : vector<16x8xf32> to vector<1x16x8xf32>
    %271 = tpu.concatenate %267, %268, %269, %270 in 0 : vector<1x16x8xf32>, vector<1x16x8xf32>, vector<1x16x8xf32>, vector<1x16x8xf32> -> vector<4x16x8xf32>
    %272 = vector.extract_strided_slice %253 {offsets = [0, 64], sizes = [16, 32], strides = [1, 1]} : vector<16x192xf32> to vector<16x32xf32>
    %273 = vector.extract_strided_slice %253 {offsets = [0, 96], sizes = [16, 32], strides = [1, 1]} : vector<16x192xf32> to vector<16x32xf32>
    %274 = vector.extract_strided_slice %253 {offsets = [0, 128], sizes = [16, 32], strides = [1, 1]} : vector<16x192xf32> to vector<16x32xf32>
    %275 = vector.extract_strided_slice %253 {offsets = [0, 160], sizes = [16, 32], strides = [1, 1]} : vector<16x192xf32> to vector<16x32xf32>
    %276 = vector.shape_cast %272 : vector<16x32xf32> to vector<1x16x32xf32>
    %277 = vector.shape_cast %273 : vector<16x32xf32> to vector<1x16x32xf32>
    %278 = vector.shape_cast %274 : vector<16x32xf32> to vector<1x16x32xf32>
    %279 = vector.shape_cast %275 : vector<16x32xf32> to vector<1x16x32xf32>
    %280 = tpu.concatenate %276, %277, %278, %279 in 0 : vector<1x16x32xf32>, vector<1x16x32xf32>, vector<1x16x32xf32>, vector<1x16x32xf32> -> vector<4x16x32xf32>
    %281 = vector.shape_cast %262 : vector<4x16x8xf32> to vector<8x8x8xf32>
    %282 = vector.shape_cast %271 : vector<4x16x8xf32> to vector<8x8x8xf32>
    %283 = vector.shape_cast %280 : vector<4x16x32xf32> to vector<8x8x32xf32>
    "tpu.trace_start"() <{level = 10 : i32, message = "ntd,nsd->nts"}> : () -> ()
    %cst_67 = arith.constant dense<0.000000e+00> : vector<8x8x8xf32>
    %284 = tpu.matmul %281, %282, %cst_67 {dimension_numbers = #tpu.dot_dimension_numbers<[2], [2], [1], [1], [0, 0, 0, 1, 1, 1], [0], [0]>} : vector<8x8x8xf32>, vector<8x8x8xf32>, vector<8x8x8xf32> -> vector<8x8x8xf32>
    "tpu.trace_stop"() : () -> ()
    %285 = arith.addf %284, %7 : vector<8x8x8xf32>
    %cst_68 = arith.constant dense<0xFF800000> : vector<8x8xf32>
    %286 = vector.multi_reduction <maximumf>, %285, %cst_68 [2] : vector<8x8x8xf32> to vector<8x8xf32>
    %287 = vector.shape_cast %286 : vector<8x8xf32> to vector<8x8x1xf32>
    %288 = vector.broadcast %287 : vector<8x8x1xf32> to vector<8x8x8xf32>
    %289 = arith.subf %285, %288 : vector<8x8x8xf32>
    %290 = math.exp %289 : vector<8x8x8xf32>
    %cst_69 = arith.constant dense<0.000000e+00> : vector<8x8xf32>
    %291 = vector.multi_reduction <add>, %290, %cst_69 [2] : vector<8x8x8xf32> to vector<8x8xf32>
    %292 = vector.shape_cast %291 : vector<8x8xf32> to vector<8x8x1xf32>
    %293 = tpu.reciprocal %292 : vector<8x8x1xf32> -> vector<8x8x1xf32>
    %294 = vector.broadcast %293 : vector<8x8x1xf32> to vector<8x8x8xf32>
    %295 = arith.mulf %290, %294 : vector<8x8x8xf32>
    "tpu.trace_start"() <{level = 10 : i32, message = "nts,nsd->ntd"}> : () -> ()
    %cst_70 = arith.constant dense<0.000000e+00> : vector<8x8x32xf32>
    %296 = tpu.matmul %295, %283, %cst_70 {dimension_numbers = #tpu.dot_dimension_numbers<[2], [1], [1], [2], [0, 0, 0, 1, 1, 2], [0], [0]>} : vector<8x8x8xf32>, vector<8x8x32xf32>, vector<8x8x32xf32> -> vector<8x8x32xf32>
    "tpu.trace_stop"() : () -> ()
    %297 = vector.shape_cast %296 : vector<8x8x32xf32> to vector<4x16x32xf32>
    %298 = vector.extract_strided_slice %297 {offsets = [0, 0, 0], sizes = [1, 16, 32], strides = [1, 1, 1]} : vector<4x16x32xf32> to vector<1x16x32xf32>
    %299 = vector.shape_cast %298 : vector<1x16x32xf32> to vector<16x32xf32>
    %300 = vector.extract_strided_slice %297 {offsets = [1, 0, 0], sizes = [1, 16, 32], strides = [1, 1, 1]} : vector<4x16x32xf32> to vector<1x16x32xf32>
    %301 = vector.shape_cast %300 : vector<1x16x32xf32> to vector<16x32xf32>
    %302 = arith.addf %299, %301 : vector<16x32xf32>
    %303 = vector.extract_strided_slice %297 {offsets = [2, 0, 0], sizes = [1, 16, 32], strides = [1, 1, 1]} : vector<4x16x32xf32> to vector<1x16x32xf32>
    %304 = vector.shape_cast %303 : vector<1x16x32xf32> to vector<16x32xf32>
    %305 = arith.addf %302, %304 : vector<16x32xf32>
    %306 = vector.extract_strided_slice %297 {offsets = [3, 0, 0], sizes = [1, 16, 32], strides = [1, 1, 1]} : vector<4x16x32xf32> to vector<1x16x32xf32>
    %307 = vector.shape_cast %306 : vector<1x16x32xf32> to vector<16x32xf32>
    %308 = arith.addf %305, %307 : vector<16x32xf32>
    %309 = arith.addf %224, %308 : vector<16x32xf32>
    %c14 = arith.constant 14 : index
    %c0_71 = arith.constant 0 : index
    %310 = vector.load %arg5[%c14, %c0_71] : memref<28x192xf32, #tpu.memory_space<vmem>>, vector<1x32xf32>
    %311 = vector.broadcast %310 : vector<1x32xf32> to vector<16x32xf32>
    %312 = arith.addf %309, %311 : vector<16x32xf32>
    %c21 = arith.constant 21 : index
    %c0_72 = arith.constant 0 : index
    %313 = vector.load %arg5[%c21, %c0_72] : memref<28x192xf32, #tpu.memory_space<vmem>>, vector<1x32xf32>
    %c24 = arith.constant 24 : index
    %c0_73 = arith.constant 0 : index
    %314 = vector.load %arg5[%c24, %c0_73] : memref<28x192xf32, #tpu.memory_space<vmem>>, vector<1x32xf32>
    %cst_74 = arith.constant dense<0.000000e+00> : vector<16xf32>
    %315 = vector.multi_reduction <add>, %312, %cst_74 [1] : vector<16x32xf32> to vector<16xf32>
    %316 = vector.shape_cast %315 : vector<16xf32> to vector<16x1xf32>
    %cst_75 = arith.constant 3.200000e+01 : f32
    %317 = vector.broadcast %cst_75 : f32 to vector<16x1xf32>
    %318 = arith.divf %316, %317 : vector<16x1xf32>
    %319 = vector.broadcast %318 : vector<16x1xf32> to vector<16x32xf32>
    %320 = arith.subf %312, %319 : vector<16x32xf32>
    %321 = arith.mulf %320, %320 : vector<16x32xf32>
    %cst_76 = arith.constant dense<0.000000e+00> : vector<16xf32>
    %322 = vector.multi_reduction <add>, %321, %cst_76 [1] : vector<16x32xf32> to vector<16xf32>
    %323 = vector.shape_cast %322 : vector<16xf32> to vector<16x1xf32>
    %cst_77 = arith.constant 3.200000e+01 : f32
    %324 = vector.broadcast %cst_77 : f32 to vector<16x1xf32>
    %325 = arith.divf %323, %324 : vector<16x1xf32>
    %326 = vector.broadcast %318 : vector<16x1xf32> to vector<16x32xf32>
    %327 = arith.subf %312, %326 : vector<16x32xf32>
    %cst_78 = arith.constant 9.99999974E-6 : f32
    %328 = vector.broadcast %cst_78 : f32 to vector<16x1xf32>
    %329 = arith.addf %325, %328 : vector<16x1xf32>
    %330 = math.rsqrt %329 : vector<16x1xf32>
    %331 = vector.broadcast %330 : vector<16x1xf32> to vector<16x32xf32>
    %332 = arith.mulf %327, %331 : vector<16x32xf32>
    %333 = vector.broadcast %313 : vector<1x32xf32> to vector<16x32xf32>
    %334 = arith.mulf %332, %333 : vector<16x32xf32>
    %335 = vector.broadcast %314 : vector<1x32xf32> to vector<16x32xf32>
    %336 = arith.addf %334, %335 : vector<16x32xf32>
    %c32_79 = arith.constant 32 : index
    %c256_80 = arith.constant 256 : index
    %337 = vector.load %arg3[%c32_79, %c256_80] : memref<64x768xf32, #tpu.memory_space<vmem>>, vector<32x32xf32>
    %cst_81 = arith.constant dense<0.000000e+00> : vector<16x32xf32>
    %338 = tpu.matmul %336, %337, %cst_81 {dimension_numbers = #tpu.dot_dimension_numbers<[1], [0], [0], [1], [0, 0, 1, 1], [], []>} : vector<16x32xf32>, vector<32x32xf32>, vector<16x32xf32> -> vector<16x32xf32>
    %c15 = arith.constant 15 : index
    %c0_82 = arith.constant 0 : index
    %339 = vector.load %arg5[%c15, %c0_82] : memref<28x192xf32, #tpu.memory_space<vmem>>, vector<1x32xf32>
    %340 = vector.broadcast %339 : vector<1x32xf32> to vector<16x32xf32>
    %341 = arith.addf %338, %340 : vector<16x32xf32>
    %c32_83 = arith.constant 32 : index
    %c384_84 = arith.constant 384 : index
    %342 = vector.load %arg3[%c32_83, %c384_84] : memref<64x768xf32, #tpu.memory_space<vmem>>, vector<32x160xf32>
    %cst_85 = arith.constant dense<0.000000e+00> : vector<16x160xf32>
    %343 = tpu.matmul %1, %342, %cst_85 {dimension_numbers = #tpu.dot_dimension_numbers<[1], [0], [0], [1], [0, 0, 1, 1], [], []>} : vector<16x32xf32>, vector<32x160xf32>, vector<16x160xf32> -> vector<16x160xf32>
    %c16 = arith.constant 16 : index
    %c0_86 = arith.constant 0 : index
    %344 = vector.load %arg5[%c16, %c0_86] : memref<28x192xf32, #tpu.memory_space<vmem>>, vector<1x160xf32>
    %345 = vector.broadcast %344 : vector<1x160xf32> to vector<16x160xf32>
    %346 = arith.addf %343, %345 : vector<16x160xf32>
    %347 = vector.extract_strided_slice %341 {offsets = [0, 0], sizes = [16, 8], strides = [1, 1]} : vector<16x32xf32> to vector<16x8xf32>
    %348 = vector.extract_strided_slice %341 {offsets = [0, 8], sizes = [16, 8], strides = [1, 1]} : vector<16x32xf32> to vector<16x8xf32>
    %349 = vector.extract_strided_slice %341 {offsets = [0, 16], sizes = [16, 8], strides = [1, 1]} : vector<16x32xf32> to vector<16x8xf32>
    %350 = vector.extract_strided_slice %341 {offsets = [0, 24], sizes = [16, 8], strides = [1, 1]} : vector<16x32xf32> to vector<16x8xf32>
    %351 = vector.shape_cast %347 : vector<16x8xf32> to vector<1x16x8xf32>
    %352 = vector.shape_cast %348 : vector<16x8xf32> to vector<1x16x8xf32>
    %353 = vector.shape_cast %349 : vector<16x8xf32> to vector<1x16x8xf32>
    %354 = vector.shape_cast %350 : vector<16x8xf32> to vector<1x16x8xf32>
    %355 = tpu.concatenate %351, %352, %353, %354 in 0 : vector<1x16x8xf32>, vector<1x16x8xf32>, vector<1x16x8xf32>, vector<1x16x8xf32> -> vector<4x16x8xf32>
    %356 = vector.extract_strided_slice %346 {offsets = [0, 0], sizes = [16, 8], strides = [1, 1]} : vector<16x160xf32> to vector<16x8xf32>
    %357 = vector.extract_strided_slice %346 {offsets = [0, 8], sizes = [16, 8], strides = [1, 1]} : vector<16x160xf32> to vector<16x8xf32>
    %358 = vector.extract_strided_slice %346 {offsets = [0, 16], sizes = [16, 8], strides = [1, 1]} : vector<16x160xf32> to vector<16x8xf32>
    %359 = vector.extract_strided_slice %346 {offsets = [0, 24], sizes = [16, 8], strides = [1, 1]} : vector<16x160xf32> to vector<16x8xf32>
    %360 = vector.shape_cast %356 : vector<16x8xf32> to vector<1x16x8xf32>
    %361 = vector.shape_cast %357 : vector<16x8xf32> to vector<1x16x8xf32>
    %362 = vector.shape_cast %358 : vector<16x8xf32> to vector<1x16x8xf32>
    %363 = vector.shape_cast %359 : vector<16x8xf32> to vector<1x16x8xf32>
    %364 = tpu.concatenate %360, %361, %362, %363 in 0 : vector<1x16x8xf32>, vector<1x16x8xf32>, vector<1x16x8xf32>, vector<1x16x8xf32> -> vector<4x16x8xf32>
    %365 = vector.extract_strided_slice %346 {offsets = [0, 32], sizes = [16, 32], strides = [1, 1]} : vector<16x160xf32> to vector<16x32xf32>
    %366 = vector.extract_strided_slice %346 {offsets = [0, 64], sizes = [16, 32], strides = [1, 1]} : vector<16x160xf32> to vector<16x32xf32>
    %367 = vector.extract_strided_slice %346 {offsets = [0, 96], sizes = [16, 32], strides = [1, 1]} : vector<16x160xf32> to vector<16x32xf32>
    %368 = vector.extract_strided_slice %346 {offsets = [0, 128], sizes = [16, 32], strides = [1, 1]} : vector<16x160xf32> to vector<16x32xf32>
    %369 = vector.shape_cast %365 : vector<16x32xf32> to vector<1x16x32xf32>
    %370 = vector.shape_cast %366 : vector<16x32xf32> to vector<1x16x32xf32>
    %371 = vector.shape_cast %367 : vector<16x32xf32> to vector<1x16x32xf32>
    %372 = vector.shape_cast %368 : vector<16x32xf32> to vector<1x16x32xf32>
    %373 = tpu.concatenate %369, %370, %371, %372 in 0 : vector<1x16x32xf32>, vector<1x16x32xf32>, vector<1x16x32xf32>, vector<1x16x32xf32> -> vector<4x16x32xf32>
    %374 = vector.shape_cast %355 : vector<4x16x8xf32> to vector<8x8x8xf32>
    %375 = vector.shape_cast %364 : vector<4x16x8xf32> to vector<8x8x8xf32>
    %376 = vector.shape_cast %373 : vector<4x16x32xf32> to vector<8x8x32xf32>
    "tpu.trace_start"() <{level = 10 : i32, message = "ntd,nsd->nts"}> : () -> ()
    %cst_87 = arith.constant dense<0.000000e+00> : vector<8x8x8xf32>
    %377 = tpu.matmul %374, %375, %cst_87 {dimension_numbers = #tpu.dot_dimension_numbers<[2], [2], [1], [1], [0, 0, 0, 1, 1, 1], [0], [0]>} : vector<8x8x8xf32>, vector<8x8x8xf32>, vector<8x8x8xf32> -> vector<8x8x8xf32>
    "tpu.trace_stop"() : () -> ()
    %cst_88 = arith.constant dense<0xFF800000> : vector<8x8xf32>
    %378 = vector.multi_reduction <maximumf>, %377, %cst_88 [2] : vector<8x8x8xf32> to vector<8x8xf32>
    %379 = vector.shape_cast %378 : vector<8x8xf32> to vector<8x8x1xf32>
    %380 = vector.broadcast %379 : vector<8x8x1xf32> to vector<8x8x8xf32>
    %381 = arith.subf %377, %380 : vector<8x8x8xf32>
    %382 = math.exp %381 : vector<8x8x8xf32>
    %cst_89 = arith.constant dense<0.000000e+00> : vector<8x8xf32>
    %383 = vector.multi_reduction <add>, %382, %cst_89 [2] : vector<8x8x8xf32> to vector<8x8xf32>
    %384 = vector.shape_cast %383 : vector<8x8xf32> to vector<8x8x1xf32>
    %385 = tpu.reciprocal %384 : vector<8x8x1xf32> -> vector<8x8x1xf32>
    %386 = vector.broadcast %385 : vector<8x8x1xf32> to vector<8x8x8xf32>
    %387 = arith.mulf %382, %386 : vector<8x8x8xf32>
    "tpu.trace_start"() <{level = 10 : i32, message = "nts,nsd->ntd"}> : () -> ()
    %cst_90 = arith.constant dense<0.000000e+00> : vector<8x8x32xf32>
    %388 = tpu.matmul %387, %376, %cst_90 {dimension_numbers = #tpu.dot_dimension_numbers<[2], [1], [1], [2], [0, 0, 0, 1, 1, 2], [0], [0]>} : vector<8x8x8xf32>, vector<8x8x32xf32>, vector<8x8x32xf32> -> vector<8x8x32xf32>
    "tpu.trace_stop"() : () -> ()
    %389 = vector.shape_cast %388 : vector<8x8x32xf32> to vector<4x16x32xf32>
    %390 = vector.extract_strided_slice %389 {offsets = [0, 0, 0], sizes = [1, 16, 32], strides = [1, 1, 1]} : vector<4x16x32xf32> to vector<1x16x32xf32>
    %391 = vector.shape_cast %390 : vector<1x16x32xf32> to vector<16x32xf32>
    %392 = vector.extract_strided_slice %389 {offsets = [1, 0, 0], sizes = [1, 16, 32], strides = [1, 1, 1]} : vector<4x16x32xf32> to vector<1x16x32xf32>
    %393 = vector.shape_cast %392 : vector<1x16x32xf32> to vector<16x32xf32>
    %394 = arith.addf %391, %393 : vector<16x32xf32>
    %395 = vector.extract_strided_slice %389 {offsets = [2, 0, 0], sizes = [1, 16, 32], strides = [1, 1, 1]} : vector<4x16x32xf32> to vector<1x16x32xf32>
    %396 = vector.shape_cast %395 : vector<1x16x32xf32> to vector<16x32xf32>
    %397 = arith.addf %394, %396 : vector<16x32xf32>
    %398 = vector.extract_strided_slice %389 {offsets = [3, 0, 0], sizes = [1, 16, 32], strides = [1, 1, 1]} : vector<4x16x32xf32> to vector<1x16x32xf32>
    %399 = vector.shape_cast %398 : vector<1x16x32xf32> to vector<16x32xf32>
    %400 = arith.addf %397, %399 : vector<16x32xf32>
    %401 = arith.addf %312, %400 : vector<16x32xf32>
    %c17 = arith.constant 17 : index
    %c0_91 = arith.constant 0 : index
    %402 = vector.load %arg5[%c17, %c0_91] : memref<28x192xf32, #tpu.memory_space<vmem>>, vector<1x32xf32>
    %403 = vector.broadcast %402 : vector<1x32xf32> to vector<16x32xf32>
    %404 = arith.addf %401, %403 : vector<16x32xf32>
    %c22 = arith.constant 22 : index
    %c0_92 = arith.constant 0 : index
    %405 = vector.load %arg5[%c22, %c0_92] : memref<28x192xf32, #tpu.memory_space<vmem>>, vector<1x32xf32>
    %c25 = arith.constant 25 : index
    %c0_93 = arith.constant 0 : index
    %406 = vector.load %arg5[%c25, %c0_93] : memref<28x192xf32, #tpu.memory_space<vmem>>, vector<1x32xf32>
    %cst_94 = arith.constant dense<0.000000e+00> : vector<16xf32>
    %407 = vector.multi_reduction <add>, %404, %cst_94 [1] : vector<16x32xf32> to vector<16xf32>
    %408 = vector.shape_cast %407 : vector<16xf32> to vector<16x1xf32>
    %cst_95 = arith.constant 3.200000e+01 : f32
    %409 = vector.broadcast %cst_95 : f32 to vector<16x1xf32>
    %410 = arith.divf %408, %409 : vector<16x1xf32>
    %411 = vector.broadcast %410 : vector<16x1xf32> to vector<16x32xf32>
    %412 = arith.subf %404, %411 : vector<16x32xf32>
    %413 = arith.mulf %412, %412 : vector<16x32xf32>
    %cst_96 = arith.constant dense<0.000000e+00> : vector<16xf32>
    %414 = vector.multi_reduction <add>, %413, %cst_96 [1] : vector<16x32xf32> to vector<16xf32>
    %415 = vector.shape_cast %414 : vector<16xf32> to vector<16x1xf32>
    %cst_97 = arith.constant 3.200000e+01 : f32
    %416 = vector.broadcast %cst_97 : f32 to vector<16x1xf32>
    %417 = arith.divf %415, %416 : vector<16x1xf32>
    %418 = vector.broadcast %410 : vector<16x1xf32> to vector<16x32xf32>
    %419 = arith.subf %404, %418 : vector<16x32xf32>
    %cst_98 = arith.constant 9.99999974E-6 : f32
    %420 = vector.broadcast %cst_98 : f32 to vector<16x1xf32>
    %421 = arith.addf %417, %420 : vector<16x1xf32>
    %422 = math.rsqrt %421 : vector<16x1xf32>
    %423 = vector.broadcast %422 : vector<16x1xf32> to vector<16x32xf32>
    %424 = arith.mulf %419, %423 : vector<16x32xf32>
    %425 = vector.broadcast %405 : vector<1x32xf32> to vector<16x32xf32>
    %426 = arith.mulf %424, %425 : vector<16x32xf32>
    %427 = vector.broadcast %406 : vector<1x32xf32> to vector<16x32xf32>
    %428 = arith.addf %426, %427 : vector<16x32xf32>
    %c32_99 = arith.constant 32 : index
    %c640_100 = arith.constant 640 : index
    %429 = vector.load %arg3[%c32_99, %c640_100] : memref<64x768xf32, #tpu.memory_space<vmem>>, vector<32x64xf32>
    %cst_101 = arith.constant dense<0.000000e+00> : vector<16x64xf32>
    %430 = tpu.matmul %428, %429, %cst_101 {dimension_numbers = #tpu.dot_dimension_numbers<[1], [0], [0], [1], [0, 0, 1, 1], [], []>} : vector<16x32xf32>, vector<32x64xf32>, vector<16x64xf32> -> vector<16x64xf32>
    %c18 = arith.constant 18 : index
    %c0_102 = arith.constant 0 : index
    %431 = vector.load %arg5[%c18, %c0_102] : memref<28x192xf32, #tpu.memory_space<vmem>>, vector<1x64xf32>
    %432 = vector.broadcast %431 : vector<1x64xf32> to vector<16x64xf32>
    %433 = arith.addf %430, %432 : vector<16x64xf32>
    %cst_103 = arith.constant 0.000000e+00 : f32
    %434 = vector.broadcast %cst_103 : f32 to vector<16x64xf32>
    %435 = arith.maximumf %433, %434 : vector<16x64xf32>
    %c64 = arith.constant 64 : index
    %c0_104 = arith.constant 0 : index
    %436 = vector.load %arg4[%c64, %c0_104] : memref<128x32xf32, #tpu.memory_space<vmem>>, vector<64x32xf32>
    %cst_105 = arith.constant dense<0.000000e+00> : vector<16x32xf32>
    %437 = tpu.matmul %435, %436, %cst_105 {dimension_numbers = #tpu.dot_dimension_numbers<[1], [0], [0], [1], [0, 0, 1, 1], [], []>} : vector<16x64xf32>, vector<64x32xf32>, vector<16x32xf32> -> vector<16x32xf32>
    %438 = arith.addf %404, %437 : vector<16x32xf32>
    %c19 = arith.constant 19 : index
    %c0_106 = arith.constant 0 : index
    %439 = vector.load %arg5[%c19, %c0_106] : memref<28x192xf32, #tpu.memory_space<vmem>>, vector<1x32xf32>
    %440 = vector.broadcast %439 : vector<1x32xf32> to vector<16x32xf32>
    %441 = arith.addf %438, %440 : vector<16x32xf32>
    %c26 = arith.constant 26 : index
    %c0_107 = arith.constant 0 : index
    %442 = vector.load %arg5[%c26, %c0_107] : memref<28x192xf32, #tpu.memory_space<vmem>>, vector<1x32xf32>
    %c27 = arith.constant 27 : index
    %c0_108 = arith.constant 0 : index
    %443 = vector.load %arg5[%c27, %c0_108] : memref<28x192xf32, #tpu.memory_space<vmem>>, vector<1x32xf32>
    %cst_109 = arith.constant dense<0.000000e+00> : vector<16xf32>
    %444 = vector.multi_reduction <add>, %441, %cst_109 [1] : vector<16x32xf32> to vector<16xf32>
    %445 = vector.shape_cast %444 : vector<16xf32> to vector<16x1xf32>
    %cst_110 = arith.constant 3.200000e+01 : f32
    %446 = vector.broadcast %cst_110 : f32 to vector<16x1xf32>
    %447 = arith.divf %445, %446 : vector<16x1xf32>
    %448 = vector.broadcast %447 : vector<16x1xf32> to vector<16x32xf32>
    %449 = arith.subf %441, %448 : vector<16x32xf32>
    %450 = arith.mulf %449, %449 : vector<16x32xf32>
    %cst_111 = arith.constant dense<0.000000e+00> : vector<16xf32>
    %451 = vector.multi_reduction <add>, %450, %cst_111 [1] : vector<16x32xf32> to vector<16xf32>
    %452 = vector.shape_cast %451 : vector<16xf32> to vector<16x1xf32>
    %cst_112 = arith.constant 3.200000e+01 : f32
    %453 = vector.broadcast %cst_112 : f32 to vector<16x1xf32>
    %454 = arith.divf %452, %453 : vector<16x1xf32>
    %455 = vector.broadcast %447 : vector<16x1xf32> to vector<16x32xf32>
    %456 = arith.subf %441, %455 : vector<16x32xf32>
    %cst_113 = arith.constant 9.99999974E-6 : f32
    %457 = vector.broadcast %cst_113 : f32 to vector<16x1xf32>
    %458 = arith.addf %454, %457 : vector<16x1xf32>
    %459 = math.rsqrt %458 : vector<16x1xf32>
    %460 = vector.broadcast %459 : vector<16x1xf32> to vector<16x32xf32>
    %461 = arith.mulf %456, %460 : vector<16x32xf32>
    %462 = vector.broadcast %442 : vector<1x32xf32> to vector<16x32xf32>
    %463 = arith.mulf %461, %462 : vector<16x32xf32>
    %464 = vector.broadcast %443 : vector<1x32xf32> to vector<16x32xf32>
    %465 = arith.addf %463, %464 : vector<16x32xf32>
    %c0_114 = arith.constant 0 : index
    %c0_115 = arith.constant 0 : index
    %466 = vector.load %arg6[%c0_114, %c0_115] : memref<16x32xf32, #tpu.memory_space<vmem>>, vector<16x32xf32>
    tpu.vector_store %arg6[%c0_114, %c0_115], %465 {strides = array<i32>} : memref<16x32xf32, #tpu.memory_space<vmem>>, vector<16x32xf32>,
    return
  }
}

</mosaic_0001>

<llo_original>
// kernel: tpu_custom_call.1
$region0: #{tpu_custom_call.1}
  #allocation0 [shape = 'u32[]', space=smem, size = 0x4, offset = 0x4, fixed_abs, tag = 'smem constant byte address 0x4 - core index']
  #allocation1 [shape = 'u32[72,128]{1,0:T(1,128)}', space=vmem, size = 0x9000, scoped, tag = 'internal scratch']
  %s0 = inlined_call_operand.vmem [shape: f32[16,32], index: 0, kind: input, shape index: {}]
  %s1 = inlined_call_operand.vmem [shape: f32[16,32], index: 1, kind: input, shape index: {}]
  %s2 = inlined_call_operand.vmem [shape: f32[2,8,8], index: 2, kind: input, shape index: {}]
  %s3 = inlined_call_operand.hbm [shape: f32[64,768], index: 3, kind: input, shape index: {}]
  %s4 = inlined_call_operand.vmem [shape: f32[128,32], index: 4, kind: input, shape index: {}]
  %s5 = inlined_call_operand.vmem [shape: f32[28,192], index: 5, kind: input, shape index: {}]
  %s6 = inlined_call_operand.hbm [shape: f32[16,32], index: 6, kind: output, shape index: {}]
  %s7 = sld [smem:[#allocation0]]
  $region38: #{tpu_custom_call.1} parent=0
    _
  %s9 = ssub.s32 1, %s7
  %s10 = scalar_select 0, %s9, %s7
  $region1: #{tpu_custom_call.1} parent=0
    #allocation2 [shape = 'u8[196608]{0}', space=vmem, size = 0x30000, scoped, tag = 'input window, operand 3, single buffered']
    #allocation3 [shape = 's32[1]{0}', space=sflag, size = 0x4, scoped, tag = 'scoped memory for tpu_custom_call.1']
    #allocation4 [shape = 's32[1]{0}', space=sflag, size = 0x4, scoped, tag = 'scoped memory for tpu_custom_call.1']
    #allocation5 [shape = 'u8[8192]{0}', space=vmem, size = 0x2000, scoped, tag = 'output window, operand 0, single buffered']
    %11 = vsyncpa [#allocation3], 0
    %12 = vsyncpa [#allocation4], 0
    // Predicated region
    $region2: #{tpu_custom_call.1} parent=1 // pred_check
      _
    $region3: #{tpu_custom_call.1} parent=1 // pred_check_branch
      %14 = sbr.rel (0) target = $region5
    $region4: #{tpu_custom_call.1} parent=1 // pred_region
      _
    $region5: #{tpu_custom_call.1} parent=1 // pred_fallthru
      _
    // Predicated region
    $region6: #{tpu_custom_call.1} parent=1 // pred_check
      _
    $region7: #{tpu_custom_call.1} parent=1 // pred_check_branch
      %16 = sbr.rel (0) target = $region9
    $region8: #{tpu_custom_call.1} parent=1 // pred_region
      _
    $region9: #{tpu_custom_call.1} parent=1 // pred_fallthru
      _
    // Predicated region
    $region10: #{tpu_custom_call.1} parent=1 // pred_check
      _
    $region11: #{tpu_custom_call.1} parent=1 // pred_check_branch
      %18 = sbr.rel (0) target = $region13
    $region12: #{tpu_custom_call.1} parent=1 // pred_region
      _
    $region13: #{tpu_custom_call.1} parent=1 // pred_fallthru
      _
    // Predicated region
    $region14: #{tpu_custom_call.1} parent=1 // pred_check
      _
    $region15: #{tpu_custom_call.1} parent=1 // pred_check_branch
      %20 = sbr.rel (0) target = $region17
    $region16: #{tpu_custom_call.1} parent=1 // pred_region
      %22 = vsyncadd [#allocation3], 0
      %s23 = sshll.u32 %s3, 4
      %s24 = int_to_ptr.hbm [resolvable:$true] %s23
      %s25 = sshll.u32 [#allocation2], 4
      %s26 = int_to_ptr.vmem [resolvable:$true] %s25
      %31 = dma.hbm_to_vmem [thread:$0]  %s24, 6144, %s26, [#allocation3], 768, 768, 48
    $region17: #{tpu_custom_call.1} parent=1 // pred_fallthru
      _
    // Predicated region
    $region18: #{tpu_custom_call.1} parent=1 // pred_check
      _
    $region19: #{tpu_custom_call.1} parent=1 // pred_check_branch
      %33 = sbr.rel (0) target = $region21
    $region20: #{tpu_custom_call.1} parent=1 // pred_region
      _
    $region21: #{tpu_custom_call.1} parent=1 // pred_fallthru
      _
    // Predicated region
    $region22: #{tpu_custom_call.1} parent=1 // pred_check
      _
    $region23: #{tpu_custom_call.1} parent=1 // pred_check_branch
      %35 = sbr.rel (0) target = $region25
    $region24: #{tpu_custom_call.1} parent=1 // pred_region
      _
    $region25: #{tpu_custom_call.1} parent=1 // pred_fallthru
      _
    // Predicated region
    $region26: #{tpu_custom_call.1} parent=1 // pred_check
      _
    $region27: #{tpu_custom_call.1} parent=1 // pred_check_branch
      %37 = sbr.rel (0) target = $region29
    $region28: #{tpu_custom_call.1} parent=1 // pred_region
      %39 = dma.done [#allocation3], 6144
    $region29: #{tpu_custom_call.1} parent=1 // pred_fallthru
      _
    %v40 = vld [vmem:[%s0] sm:$0xff]
    %v41 = vld [vmem:[%s0 + $0x8] sm:$0xff]
    %v42 = vld [vmem:[%s1] sm:$0xff]
    %v43 = vld [vmem:[%s1 + $0x8] sm:$0xff]
    %v44 = vld [vmem:[%s2] sm:$0xff]
    %v45 = vld [vmem:[%s2 + $0x8] sm:$0xff]
    %v46 = vsub.f32 %v44, 1.0
    %v47 = vsub.f32 %v45, 1.0
    %v48 = vmul.f32 %v46, 1e+09
    %v49 = vmul.f32 %v47, 1e+09
    %v50 = vld [vmem:[%s5 + $0x7] ss:$0 sm:$0xff]
    %v51 = vld [vmem:[%s5 + $0x12] ss:$0 sm:$0xff]
    %vm52 = vcmask 261120
    %v53 = vsel %vm52, %v40, 0.0
    %54 = vadd.xlane.f32.xlu0 %v53
    %v55 = vpop.xlane.xlu0 %54
    %v56 = vsel %vm52, %v41, 0.0
    %57 = vadd.xlane.f32.xlu0 %v56
    %v58 = vpop.xlane.xlu0 %57
    %v59 = vrcp.pop 32.0
    %v60 = vmul.f32 32.0, %v59
    %v61 = vsub.f32 1.0, %v60
    %v62 = vmul.f32 %v59, %v61
    %v63 = vadd.f32 %v59, %v62
    %vm64 = vweird.f32 %v59
    %v65 = vsel %vm64, %v59, %v63
    %v66 = vmul.f32 %v55, %v65
    %v67 = vmul.f32 %v58, %v65
    %v68 = vsub.f32 %v40, %v66
    %v69 = vsub.f32 %v41, %v67
    %v70 = vmul.f32 %v68, %v68
    %v71 = vmul.f32 %v69, %v69
    %v72 = vsel %vm52, %v70, 0.0
    %73 = vadd.xlane.f32.xlu0 %v72
    %v74 = vpop.xlane.xlu0 %73
    %v75 = vsel %vm52, %v71, 0.0
    %76 = vadd.xlane.f32.xlu0 %v75
    %v77 = vpop.xlane.xlu0 %76
    %v78 = vmul.f32 %v74, %v65
    %v79 = vmul.f32 %v77, %v65
    %v80 = vadd.f32 %v78, 1e-05
    %v81 = vadd.f32 %v79, 1e-05
    %v82 = vrsqrt.pop %v80
    %v83 = vmul.f32 %v82, %v80
    %v84 = vmul.f32 %v83, %v82
    %v85 = vmul.f32 0.5, %v84
    %v86 = vsub.f32 1.5, %v85
    %v87 = vmul.f32 %v82, %v86
    %vm88 = vweird.f32 %v80
    %vm89 = vweird.f32 %v82
    %vm90 = vmor %vm88, %vm89
    %v91 = vsel %vm90, %v82, %v87
    %v92 = vrsqrt.pop %v81
    %v93 = vmul.f32 %v92, %v81
    %v94 = vmul.f32 %v93, %v92
    %v95 = vmul.f32 0.5, %v94
    %v96 = vsub.f32 1.5, %v95
    %v97 = vmul.f32 %v92, %v96
    %vm98 = vweird.f32 %v81
    %vm99 = vweird.f32 %v92
    %vm100 = vmor %vm98, %vm99
    %v101 = vsel %vm100, %v92, %v97
    %v102 = vmul.f32 %v68, %v91
    %v103 = vmul.f32 %v69, %v101
    %v104 = vmul.f32 %v102, %v50
    %v105 = vmul.f32 %v103, %v50
    %v106 = vadd.f32 %v104, %v51
    %v107 = vadd.f32 %v105, %v51
    %v108 = vld [vmem:[#allocation2] sm:$0xff]
    %v109 = vld [vmem:[#allocation2 + $0x8] sm:$0xff]
    %v110 = vld [vmem:[#allocation2 + $0x30] sm:$0xff]
    %v111 = vld [vmem:[#allocation2 + $0x38] sm:$0xff]
    %v112 = vld [vmem:[#allocation2 + $0x60] sm:$0xff]
    %v113 = vld [vmem:[#allocation2 + $0x68] sm:$0xff]
    %v114 = vld [vmem:[#allocation2 + $0x90] sm:$0xff]
    %v115 = vld [vmem:[#allocation2 + $0x98] sm:$0xff]
    %v116 = vld [vmem:[%s5] ss:$8 sm:$0x3]
    %v118 = vperm.slane %v116, 0
    %v119 = vperm.slane %v116, 1
    %v123 = vsel %vm52, %v106, 0
    %v126 = vsel %vm52, %v107, 0
    %128 = vmatpush.msra.mxu0 0.0
    %129 = vmatpush.msra.mxu0 0.0
    %130 = vmatpush.msra.mxu0 0.0
    %131 = vmatpush.msra.mxu0 0.0
    %132 = vmatpush.msra.mxu0 0.0
    %133 = vmatpush.msra.mxu0 0.0
    %134 = vmatpush.msra.mxu0 0.0
    %135 = vmatpush.msra.mxu0 0.0
    %136 = vmatpush.msra.mxu0 0.0
    %137 = vmatpush.msra.mxu0 0.0
    %138 = vmatpush.msra.mxu0 0.0
    %139 = vmatpush.msra.mxu0 0.0
    %140 = vmatpush.msra.mxu0 %v114
    %141 = vmatpush.msra.mxu0 %v112
    %142 = vmatpush.msra.mxu0 %v110
    %143 = vmatpush.msra.mxu0 %v108
    %144 = vmatmul.f32.gmra.mxu0 %v123
    %v145 = vpop.f32.mrf.mxu0
    %v146 = vadd.f32 %v118, %v145
    %147 = vmatmul.f32.gmra.mxu0 %v126
    %v148 = vpop.f32.mrf.mxu0
    %v149 = vadd.f32 %v118, %v148
    %150 = vdwg.mxu0
    %151 = vmatpush.msra.mxu0 0.0
    %152 = vmatpush.msra.mxu0 0.0
    %153 = vmatpush.msra.mxu0 0.0
    %154 = vmatpush.msra.mxu0 0.0
    %155 = vmatpush.msra.mxu0 0.0
    %156 = vmatpush.msra.mxu0 0.0
    %157 = vmatpush.msra.mxu0 0.0
    %158 = vmatpush.msra.mxu0 0.0
    %159 = vmatpush.msra.mxu0 0.0
    %160 = vmatpush.msra.mxu0 0.0
    %161 = vmatpush.msra.mxu0 0.0
    %162 = vmatpush.msra.mxu0 0.0
    %163 = vmatpush.msra.mxu0 %v115
    %164 = vmatpush.msra.mxu0 %v113
    %165 = vmatpush.msra.mxu0 %v111
    %166 = vmatpush.msra.mxu0 %v109
    %167 = vmatmul.f32.gmra.mxu0 %v123
    %v168 = vpop.f32.mrf.mxu0
    %v169 = vadd.f32 %v119, %v168
    %170 = vmatmul.f32.gmra.mxu0 %v126
    %v171 = vpop.f32.mrf.mxu0
    %v172 = vadd.f32 %v119, %v171
    %173 = vdwg.mxu0
    %176 = vrot.lane.b32.xlu0 %v146, 120
    %v177 = vpop.permute.xlu0 %176
    %178 = vrot.lane.b32.xlu0 %v149, 120
    %v179 = vpop.permute.xlu0 %178
    %180 = vrot.lane.b32.xlu0 %v146, 112
    %v181 = vpop.permute.xlu0 %180
    %182 = vrot.lane.b32.xlu0 %v149, 112
    %v183 = vpop.permute.xlu0 %182
    %184 = vrot.lane.b32.xlu0 %v146, 104
    %v185 = vpop.permute.xlu0 %184
    %186 = vrot.lane.b32.xlu0 %v149, 104
    %v187 = vpop.permute.xlu0 %186
    %188 = vrot.lane.b32.xlu0 %v146, 96
    %v189 = vpop.permute.xlu0 %188
    %190 = vrot.lane.b32.xlu0 %v149, 96
    %v191 = vpop.permute.xlu0 %190
    %194 = vrot.lane.b32.xlu0 %v169, 64
    %v195 = vpop.permute.xlu0 %194
    %196 = vrot.lane.b32.xlu0 %v172, 64
    %v197 = vpop.permute.xlu0 %196
    %198 = vrot.lane.b32.xlu0 %v169, 32
    %v199 = vpop.permute.xlu0 %198
    %200 = vrot.lane.b32.xlu0 %v172, 32
    %v201 = vpop.permute.xlu0 %200
    %vm202 = vcmask 64512
    %v203 = vsel %vm202, %v146, 0
    %v205 = vsel %vm202, %v189, 0
    %207 = vmatpush.xpose.msra.mxu0 0.0
    %208 = vmatpush.xpose.msra.mxu0 0.0
    %209 = vmatpush.xpose.msra.mxu0 0.0
    %210 = vmatpush.xpose.msra.mxu0 0.0
    %211 = vmatpush.xpose.msra.mxu0 0.0
    %212 = vmatpush.xpose.msra.mxu0 0.0
    %213 = vmatpush.xpose.msra.mxu0 0.0
    %214 = vmatpush.xpose.msra.mxu0 0.0
    %215 = vmatpush.xpose.msra.mxu0 0.0
    %216 = vmatpush.xpose.msra.mxu0 0.0
    %217 = vmatpush.xpose.msra.mxu0 0.0
    %218 = vmatpush.xpose.msra.mxu0 0.0
    %219 = vmatpush.xpose.msra.mxu0 0.0
    %220 = vmatpush.xpose.msra.mxu0 0.0
    %221 = vmatpush.xpose.msra.mxu0 0.0
    %222 = vmatpush.xpose.msra.mxu0 %v205
    %223 = vmatmul.f32.gmra.mxu0 %v203
    %v224 = vpop.f32.mrf.mxu0
    %v225 = vadd.f32 %v48, %v224
    %226 = vdwg.mxu0
    %v227 = vsel %vm202, %v149, 0
    %v229 = vsel %vm202, %v191, 0
    %231 = vmatpush.xpose.msra.mxu0 0.0
    %232 = vmatpush.xpose.msra.mxu0 0.0
    %233 = vmatpush.xpose.msra.mxu0 0.0
    %234 = vmatpush.xpose.msra.mxu0 0.0
    %235 = vmatpush.xpose.msra.mxu0 0.0
    %236 = vmatpush.xpose.msra.mxu0 0.0
    %237 = vmatpush.xpose.msra.mxu0 0.0
    %238 = vmatpush.xpose.msra.mxu0 0.0
    %239 = vmatpush.xpose.msra.mxu0 0.0
    %240 = vmatpush.xpose.msra.mxu0 0.0
    %241 = vmatpush.xpose.msra.mxu0 0.0
    %242 = vmatpush.xpose.msra.mxu0 0.0
    %243 = vmatpush.xpose.msra.mxu0 0.0
    %244 = vmatpush.xpose.msra.mxu0 0.0
    %245 = vmatpush.xpose.msra.mxu0 0.0
    %246 = vmatpush.xpose.msra.mxu0 %v229
    %247 = vmatmul.f32.gmra.mxu0 %v227
    %v248 = vpop.f32.mrf.mxu0
    %v249 = vadd.f32 %v49, %v248
    %250 = vdwg.mxu0
    %251 = vrot.lane.b32.xlu0 %v177, 96
    %v252 = vpop.permute.xlu0 %251
    %v253 = vsel %vm202, %v177, 0
    %v255 = vsel %vm202, %v252, 0
    %257 = vmatpush.xpose.msra.mxu0 0.0
    %258 = vmatpush.xpose.msra.mxu0 0.0
    %259 = vmatpush.xpose.msra.mxu0 0.0
    %260 = vmatpush.xpose.msra.mxu0 0.0
    %261 = vmatpush.xpose.msra.mxu0 0.0
    %262 = vmatpush.xpose.msra.mxu0 0.0
    %263 = vmatpush.xpose.msra.mxu0 0.0
    %264 = vmatpush.xpose.msra.mxu0 0.0
    %265 = vmatpush.xpose.msra.mxu0 0.0
    %266 = vmatpush.xpose.msra.mxu0 0.0
    %267 = vmatpush.xpose.msra.mxu0 0.0
    %268 = vmatpush.xpose.msra.mxu0 0.0
    %269 = vmatpush.xpose.msra.mxu0 0.0
    %270 = vmatpush.xpose.msra.mxu0 0.0
    %271 = vmatpush.xpose.msra.mxu0 0.0
    %272 = vmatpush.xpose.msra.mxu0 %v255
    %273 = vmatmul.f32.gmra.mxu0 %v253
    %v274 = vpop.f32.mrf.mxu0
    %v275 = vadd.f32 %v48, %v274
    %276 = vdwg.mxu0
    %277 = vrot.lane.b32.xlu0 %v179, 96
    %v278 = vpop.permute.xlu0 %277
    %v279 = vsel %vm202, %v179, 0
    %v281 = vsel %vm202, %v278, 0
    %283 = vmatpush.xpose.msra.mxu0 0.0
    %284 = vmatpush.xpose.msra.mxu0 0.0
    %285 = vmatpush.xpose.msra.mxu0 0.0
    %286 = vmatpush.xpose.msra.mxu0 0.0
    %287 = vmatpush.xpose.msra.mxu0 0.0
    %288 = vmatpush.xpose.msra.mxu0 0.0
    %289 = vmatpush.xpose.msra.mxu0 0.0
    %290 = vmatpush.xpose.msra.mxu0 0.0
    %291 = vmatpush.xpose.msra.mxu0 0.0
    %292 = vmatpush.xpose.msra.mxu0 0.0
    %293 = vmatpush.xpose.msra.mxu0 0.0
    %294 = vmatpush.xpose.msra.mxu0 0.0
    %295 = vmatpush.xpose.msra.mxu0 0.0
    %296 = vmatpush.xpose.msra.mxu0 0.0
    %297 = vmatpush.xpose.msra.mxu0 0.0
    %298 = vmatpush.xpose.msra.mxu0 %v281
    %299 = vmatmul.f32.gmra.mxu0 %v279
    %v300 = vpop.f32.mrf.mxu0
    %v301 = vadd.f32 %v49, %v300
    %302 = vdwg.mxu0
    %303 = vrot.lane.b32.xlu0 %v181, 96
    %v304 = vpop.permute.xlu0 %303
    %v305 = vsel %vm202, %v181, 0
    %v307 = vsel %vm202, %v304, 0
    %309 = vmatpush.xpose.msra.mxu0 0.0
    %310 = vmatpush.xpose.msra.mxu0 0.0
    %311 = vmatpush.xpose.msra.mxu0 0.0
    %312 = vmatpush.xpose.msra.mxu0 0.0
    %313 = vmatpush.xpose.msra.mxu0 0.0
    %314 = vmatpush.xpose.msra.mxu0 0.0
    %315 = vmatpush.xpose.msra.mxu0 0.0
    %316 = vmatpush.xpose.msra.mxu0 0.0
    %317 = vmatpush.xpose.msra.mxu0 0.0
    %318 = vmatpush.xpose.msra.mxu0 0.0
    %319 = vmatpush.xpose.msra.mxu0 0.0
    %320 = vmatpush.xpose.msra.mxu0 0.0
    %321 = vmatpush.xpose.msra.mxu0 0.0
    %322 = vmatpush.xpose.msra.mxu0 0.0
    %323 = vmatpush.xpose.msra.mxu0 0.0
    %324 = vmatpush.xpose.msra.mxu0 %v307
    %325 = vmatmul.f32.gmra.mxu0 %v305
    %v326 = vpop.f32.mrf.mxu0
    %v327 = vadd.f32 %v48, %v326
    %328 = vdwg.mxu0
    %329 = vrot.lane.b32.xlu0 %v183, 96
    %v330 = vpop.permute.xlu0 %329
    %v331 = vsel %vm202, %v183, 0
    %v333 = vsel %vm202, %v330, 0
    %335 = vmatpush.xpose.msra.mxu0 0.0
    %336 = vmatpush.xpose.msra.mxu0 0.0
    %337 = vmatpush.xpose.msra.mxu0 0.0
    %338 = vmatpush.xpose.msra.mxu0 0.0
    %339 = vmatpush.xpose.msra.mxu0 0.0
    %340 = vmatpush.xpose.msra.mxu0 0.0
    %341 = vmatpush.xpose.msra.mxu0 0.0
    %342 = vmatpush.xpose.msra.mxu0 0.0
    %343 = vmatpush.xpose.msra.mxu0 0.0
    %344 = vmatpush.xpose.msra.mxu0 0.0
    %345 = vmatpush.xpose.msra.mxu0 0.0
    %346 = vmatpush.xpose.msra.mxu0 0.0
    %347 = vmatpush.xpose.msra.mxu0 0.0
    %348 = vmatpush.xpose.msra.mxu0 0.0
    %349 = vmatpush.xpose.msra.mxu0 0.0
    %350 = vmatpush.xpose.msra.mxu0 %v333
    %351 = vmatmul.f32.gmra.mxu0 %v331
    %v352 = vpop.f32.mrf.mxu0
    %v353 = vadd.f32 %v49, %v352
    %354 = vdwg.mxu0
    %355 = vrot.lane.b32.xlu0 %v185, 96
    %v356 = vpop.permute.xlu0 %355
    %v357 = vsel %vm202, %v185, 0
    %v359 = vsel %vm202, %v356, 0
    %361 = vmatpush.xpose.msra.mxu0 0.0
    %362 = vmatpush.xpose.msra.mxu0 0.0
    %363 = vmatpush.xpose.msra.mxu0 0.0
    %364 = vmatpush.xpose.msra.mxu0 0.0
    %365 = vmatpush.xpose.msra.mxu0 0.0
    %366 = vmatpush.xpose.msra.mxu0 0.0
    %367 = vmatpush.xpose.msra.mxu0 0.0
    %368 = vmatpush.xpose.msra.mxu0 0.0
    %369 = vmatpush.xpose.msra.mxu0 0.0
    %370 = vmatpush.xpose.msra.mxu0 0.0
    %371 = vmatpush.xpose.msra.mxu0 0.0
    %372 = vmatpush.xpose.msra.mxu0 0.0
    %373 = vmatpush.xpose.msra.mxu0 0.0
    %374 = vmatpush.xpose.msra.mxu0 0.0
    %375 = vmatpush.xpose.msra.mxu0 0.0
    %376 = vmatpush.xpose.msra.mxu0 %v359
    %377 = vmatmul.f32.gmra.mxu0 %v357
    %v378 = vpop.f32.mrf.mxu0
    %v379 = vadd.f32 %v48, %v378
    %380 = vdwg.mxu0
    %381 = vrot.lane.b32.xlu0 %v187, 96
    %v382 = vpop.permute.xlu0 %381
    %v383 = vsel %vm202, %v187, 0
    %v385 = vsel %vm202, %v382, 0
    %387 = vmatpush.xpose.msra.mxu0 0.0
    %388 = vmatpush.xpose.msra.mxu0 0.0
    %389 = vmatpush.xpose.msra.mxu0 0.0
    %390 = vmatpush.xpose.msra.mxu0 0.0
    %391 = vmatpush.xpose.msra.mxu0 0.0
    %392 = vmatpush.xpose.msra.mxu0 0.0
    %393 = vmatpush.xpose.msra.mxu0 0.0
    %394 = vmatpush.xpose.msra.mxu0 0.0
    %395 = vmatpush.xpose.msra.mxu0 0.0
    %396 = vmatpush.xpose.msra.mxu0 0.0
    %397 = vmatpush.xpose.msra.mxu0 0.0
    %398 = vmatpush.xpose.msra.mxu0 0.0
    %399 = vmatpush.xpose.msra.mxu0 0.0
    %400 = vmatpush.xpose.msra.mxu0 0.0
    %401 = vmatpush.xpose.msra.mxu0 0.0
    %402 = vmatpush.xpose.msra.mxu0 %v385
    %403 = vmatmul.f32.gmra.mxu0 %v383
    %v404 = vpop.f32.mrf.mxu0
    %v405 = vadd.f32 %v49, %v404
    %406 = vdwg.mxu0
    %v407 = vsel %vm202, %v225, -inf
    %408 = vmax.xlane.f32.xlu0 %v407
    %v409 = vpop.xlane.xlu0 %408
    %v410 = vsel %vm202, %v249, -inf
    %411 = vmax.xlane.f32.xlu0 %v410
    %v412 = vpop.xlane.xlu0 %411
    %v413 = vsel %vm202, %v275, -inf
    %414 = vmax.xlane.f32.xlu0 %v413
    %v415 = vpop.xlane.xlu0 %414
    %v416 = vsel %vm202, %v301, -inf
    %417 = vmax.xlane.f32.xlu0 %v416
    %v418 = vpop.xlane.xlu0 %417
    %v419 = vsel %vm202, %v327, -inf
    %420 = vmax.xlane.f32.xlu0 %v419
    %v421 = vpop.xlane.xlu0 %420
    %v422 = vsel %vm202, %v353, -inf
    %423 = vmax.xlane.f32.xlu0 %v422
    %v424 = vpop.xlane.xlu0 %423
    %v425 = vsel %vm202, %v379, -inf
    %426 = vmax.xlane.f32.xlu0 %v425
    %v427 = vpop.xlane.xlu0 %426
    %v428 = vsel %vm202, %v405, -inf
    %429 = vmax.xlane.f32.xlu0 %v428
    %v430 = vpop.xlane.xlu0 %429
    %v431 = vsub.f32 %v225, %v409
    %v432 = vsub.f32 %v249, %v412
    %v433 = vsub.f32 %v275, %v415
    %v434 = vsub.f32 %v301, %v418
    %v435 = vsub.f32 %v327, %v421
    %v436 = vsub.f32 %v353, %v424
    %v437 = vsub.f32 %v379, %v427
    %v438 = vsub.f32 %v405, %v430
    %v439 = vmul.f32 %v431, 1.442695
    %v440 = vpow.pop %v439
    %v441 = vmul.f32 %v432, 1.442695
    %v442 = vpow.pop %v441
    %v443 = vmul.f32 %v433, 1.442695
    %v444 = vpow.pop %v443
    %v445 = vmul.f32 %v434, 1.442695
    %v446 = vpow.pop %v445
    %v447 = vmul.f32 %v435, 1.442695
    %v448 = vpow.pop %v447
    %v449 = vmul.f32 %v436, 1.442695
    %v450 = vpow.pop %v449
    %v451 = vmul.f32 %v437, 1.442695
    %v452 = vpow.pop %v451
    %v453 = vmul.f32 %v438, 1.442695
    %v454 = vpow.pop %v453
    %v455 = vsel %vm202, %v440, 0.0
    %456 = vadd.xlane.f32.xlu0 %v455
    %v457 = vpop.xlane.xlu0 %456
    %v458 = vsel %vm202, %v442, 0.0
    %459 = vadd.xlane.f32.xlu0 %v458
    %v460 = vpop.xlane.xlu0 %459
    %v461 = vsel %vm202, %v444, 0.0
    %462 = vadd.xlane.f32.xlu0 %v461
    %v463 = vpop.xlane.xlu0 %462
    %v464 = vsel %vm202, %v446, 0.0
    %465 = vadd.xlane.f32.xlu0 %v464
    %v466 = vpop.xlane.xlu0 %465
    %v467 = vsel %vm202, %v448, 0.0
    %468 = vadd.xlane.f32.xlu0 %v467
    %v469 = vpop.xlane.xlu0 %468
    %v470 = vsel %vm202, %v450, 0.0
    %471 = vadd.xlane.f32.xlu0 %v470
    %v472 = vpop.xlane.xlu0 %471
    %v473 = vsel %vm202, %v452, 0.0
    %474 = vadd.xlane.f32.xlu0 %v473
    %v475 = vpop.xlane.xlu0 %474
    %v476 = vsel %vm202, %v454, 0.0
    %477 = vadd.xlane.f32.xlu0 %v476
    %v478 = vpop.xlane.xlu0 %477
    %v479 = vrcp.pop %v457
    %v480 = vmul.f32 %v457, %v479
    %v481 = vsub.f32 1.0, %v480
    %v482 = vmul.f32 %v479, %v481
    %v483 = vadd.f32 %v479, %v482
    %vm484 = vweird.f32 %v457
    %vm485 = vweird.f32 %v479
    %vm486 = vmor %vm484, %vm485
    %v487 = vsel %vm486, %v479, %v483
    %v488 = vand.u32 2147483647, %v457
    %vm489 = vcmp.eq.f32.partialorder %v488, 8.507059e+37
    %v490 = vand.u32 %v457, 2147483648
    %v491 = vor.u32 1.1754944e-38, %v490
    %v492 = vsel %vm489, %v491, %v487
    %v493 = vrcp.pop %v460
    %v494 = vmul.f32 %v460, %v493
    %v495 = vsub.f32 1.0, %v494
    %v496 = vmul.f32 %v493, %v495
    %v497 = vadd.f32 %v493, %v496
    %vm498 = vweird.f32 %v460
    %vm499 = vweird.f32 %v493
    %vm500 = vmor %vm498, %vm499
    %v501 = vsel %vm500, %v493, %v497
    %v502 = vand.u32 2147483647, %v460
    %vm503 = vcmp.eq.f32.partialorder %v502, 8.507059e+37
    %v504 = vand.u32 %v460, 2147483648
    %v505 = vor.u32 1.1754944e-38, %v504
    %v506 = vsel %vm503, %v505, %v501
    %v507 = vrcp.pop %v463
    %v508 = vmul.f32 %v463, %v507
    %v509 = vsub.f32 1.0, %v508
    %v510 = vmul.f32 %v507, %v509
    %v511 = vadd.f32 %v507, %v510
    %vm512 = vweird.f32 %v463
    %vm513 = vweird.f32 %v507
    %vm514 = vmor %vm512, %vm513
    %v515 = vsel %vm514, %v507, %v511
    %v516 = vand.u32 2147483647, %v463
    %vm517 = vcmp.eq.f32.partialorder %v516, 8.507059e+37
    %v518 = vand.u32 %v463, 2147483648
    %v519 = vor.u32 1.1754944e-38, %v518
    %v520 = vsel %vm517, %v519, %v515
    %v521 = vrcp.pop %v466
    %v522 = vmul.f32 %v466, %v521
    %v523 = vsub.f32 1.0, %v522
    %v524 = vmul.f32 %v521, %v523
    %v525 = vadd.f32 %v521, %v524
    %vm526 = vweird.f32 %v466
    %vm527 = vweird.f32 %v521
    %vm528 = vmor %vm526, %vm527
    %v529 = vsel %vm528, %v521, %v525
    %v530 = vand.u32 2147483647, %v466
    %vm531 = vcmp.eq.f32.partialorder %v530, 8.507059e+37
    %v532 = vand.u32 %v466, 2147483648
    %v533 = vor.u32 1.1754944e-38, %v532
    %v534 = vsel %vm531, %v533, %v529
    %v535 = vrcp.pop %v469
    %v536 = vmul.f32 %v469, %v535
    %v537 = vsub.f32 1.0, %v536
    %v538 = vmul.f32 %v535, %v537
    %v539 = vadd.f32 %v535, %v538
    %vm540 = vweird.f32 %v469
    %vm541 = vweird.f32 %v535
    %vm542 = vmor %vm540, %vm541
    %v543 = vsel %vm542, %v535, %v539
    %v544 = vand.u32 2147483647, %v469
    %vm545 = vcmp.eq.f32.partialorder %v544, 8.507059e+37
    %v546 = vand.u32 %v469, 2147483648
    %v547 = vor.u32 1.1754944e-38, %v546
    %v548 = vsel %vm545, %v547, %v543
    %v549 = vrcp.pop %v472
    %v550 = vmul.f32 %v472, %v549
    %v551 = vsub.f32 1.0, %v550
    %v552 = vmul.f32 %v549, %v551
    %v553 = vadd.f32 %v549, %v552
    %vm554 = vweird.f32 %v472
    %vm555 = vweird.f32 %v549
    %vm556 = vmor %vm554, %vm555
    %v557 = vsel %vm556, %v549, %v553
    %v558 = vand.u32 2147483647, %v472
    %vm559 = vcmp.eq.f32.partialorder %v558, 8.507059e+37
    %v560 = vand.u32 %v472, 2147483648
    %v561 = vor.u32 1.1754944e-38, %v560
    %v562 = vsel %vm559, %v561, %v557
    %v563 = vrcp.pop %v475
    %v564 = vmul.f32 %v475, %v563
    %v565 = vsub.f32 1.0, %v564
    %v566 = vmul.f32 %v563, %v565
    %v567 = vadd.f32 %v563, %v566
    %vm568 = vweird.f32 %v475
    %vm569 = vweird.f32 %v563
    %vm570 = vmor %vm568, %vm569
    %v571 = vsel %vm570, %v563, %v567
    %v572 = vand.u32 2147483647, %v475
    %vm573 = vcmp.eq.f32.partialorder %v572, 8.507059e+37
    %v574 = vand.u32 %v475, 2147483648
    %v575 = vor.u32 1.1754944e-38, %v574
    %v576 = vsel %vm573, %v575, %v571
    %v577 = vrcp.pop %v478
    %v578 = vmul.f32 %v478, %v577
    %v579 = vsub.f32 1.0, %v578
    %v580 = vmul.f32 %v577, %v579
    %v581 = vadd.f32 %v577, %v580
    %vm582 = vweird.f32 %v478
    %vm583 = vweird.f32 %v577
    %vm584 = vmor %vm582, %vm583
    %v585 = vsel %vm584, %v577, %v581
    %v586 = vand.u32 2147483647, %v478
    %vm587 = vcmp.eq.f32.partialorder %v586, 8.507059e+37
    %v588 = vand.u32 %v478, 2147483648
    %v589 = vor.u32 1.1754944e-38, %v588
    %v590 = vsel %vm587, %v589, %v585
    %v591 = vmul.f32 %v440, %v492
    %v592 = vmul.f32 %v442, %v506
    %v593 = vmul.f32 %v444, %v520
    %v594 = vmul.f32 %v446, %v534
    %v595 = vmul.f32 %v448, %v548
    %v596 = vmul.f32 %v450, %v562
    %v597 = vmul.f32 %v452, %v576
    %v598 = vmul.f32 %v454, %v590
    %599 = vrot.lane.b32.xlu0 %v146, 64
    %v600 = vpop.permute.xlu0 %599
    %v603 = vsel %vm202, %v591, 0
    %605 = vmatpush.msra.mxu0 0.0
    %606 = vmatpush.msra.mxu0 0.0
    %607 = vmatpush.msra.mxu0 0.0
    %608 = vmatpush.msra.mxu0 0.0
    %609 = vmatpush.msra.mxu0 0.0
    %610 = vmatpush.msra.mxu0 0.0
    %611 = vmatpush.msra.mxu0 0.0
    %612 = vmatpush.msra.mxu0 0.0
    %613 = vmatpush.msra.mxu0 0.0
    %614 = vmatpush.msra.mxu0 0.0
    %615 = vmatpush.msra.mxu0 0.0
    %616 = vmatpush.msra.mxu0 0.0
    %617 = vmatpush.msra.mxu0 0.0
    %618 = vmatpush.msra.mxu0 0.0
    %619 = vmatpush.msra.mxu0 0.0
    %620 = vmatpush.msra.mxu0 %v600
    %621 = vmatmul.f32.gmra.mxu0 %v603
    %v622 = vpop.f32.mrf.mxu0
    %v623 = vadd.f32 0.0, %v622
    %624 = vdwg.mxu0
    %625 = vrot.lane.b32.xlu0 %v149, 64
    %v626 = vpop.permute.xlu0 %625
    %v629 = vsel %vm202, %v592, 0
    %631 = vmatpush.msra.mxu0 0.0
    %632 = vmatpush.msra.mxu0 0.0
    %633 = vmatpush.msra.mxu0 0.0
    %634 = vmatpush.msra.mxu0 0.0
    %635 = vmatpush.msra.mxu0 0.0
    %636 = vmatpush.msra.mxu0 0.0
    %637 = vmatpush.msra.mxu0 0.0
    %638 = vmatpush.msra.mxu0 0.0
    %639 = vmatpush.msra.mxu0 0.0
    %640 = vmatpush.msra.mxu0 0.0
    %641 = vmatpush.msra.mxu0 0.0
    %642 = vmatpush.msra.mxu0 0.0
    %643 = vmatpush.msra.mxu0 0.0
    %644 = vmatpush.msra.mxu0 0.0
    %645 = vmatpush.msra.mxu0 0.0
    %646 = vmatpush.msra.mxu0 %v626
    %647 = vmatmul.f32.gmra.mxu0 %v629
    %v648 = vpop.f32.mrf.mxu0
    %v649 = vadd.f32 0.0, %v648
    %650 = vdwg.mxu0
    %651 = vrot.lane.b32.xlu0 %v189, 64
    %v652 = vpop.permute.xlu0 %651
    %v655 = vsel %vm202, %v593, 0
    %657 = vmatpush.msra.mxu0 0.0
    %658 = vmatpush.msra.mxu0 0.0
    %659 = vmatpush.msra.mxu0 0.0
    %660 = vmatpush.msra.mxu0 0.0
    %661 = vmatpush.msra.mxu0 0.0
    %662 = vmatpush.msra.mxu0 0.0
    %663 = vmatpush.msra.mxu0 0.0
    %664 = vmatpush.msra.mxu0 0.0
    %665 = vmatpush.msra.mxu0 0.0
    %666 = vmatpush.msra.mxu0 0.0
    %667 = vmatpush.msra.mxu0 0.0
    %668 = vmatpush.msra.mxu0 0.0
    %669 = vmatpush.msra.mxu0 0.0
    %670 = vmatpush.msra.mxu0 0.0
    %671 = vmatpush.msra.mxu0 0.0
    %672 = vmatpush.msra.mxu0 %v652
    %673 = vmatmul.f32.gmra.mxu0 %v655
    %v674 = vpop.f32.mrf.mxu0
    %v675 = vadd.f32 0.0, %v674
    %676 = vdwg.mxu0
    %677 = vrot.lane.b32.xlu0 %v191, 64
    %v678 = vpop.permute.xlu0 %677
    %v681 = vsel %vm202, %v594, 0
    %683 = vmatpush.msra.mxu0 0.0
    %684 = vmatpush.msra.mxu0 0.0
    %685 = vmatpush.msra.mxu0 0.0
    %686 = vmatpush.msra.mxu0 0.0
    %687 = vmatpush.msra.mxu0 0.0
    %688 = vmatpush.msra.mxu0 0.0
    %689 = vmatpush.msra.mxu0 0.0
    %690 = vmatpush.msra.mxu0 0.0
    %691 = vmatpush.msra.mxu0 0.0
    %692 = vmatpush.msra.mxu0 0.0
    %693 = vmatpush.msra.mxu0 0.0
    %694 = vmatpush.msra.mxu0 0.0
    %695 = vmatpush.msra.mxu0 0.0
    %696 = vmatpush.msra.mxu0 0.0
    %697 = vmatpush.msra.mxu0 0.0
    %698 = vmatpush.msra.mxu0 %v678
    %699 = vmatmul.f32.gmra.mxu0 %v681
    %v700 = vpop.f32.mrf.mxu0
    %v701 = vadd.f32 0.0, %v700
    %702 = vdwg.mxu0
    %703 = vrot.lane.b32.xlu0 %v195, 64
    %v704 = vpop.permute.xlu0 %703
    %v707 = vsel %vm202, %v595, 0
    %709 = vmatpush.msra.mxu0 0.0
    %710 = vmatpush.msra.mxu0 0.0
    %711 = vmatpush.msra.mxu0 0.0
    %712 = vmatpush.msra.mxu0 0.0
    %713 = vmatpush.msra.mxu0 0.0
    %714 = vmatpush.msra.mxu0 0.0
    %715 = vmatpush.msra.mxu0 0.0
    %716 = vmatpush.msra.mxu0 0.0
    %717 = vmatpush.msra.mxu0 0.0
    %718 = vmatpush.msra.mxu0 0.0
    %719 = vmatpush.msra.mxu0 0.0
    %720 = vmatpush.msra.mxu0 0.0
    %721 = vmatpush.msra.mxu0 0.0
    %722 = vmatpush.msra.mxu0 0.0
    %723 = vmatpush.msra.mxu0 0.0
    %724 = vmatpush.msra.mxu0 %v704
    %725 = vmatmul.f32.gmra.mxu0 %v707
    %v726 = vpop.f32.mrf.mxu0
    %v727 = vadd.f32 0.0, %v726
    %728 = vdwg.mxu0
    %729 = vrot.lane.b32.xlu0 %v197, 64
    %v730 = vpop.permute.xlu0 %729
    %v733 = vsel %vm202, %v596, 0
    %735 = vmatpush.msra.mxu0 0.0
    %736 = vmatpush.msra.mxu0 0.0
    %737 = vmatpush.msra.mxu0 0.0
    %738 = vmatpush.msra.mxu0 0.0
    %739 = vmatpush.msra.mxu0 0.0
    %740 = vmatpush.msra.mxu0 0.0
    %741 = vmatpush.msra.mxu0 0.0
    %742 = vmatpush.msra.mxu0 0.0
    %743 = vmatpush.msra.mxu0 0.0
    %744 = vmatpush.msra.mxu0 0.0
    %745 = vmatpush.msra.mxu0 0.0
    %746 = vmatpush.msra.mxu0 0.0
    %747 = vmatpush.msra.mxu0 0.0
    %748 = vmatpush.msra.mxu0 0.0
    %749 = vmatpush.msra.mxu0 0.0
    %750 = vmatpush.msra.mxu0 %v730
    %751 = vmatmul.f32.gmra.mxu0 %v733
    %v752 = vpop.f32.mrf.mxu0
    %v753 = vadd.f32 0.0, %v752
    %754 = vdwg.mxu0
    %755 = vrot.lane.b32.xlu0 %v199, 64
    %v756 = vpop.permute.xlu0 %755
    %v759 = vsel %vm202, %v597, 0
    %761 = vmatpush.msra.mxu0 0.0
    %762 = vmatpush.msra.mxu0 0.0
    %763 = vmatpush.msra.mxu0 0.0
    %764 = vmatpush.msra.mxu0 0.0
    %765 = vmatpush.msra.mxu0 0.0
    %766 = vmatpush.msra.mxu0 0.0
    %767 = vmatpush.msra.mxu0 0.0
    %768 = vmatpush.msra.mxu0 0.0
    %769 = vmatpush.msra.mxu0 0.0
    %770 = vmatpush.msra.mxu0 0.0
    %771 = vmatpush.msra.mxu0 0.0
    %772 = vmatpush.msra.mxu0 0.0
    %773 = vmatpush.msra.mxu0 0.0
    %774 = vmatpush.msra.mxu0 0.0
    %775 = vmatpush.msra.mxu0 0.0
    %776 = vmatpush.msra.mxu0 %v756
    %777 = vmatmul.f32.gmra.mxu0 %v759
    %v778 = vpop.f32.mrf.mxu0
    %v779 = vadd.f32 0.0, %v778
    %780 = vdwg.mxu0
    %781 = vrot.lane.b32.xlu0 %v201, 64
    %v782 = vpop.permute.xlu0 %781
    %v785 = vsel %vm202, %v598, 0
    %787 = vmatpush.msra.mxu0 0.0
    %788 = vmatpush.msra.mxu0 0.0
    %789 = vmatpush.msra.mxu0 0.0
    %790 = vmatpush.msra.mxu0 0.0
    %791 = vmatpush.msra.mxu0 0.0
    %792 = vmatpush.msra.mxu0 0.0
    %793 = vmatpush.msra.mxu0 0.0
    %794 = vmatpush.msra.mxu0 0.0
    %795 = vmatpush.msra.mxu0 0.0
    %796 = vmatpush.msra.mxu0 0.0
    %797 = vmatpush.msra.mxu0 0.0
    %798 = vmatpush.msra.mxu0 0.0
    %799 = vmatpush.msra.mxu0 0.0
    %800 = vmatpush.msra.mxu0 0.0
    %801 = vmatpush.msra.mxu0 0.0
    %802 = vmatpush.msra.mxu0 %v782
    %803 = vmatmul.f32.gmra.mxu0 %v785
    %v804 = vpop.f32.mrf.mxu0
    %v805 = vadd.f32 0.0, %v804
    %806 = vdwg.mxu0
    %v807 = vadd.f32 %v623, %v675
    %v808 = vadd.f32 %v649, %v701
    %v809 = vadd.f32 %v807, %v727
    %v810 = vadd.f32 %v808, %v753
    %v811 = vadd.f32 %v809, %v779
    %v812 = vadd.f32 %v810, %v805
    %v813 = vadd.f32 %v40, %v811
    %v814 = vadd.f32 %v41, %v812
    %v815 = vld [vmem:[%s5 + $0x1] ss:$0 sm:$0xff]
    %v816 = vadd.f32 %v813, %v815
    %v817 = vadd.f32 %v814, %v815
    %v818 = vld [vmem:[%s5 + $0x10] ss:$0 sm:$0xff]
    %v819 = vld [vmem:[%s5 + $0x13] ss:$0 sm:$0xff]
    %v820 = vsel %vm52, %v816, 0.0
    %821 = vadd.xlane.f32.xlu0 %v820
    %v822 = vpop.xlane.xlu0 %821
    %v823 = vsel %vm52, %v817, 0.0
    %824 = vadd.xlane.f32.xlu0 %v823
    %v825 = vpop.xlane.xlu0 %824
    %v826 = vmul.f32 %v822, %v65
    %v827 = vmul.f32 %v825, %v65
    %v828 = vsub.f32 %v816, %v826
    %v829 = vsub.f32 %v817, %v827
    %v830 = vmul.f32 %v828, %v828
    %v831 = vmul.f32 %v829, %v829
    %v832 = vsel %vm52, %v830, 0.0
    %833 = vadd.xlane.f32.xlu0 %v832
    %v834 = vpop.xlane.xlu0 %833
    %v835 = vsel %vm52, %v831, 0.0
    %836 = vadd.xlane.f32.xlu0 %v835
    %v837 = vpop.xlane.xlu0 %836
    %v838 = vmul.f32 %v834, %v65
    %v839 = vmul.f32 %v837, %v65
    %v840 = vadd.f32 %v838, 1e-05
    %v841 = vadd.f32 %v839, 1e-05
    %v842 = vrsqrt.pop %v840
    %v843 = vmul.f32 %v842, %v840
    %v844 = vmul.f32 %v843, %v842
    %v845 = vmul.f32 0.5, %v844
    %v846 = vsub.f32 1.5, %v845
    %v847 = vmul.f32 %v842, %v846
    %vm848 = vweird.f32 %v840
    %vm849 = vweird.f32 %v842
    %vm850 = vmor %vm848, %vm849
    %v851 = vsel %vm850, %v842, %v847
    %v852 = vrsqrt.pop %v841
    %v853 = vmul.f32 %v852, %v841
    %v854 = vmul.f32 %v853, %v852
    %v855 = vmul.f32 0.5, %v854
    %v856 = vsub.f32 1.5, %v855
    %v857 = vmul.f32 %v852, %v856
    %vm858 = vweird.f32 %v841
    %vm859 = vweird.f32 %v852
    %vm860 = vmor %vm858, %vm859
    %v861 = vsel %vm860, %v852, %v857
    %v862 = vmul.f32 %v828, %v851
    %v863 = vmul.f32 %v829, %v861
    %v864 = vmul.f32 %v862, %v818
    %v865 = vmul.f32 %v863, %v818
    %v866 = vadd.f32 %v864, %v819
    %v867 = vadd.f32 %v865, %v819
    %v868 = vld [vmem:[#allocation2 + $0x10] sm:$0xff]
    %v869 = vld [vmem:[#allocation2 + $0x40] sm:$0xff]
    %v870 = vld [vmem:[#allocation2 + $0x70] sm:$0xff]
    %v871 = vld [vmem:[#allocation2 + $0xa0] sm:$0xff]
    %v872 = vld [vmem:[%s5 + $0x2] ss:$0 sm:$0xff]
    %v874 = vsel %vm52, %v866, 0
    %v877 = vsel %vm52, %v867, 0
    %879 = vmatpush.msra.mxu0 0.0
    %880 = vmatpush.msra.mxu0 0.0
    %881 = vmatpush.msra.mxu0 0.0
    %882 = vmatpush.msra.mxu0 0.0
    %883 = vmatpush.msra.mxu0 0.0
    %884 = vmatpush.msra.mxu0 0.0
    %885 = vmatpush.msra.mxu0 0.0
    %886 = vmatpush.msra.mxu0 0.0
    %887 = vmatpush.msra.mxu0 0.0
    %888 = vmatpush.msra.mxu0 0.0
    %889 = vmatpush.msra.mxu0 0.0
    %890 = vmatpush.msra.mxu0 0.0
    %891 = vmatpush.msra.mxu0 %v871
    %892 = vmatpush.msra.mxu0 %v870
    %893 = vmatpush.msra.mxu0 %v869
    %894 = vmatpush.msra.mxu0 %v868
    %895 = vmatmul.f32.gmra.mxu0 %v874
    %v896 = vpop.f32.mrf.mxu0
    %v897 = vadd.f32 %v872, %v896
    %898 = vmatmul.f32.gmra.mxu0 %v877
    %v899 = vpop.f32.mrf.mxu0
    %v900 = vadd.f32 %v872, %v899
    %901 = vdwg.mxu0
    %v902 = vld [vmem:[#allocation2 + $0x18] sm:$0xff]
    %v903 = vld [vmem:[#allocation2 + $0x20] sm:$0xff]
    %v904 = vld [vmem:[#allocation2 + $0x48] sm:$0xff]
    %v905 = vld [vmem:[#allocation2 + $0x50] sm:$0xff]
    %v906 = vld [vmem:[#allocation2 + $0x78] sm:$0xff]
    %v907 = vld [vmem:[#allocation2 + $0x80] sm:$0xff]
    %v908 = vld [vmem:[#allocation2 + $0xa8] sm:$0xff]
    %v909 = vld [vmem:[#allocation2 + $0xb0] sm:$0xff]
    %s910 = scalar_lea.vmem %s5, 3
    %v911 = vld [vmem:[%s910] ss:$8 sm:$0x3]
    %v913 = vperm.slane %v911, 0
    %v914 = vperm.slane %v911, 1
    %v918 = vsel %vm52, %v42, 0
    %v921 = vsel %vm52, %v43, 0
    %923 = vmatpush.msra.mxu0 0.0
    %924 = vmatpush.msra.mxu0 0.0
    %925 = vmatpush.msra.mxu0 0.0
    %926 = vmatpush.msra.mxu0 0.0
    %927 = vmatpush.msra.mxu0 0.0
    %928 = vmatpush.msra.mxu0 0.0
    %929 = vmatpush.msra.mxu0 0.0
    %930 = vmatpush.msra.mxu0 0.0
    %931 = vmatpush.msra.mxu0 0.0
    %932 = vmatpush.msra.mxu0 0.0
    %933 = vmatpush.msra.mxu0 0.0
    %934 = vmatpush.msra.mxu0 0.0
    %935 = vmatpush.msra.mxu0 %v908
    %936 = vmatpush.msra.mxu0 %v906
    %937 = vmatpush.msra.mxu0 %v904
    %938 = vmatpush.msra.mxu0 %v902
    %939 = vmatmul.f32.gmra.mxu0 %v918
    %v940 = vpop.f32.mrf.mxu0
    %v941 = vadd.f32 %v913, %v940
    %942 = vmatmul.f32.gmra.mxu0 %v921
    %v943 = vpop.f32.mrf.mxu0
    %v944 = vadd.f32 %v913, %v943
    %945 = vdwg.mxu0
    %946 = vmatpush.msra.mxu0 0.0
    %947 = vmatpush.msra.mxu0 0.0
    %948 = vmatpush.msra.mxu0 0.0
    %949 = vmatpush.msra.mxu0 0.0
    %950 = vmatpush.msra.mxu0 0.0
    %951 = vmatpush.msra.mxu0 0.0
    %952 = vmatpush.msra.mxu0 0.0
    %953 = vmatpush.msra.mxu0 0.0
    %954 = vmatpush.msra.mxu0 0.0
    %955 = vmatpush.msra.mxu0 0.0
    %956 = vmatpush.msra.mxu0 0.0
    %957 = vmatpush.msra.mxu0 0.0
    %958 = vmatpush.msra.mxu0 %v909
    %959 = vmatpush.msra.mxu0 %v907
    %960 = vmatpush.msra.mxu0 %v905
    %961 = vmatpush.msra.mxu0 %v903
    %962 = vmatmul.f32.gmra.mxu0 %v918
    %v963 = vpop.f32.mrf.mxu0
    %v964 = vadd.f32 %v914, %v963
    %965 = vmatmul.f32.gmra.mxu0 %v921
    %v966 = vpop.f32.mrf.mxu0
    %v967 = vadd.f32 %v914, %v966
    %968 = vdwg.mxu0
    %971 = vrot.lane.b32.xlu0 %v897, 120
    %v972 = vpop.permute.xlu0 %971
    %973 = vrot.lane.b32.xlu0 %v900, 120
    %v974 = vpop.permute.xlu0 %973
    %975 = vrot.lane.b32.xlu0 %v897, 112
    %v976 = vpop.permute.xlu0 %975
    %977 = vrot.lane.b32.xlu0 %v900, 112
    %v978 = vpop.permute.xlu0 %977
    %979 = vrot.lane.b32.xlu0 %v897, 104
    %v980 = vpop.permute.xlu0 %979
    %981 = vrot.lane.b32.xlu0 %v900, 104
    %v982 = vpop.permute.xlu0 %981
    %985 = vrot.lane.b32.xlu0 %v941, 120
    %v986 = vpop.permute.xlu0 %985
    %987 = vrot.lane.b32.xlu0 %v944, 120
    %v988 = vpop.permute.xlu0 %987
    %989 = vrot.lane.b32.xlu0 %v941, 112
    %v990 = vpop.permute.xlu0 %989
    %991 = vrot.lane.b32.xlu0 %v944, 112
    %v992 = vpop.permute.xlu0 %991
    %993 = vrot.lane.b32.xlu0 %v941, 104
    %v994 = vpop.permute.xlu0 %993
    %995 = vrot.lane.b32.xlu0 %v944, 104
    %v996 = vpop.permute.xlu0 %995
    %997 = vrot.lane.b32.xlu0 %v941, 96
    %v998 = vpop.permute.xlu0 %997
    %999 = vrot.lane.b32.xlu0 %v944, 96
    %v1000 = vpop.permute.xlu0 %999
    %1001 = vrot.lane.b32.xlu0 %v941, 64
    %v1002 = vpop.permute.xlu0 %1001
    %1003 = vrot.lane.b32.xlu0 %v944, 64
    %v1004 = vpop.permute.xlu0 %1003
    %1007 = vrot.lane.b32.xlu0 %v964, 32
    %v1008 = vpop.permute.xlu0 %1007
    %1009 = vrot.lane.b32.xlu0 %v967, 32
    %v1010 = vpop.permute.xlu0 %1009
    %v1011 = vsel %vm202, %v897, 0
    %v1013 = vsel %vm202, %v941, 0
    %1015 = vmatpush.xpose.msra.mxu0 0.0
    %1016 = vmatpush.xpose.msra.mxu0 0.0
    %1017 = vmatpush.xpose.msra.mxu0 0.0
    %1018 = vmatpush.xpose.msra.mxu0 0.0
    %1019 = vmatpush.xpose.msra.mxu0 0.0
    %1020 = vmatpush.xpose.msra.mxu0 0.0
    %1021 = vmatpush.xpose.msra.mxu0 0.0
    %1022 = vmatpush.xpose.msra.mxu0 0.0
    %1023 = vmatpush.xpose.msra.mxu0 0.0
    %1024 = vmatpush.xpose.msra.mxu0 0.0
    %1025 = vmatpush.xpose.msra.mxu0 0.0
    %1026 = vmatpush.xpose.msra.mxu0 0.0
    %1027 = vmatpush.xpose.msra.mxu0 0.0
    %1028 = vmatpush.xpose.msra.mxu0 0.0
    %1029 = vmatpush.xpose.msra.mxu0 0.0
    %1030 = vmatpush.xpose.msra.mxu0 %v1013
    %1031 = vmatmul.f32.gmra.mxu0 %v1011
    %v1032 = vpop.f32.mrf.mxu0
    %v1033 = vadd.f32 0.0, %v1032
    %1034 = vdwg.mxu0
    %v1035 = vsel %vm202, %v900, 0
    %v1037 = vsel %vm202, %v944, 0
    %1039 = vmatpush.xpose.msra.mxu0 0.0
    %1040 = vmatpush.xpose.msra.mxu0 0.0
    %1041 = vmatpush.xpose.msra.mxu0 0.0
    %1042 = vmatpush.xpose.msra.mxu0 0.0
    %1043 = vmatpush.xpose.msra.mxu0 0.0
    %1044 = vmatpush.xpose.msra.mxu0 0.0
    %1045 = vmatpush.xpose.msra.mxu0 0.0
    %1046 = vmatpush.xpose.msra.mxu0 0.0
    %1047 = vmatpush.xpose.msra.mxu0 0.0
    %1048 = vmatpush.xpose.msra.mxu0 0.0
    %1049 = vmatpush.xpose.msra.mxu0 0.0
    %1050 = vmatpush.xpose.msra.mxu0 0.0
    %1051 = vmatpush.xpose.msra.mxu0 0.0
    %1052 = vmatpush.xpose.msra.mxu0 0.0
    %1053 = vmatpush.xpose.msra.mxu0 0.0
    %1054 = vmatpush.xpose.msra.mxu0 %v1037
    %1055 = vmatmul.f32.gmra.mxu0 %v1035
    %v1056 = vpop.f32.mrf.mxu0
    %v1057 = vadd.f32 0.0, %v1056
    %1058 = vdwg.mxu0
    %v1059 = vsel %vm202, %v972, 0
    %v1061 = vsel %vm202, %v986, 0
    %1063 = vmatpush.xpose.msra.mxu0 0.0
    %1064 = vmatpush.xpose.msra.mxu0 0.0
    %1065 = vmatpush.xpose.msra.mxu0 0.0
    %1066 = vmatpush.xpose.msra.mxu0 0.0
    %1067 = vmatpush.xpose.msra.mxu0 0.0
    %1068 = vmatpush.xpose.msra.mxu0 0.0
    %1069 = vmatpush.xpose.msra.mxu0 0.0
    %1070 = vmatpush.xpose.msra.mxu0 0.0
    %1071 = vmatpush.xpose.msra.mxu0 0.0
    %1072 = vmatpush.xpose.msra.mxu0 0.0
    %1073 = vmatpush.xpose.msra.mxu0 0.0
    %1074 = vmatpush.xpose.msra.mxu0 0.0
    %1075 = vmatpush.xpose.msra.mxu0 0.0
    %1076 = vmatpush.xpose.msra.mxu0 0.0
    %1077 = vmatpush.xpose.msra.mxu0 0.0
    %1078 = vmatpush.xpose.msra.mxu0 %v1061
    %1079 = vmatmul.f32.gmra.mxu0 %v1059
    %v1080 = vpop.f32.mrf.mxu0
    %v1081 = vadd.f32 0.0, %v1080
    %1082 = vdwg.mxu0
    %v1083 = vsel %vm202, %v974, 0
    %v1085 = vsel %vm202, %v988, 0
    %1087 = vmatpush.xpose.msra.mxu0 0.0
    %1088 = vmatpush.xpose.msra.mxu0 0.0
    %1089 = vmatpush.xpose.msra.mxu0 0.0
    %1090 = vmatpush.xpose.msra.mxu0 0.0
    %1091 = vmatpush.xpose.msra.mxu0 0.0
    %1092 = vmatpush.xpose.msra.mxu0 0.0
    %1093 = vmatpush.xpose.msra.mxu0 0.0
    %1094 = vmatpush.xpose.msra.mxu0 0.0
    %1095 = vmatpush.xpose.msra.mxu0 0.0
    %1096 = vmatpush.xpose.msra.mxu0 0.0
    %1097 = vmatpush.xpose.msra.mxu0 0.0
    %1098 = vmatpush.xpose.msra.mxu0 0.0
    %1099 = vmatpush.xpose.msra.mxu0 0.0
    %1100 = vmatpush.xpose.msra.mxu0 0.0
    %1101 = vmatpush.xpose.msra.mxu0 0.0
    %1102 = vmatpush.xpose.msra.mxu0 %v1085
    %1103 = vmatmul.f32.gmra.mxu0 %v1083
    %v1104 = vpop.f32.mrf.mxu0
    %v1105 = vadd.f32 0.0, %v1104
    %1106 = vdwg.mxu0
    %v1107 = vsel %vm202, %v976, 0
    %v1109 = vsel %vm202, %v990, 0
    %1111 = vmatpush.xpose.msra.mxu0 0.0
    %1112 = vmatpush.xpose.msra.mxu0 0.0
    %1113 = vmatpush.xpose.msra.mxu0 0.0
    %1114 = vmatpush.xpose.msra.mxu0 0.0
    %1115 = vmatpush.xpose.msra.mxu0 0.0
    %1116 = vmatpush.xpose.msra.mxu0 0.0
    %1117 = vmatpush.xpose.msra.mxu0 0.0
    %1118 = vmatpush.xpose.msra.mxu0 0.0
    %1119 = vmatpush.xpose.msra.mxu0 0.0
    %1120 = vmatpush.xpose.msra.mxu0 0.0
    %1121 = vmatpush.xpose.msra.mxu0 0.0
    %1122 = vmatpush.xpose.msra.mxu0 0.0
    %1123 = vmatpush.xpose.msra.mxu0 0.0
    %1124 = vmatpush.xpose.msra.mxu0 0.0
    %1125 = vmatpush.xpose.msra.mxu0 0.0
    %1126 = vmatpush.xpose.msra.mxu0 %v1109
    %1127 = vmatmul.f32.gmra.mxu0 %v1107
    %v1128 = vpop.f32.mrf.mxu0
    %v1129 = vadd.f32 0.0, %v1128
    %1130 = vdwg.mxu0
    %v1131 = vsel %vm202, %v978, 0
    %v1133 = vsel %vm202, %v992, 0
    %1135 = vmatpush.xpose.msra.mxu0 0.0
    %1136 = vmatpush.xpose.msra.mxu0 0.0
    %1137 = vmatpush.xpose.msra.mxu0 0.0
    %1138 = vmatpush.xpose.msra.mxu0 0.0
    %1139 = vmatpush.xpose.msra.mxu0 0.0
    %1140 = vmatpush.xpose.msra.mxu0 0.0
    %1141 = vmatpush.xpose.msra.mxu0 0.0
    %1142 = vmatpush.xpose.msra.mxu0 0.0
    %1143 = vmatpush.xpose.msra.mxu0 0.0
    %1144 = vmatpush.xpose.msra.mxu0 0.0
    %1145 = vmatpush.xpose.msra.mxu0 0.0
    %1146 = vmatpush.xpose.msra.mxu0 0.0
    %1147 = vmatpush.xpose.msra.mxu0 0.0
    %1148 = vmatpush.xpose.msra.mxu0 0.0
    %1149 = vmatpush.xpose.msra.mxu0 0.0
    %1150 = vmatpush.xpose.msra.mxu0 %v1133
    %1151 = vmatmul.f32.gmra.mxu0 %v1131
    %v1152 = vpop.f32.mrf.mxu0
    %v1153 = vadd.f32 0.0, %v1152
    %1154 = vdwg.mxu0
    %v1155 = vsel %vm202, %v980, 0
    %v1157 = vsel %vm202, %v994, 0
    %1159 = vmatpush.xpose.msra.mxu0 0.0
    %1160 = vmatpush.xpose.msra.mxu0 0.0
    %1161 = vmatpush.xpose.msra.mxu0 0.0
    %1162 = vmatpush.xpose.msra.mxu0 0.0
    %1163 = vmatpush.xpose.msra.mxu0 0.0
    %1164 = vmatpush.xpose.msra.mxu0 0.0
    %1165 = vmatpush.xpose.msra.mxu0 0.0
    %1166 = vmatpush.xpose.msra.mxu0 0.0
    %1167 = vmatpush.xpose.msra.mxu0 0.0
    %1168 = vmatpush.xpose.msra.mxu0 0.0
    %1169 = vmatpush.xpose.msra.mxu0 0.0
    %1170 = vmatpush.xpose.msra.mxu0 0.0
    %1171 = vmatpush.xpose.msra.mxu0 0.0
    %1172 = vmatpush.xpose.msra.mxu0 0.0
    %1173 = vmatpush.xpose.msra.mxu0 0.0
    %1174 = vmatpush.xpose.msra.mxu0 %v1157
    %1175 = vmatmul.f32.gmra.mxu0 %v1155
    %v1176 = vpop.f32.mrf.mxu0
    %v1177 = vadd.f32 0.0, %v1176
    %1178 = vdwg.mxu0
    %v1179 = vsel %vm202, %v982, 0
    %v1181 = vsel %vm202, %v996, 0
    %1183 = vmatpush.xpose.msra.mxu0 0.0
    %1184 = vmatpush.xpose.msra.mxu0 0.0
    %1185 = vmatpush.xpose.msra.mxu0 0.0
    %1186 = vmatpush.xpose.msra.mxu0 0.0
    %1187 = vmatpush.xpose.msra.mxu0 0.0
    %1188 = vmatpush.xpose.msra.mxu0 0.0
    %1189 = vmatpush.xpose.msra.mxu0 0.0
    %1190 = vmatpush.xpose.msra.mxu0 0.0
    %1191 = vmatpush.xpose.msra.mxu0 0.0
    %1192 = vmatpush.xpose.msra.mxu0 0.0
    %1193 = vmatpush.xpose.msra.mxu0 0.0
    %1194 = vmatpush.xpose.msra.mxu0 0.0
    %1195 = vmatpush.xpose.msra.mxu0 0.0
    %1196 = vmatpush.xpose.msra.mxu0 0.0
    %1197 = vmatpush.xpose.msra.mxu0 0.0
    %1198 = vmatpush.xpose.msra.mxu0 %v1181
    %1199 = vmatmul.f32.gmra.mxu0 %v1179
    %v1200 = vpop.f32.mrf.mxu0
    %v1201 = vadd.f32 0.0, %v1200
    %1202 = vdwg.mxu0
    %v1203 = vsel %vm202, %v1033, -inf
    %1204 = vmax.xlane.f32.xlu0 %v1203
    %v1205 = vpop.xlane.xlu0 %1204
    %v1206 = vsel %vm202, %v1057, -inf
    %1207 = vmax.xlane.f32.xlu0 %v1206
    %v1208 = vpop.xlane.xlu0 %1207
    %v1209 = vsel %vm202, %v1081, -inf
    %1210 = vmax.xlane.f32.xlu0 %v1209
    %v1211 = vpop.xlane.xlu0 %1210
    %v1212 = vsel %vm202, %v1105, -inf
    %1213 = vmax.xlane.f32.xlu0 %v1212
    %v1214 = vpop.xlane.xlu0 %1213
    %v1215 = vsel %vm202, %v1129, -inf
    %1216 = vmax.xlane.f32.xlu0 %v1215
    %v1217 = vpop.xlane.xlu0 %1216
    %v1218 = vsel %vm202, %v1153, -inf
    %1219 = vmax.xlane.f32.xlu0 %v1218
    %v1220 = vpop.xlane.xlu0 %1219
    %v1221 = vsel %vm202, %v1177, -inf
    %1222 = vmax.xlane.f32.xlu0 %v1221
    %v1223 = vpop.xlane.xlu0 %1222
    %v1224 = vsel %vm202, %v1201, -inf
    %1225 = vmax.xlane.f32.xlu0 %v1224
    %v1226 = vpop.xlane.xlu0 %1225
    %v1227 = vsub.f32 %v1033, %v1205
    %v1228 = vsub.f32 %v1057, %v1208
    %v1229 = vsub.f32 %v1081, %v1211
    %v1230 = vsub.f32 %v1105, %v1214
    %v1231 = vsub.f32 %v1129, %v1217
    %v1232 = vsub.f32 %v1153, %v1220
    %v1233 = vsub.f32 %v1177, %v1223
    %v1234 = vsub.f32 %v1201, %v1226
    %v1235 = vmul.f32 %v1227, 1.442695
    %v1236 = vpow.pop %v1235
    %v1237 = vmul.f32 %v1228, 1.442695
    %v1238 = vpow.pop %v1237
    %v1239 = vmul.f32 %v1229, 1.442695
    %v1240 = vpow.pop %v1239
    %v1241 = vmul.f32 %v1230, 1.442695
    %v1242 = vpow.pop %v1241
    %v1243 = vmul.f32 %v1231, 1.442695
    %v1244 = vpow.pop %v1243
    %v1245 = vmul.f32 %v1232, 1.442695
    %v1246 = vpow.pop %v1245
    %v1247 = vmul.f32 %v1233, 1.442695
    %v1248 = vpow.pop %v1247
    %v1249 = vmul.f32 %v1234, 1.442695
    %v1250 = vpow.pop %v1249
    %v1251 = vsel %vm202, %v1236, 0.0
    %1252 = vadd.xlane.f32.xlu0 %v1251
    %v1253 = vpop.xlane.xlu0 %1252
    %v1254 = vsel %vm202, %v1238, 0.0
    %1255 = vadd.xlane.f32.xlu0 %v1254
    %v1256 = vpop.xlane.xlu0 %1255
    %v1257 = vsel %vm202, %v1240, 0.0
    %1258 = vadd.xlane.f32.xlu0 %v1257
    %v1259 = vpop.xlane.xlu0 %1258
    %v1260 = vsel %vm202, %v1242, 0.0
    %1261 = vadd.xlane.f32.xlu0 %v1260
    %v1262 = vpop.xlane.xlu0 %1261
    %v1263 = vsel %vm202, %v1244, 0.0
    %1264 = vadd.xlane.f32.xlu0 %v1263
    %v1265 = vpop.xlane.xlu0 %1264
    %v1266 = vsel %vm202, %v1246, 0.0
    %1267 = vadd.xlane.f32.xlu0 %v1266
    %v1268 = vpop.xlane.xlu0 %1267
    %v1269 = vsel %vm202, %v1248, 0.0
    %1270 = vadd.xlane.f32.xlu0 %v1269
    %v1271 = vpop.xlane.xlu0 %1270
    %v1272 = vsel %vm202, %v1250, 0.0
    %1273 = vadd.xlane.f32.xlu0 %v1272
    %v1274 = vpop.xlane.xlu0 %1273
    %v1275 = vrcp.pop %v1253
    %v1276 = vmul.f32 %v1253, %v1275
    %v1277 = vsub.f32 1.0, %v1276
    %v1278 = vmul.f32 %v1275, %v1277
    %v1279 = vadd.f32 %v1275, %v1278
    %vm1280 = vweird.f32 %v1253
    %vm1281 = vweird.f32 %v1275
    %vm1282 = vmor %vm1280, %vm1281
    %v1283 = vsel %vm1282, %v1275, %v1279
    %v1284 = vand.u32 2147483647, %v1253
    %vm1285 = vcmp.eq.f32.partialorder %v1284, 8.507059e+37
    %v1286 = vand.u32 %v1253, 2147483648
    %v1287 = vor.u32 1.1754944e-38, %v1286
    %v1288 = vsel %vm1285, %v1287, %v1283
    %v1289 = vrcp.pop %v1256
    %v1290 = vmul.f32 %v1256, %v1289
    %v1291 = vsub.f32 1.0, %v1290
    %v1292 = vmul.f32 %v1289, %v1291
    %v1293 = vadd.f32 %v1289, %v1292
    %vm1294 = vweird.f32 %v1256
    %vm1295 = vweird.f32 %v1289
    %vm1296 = vmor %vm1294, %vm1295
    %v1297 = vsel %vm1296, %v1289, %v1293
    %v1298 = vand.u32 2147483647, %v1256
    %vm1299 = vcmp.eq.f32.partialorder %v1298, 8.507059e+37
    %v1300 = vand.u32 %v1256, 2147483648
    %v1301 = vor.u32 1.1754944e-38, %v1300
    %v1302 = vsel %vm1299, %v1301, %v1297
    %v1303 = vrcp.pop %v1259
    %v1304 = vmul.f32 %v1259, %v1303
    %v1305 = vsub.f32 1.0, %v1304
    %v1306 = vmul.f32 %v1303, %v1305
    %v1307 = vadd.f32 %v1303, %v1306
    %vm1308 = vweird.f32 %v1259
    %vm1309 = vweird.f32 %v1303
    %vm1310 = vmor %vm1308, %vm1309
    %v1311 = vsel %vm1310, %v1303, %v1307
    %v1312 = vand.u32 2147483647, %v1259
    %vm1313 = vcmp.eq.f32.partialorder %v1312, 8.507059e+37
    %v1314 = vand.u32 %v1259, 2147483648
    %v1315 = vor.u32 1.1754944e-38, %v1314
    %v1316 = vsel %vm1313, %v1315, %v1311
    %v1317 = vrcp.pop %v1262
    %v1318 = vmul.f32 %v1262, %v1317
    %v1319 = vsub.f32 1.0, %v1318
    %v1320 = vmul.f32 %v1317, %v1319
    %v1321 = vadd.f32 %v1317, %v1320
    %vm1322 = vweird.f32 %v1262
    %vm1323 = vweird.f32 %v1317
    %vm1324 = vmor %vm1322, %vm1323
    %v1325 = vsel %vm1324, %v1317, %v1321
    %v1326 = vand.u32 2147483647, %v1262
    %vm1327 = vcmp.eq.f32.partialorder %v1326, 8.507059e+37
    %v1328 = vand.u32 %v1262, 2147483648
    %v1329 = vor.u32 1.1754944e-38, %v1328
    %v1330 = vsel %vm1327, %v1329, %v1325
    %v1331 = vrcp.pop %v1265
    %v1332 = vmul.f32 %v1265, %v1331
    %v1333 = vsub.f32 1.0, %v1332
    %v1334 = vmul.f32 %v1331, %v1333
    %v1335 = vadd.f32 %v1331, %v1334
    %vm1336 = vweird.f32 %v1265
    %vm1337 = vweird.f32 %v1331
    %vm1338 = vmor %vm1336, %vm1337
    %v1339 = vsel %vm1338, %v1331, %v1335
    %v1340 = vand.u32 2147483647, %v1265
    %vm1341 = vcmp.eq.f32.partialorder %v1340, 8.507059e+37
    %v1342 = vand.u32 %v1265, 2147483648
    %v1343 = vor.u32 1.1754944e-38, %v1342
    %v1344 = vsel %vm1341, %v1343, %v1339
    %v1345 = vrcp.pop %v1268
    %v1346 = vmul.f32 %v1268, %v1345
    %v1347 = vsub.f32 1.0, %v1346
    %v1348 = vmul.f32 %v1345, %v1347
    %v1349 = vadd.f32 %v1345, %v1348
    %vm1350 = vweird.f32 %v1268
    %vm1351 = vweird.f32 %v1345
    %vm1352 = vmor %vm1350, %vm1351
    %v1353 = vsel %vm1352, %v1345, %v1349
    %v1354 = vand.u32 2147483647, %v1268
    %vm1355 = vcmp.eq.f32.partialorder %v1354, 8.507059e+37
    %v1356 = vand.u32 %v1268, 2147483648
    %v1357 = vor.u32 1.1754944e-38, %v1356
    %v1358 = vsel %vm1355, %v1357, %v1353
    %v1359 = vrcp.pop %v1271
    %v1360 = vmul.f32 %v1271, %v1359
    %v1361 = vsub.f32 1.0, %v1360
    %v1362 = vmul.f32 %v1359, %v1361
    %v1363 = vadd.f32 %v1359, %v1362
    %vm1364 = vweird.f32 %v1271
    %vm1365 = vweird.f32 %v1359
    %vm1366 = vmor %vm1364, %vm1365
    %v1367 = vsel %vm1366, %v1359, %v1363
    %v1368 = vand.u32 2147483647, %v1271
    %vm1369 = vcmp.eq.f32.partialorder %v1368, 8.507059e+37
    %v1370 = vand.u32 %v1271, 2147483648
    %v1371 = vor.u32 1.1754944e-38, %v1370
    %v1372 = vsel %vm1369, %v1371, %v1367
    %v1373 = vrcp.pop %v1274
    %v1374 = vmul.f32 %v1274, %v1373
    %v1375 = vsub.f32 1.0, %v1374
    %v1376 = vmul.f32 %v1373, %v1375
    %v1377 = vadd.f32 %v1373, %v1376
    %vm1378 = vweird.f32 %v1274
    %vm1379 = vweird.f32 %v1373
    %vm1380 = vmor %vm1378, %vm1379
    %v1381 = vsel %vm1380, %v1373, %v1377
    %v1382 = vand.u32 2147483647, %v1274
    %vm1383 = vcmp.eq.f32.partialorder %v1382, 8.507059e+37
    %v1384 = vand.u32 %v1274, 2147483648
    %v1385 = vor.u32 1.1754944e-38, %v1384
    %v1386 = vsel %vm1383, %v1385, %v1381
    %v1387 = vmul.f32 %v1236, %v1288
    %v1388 = vmul.f32 %v1238, %v1302
    %v1389 = vmul.f32 %v1240, %v1316
    %v1390 = vmul.f32 %v1242, %v1330
    %v1391 = vmul.f32 %v1244, %v1344
    %v1392 = vmul.f32 %v1246, %v1358
    %v1393 = vmul.f32 %v1248, %v1372
    %v1394 = vmul.f32 %v1250, %v1386
    %v1397 = vsel %vm202, %v1387, 0
    %1399 = vmatpush.msra.mxu0 0.0
    %1400 = vmatpush.msra.mxu0 0.0
    %1401 = vmatpush.msra.mxu0 0.0
    %1402 = vmatpush.msra.mxu0 0.0
    %1403 = vmatpush.msra.mxu0 0.0
    %1404 = vmatpush.msra.mxu0 0.0
    %1405 = vmatpush.msra.mxu0 0.0
    %1406 = vmatpush.msra.mxu0 0.0
    %1407 = vmatpush.msra.mxu0 0.0
    %1408 = vmatpush.msra.mxu0 0.0
    %1409 = vmatpush.msra.mxu0 0.0
    %1410 = vmatpush.msra.mxu0 0.0
    %1411 = vmatpush.msra.mxu0 0.0
    %1412 = vmatpush.msra.mxu0 0.0
    %1413 = vmatpush.msra.mxu0 0.0
    %1414 = vmatpush.msra.mxu0 %v998
    %1415 = vmatmul.f32.gmra.mxu0 %v1397
    %v1416 = vpop.f32.mrf.mxu0
    %v1417 = vadd.f32 0.0, %v1416
    %1418 = vdwg.mxu0
    %v1421 = vsel %vm202, %v1388, 0
    %1423 = vmatpush.msra.mxu0 0.0
    %1424 = vmatpush.msra.mxu0 0.0
    %1425 = vmatpush.msra.mxu0 0.0
    %1426 = vmatpush.msra.mxu0 0.0
    %1427 = vmatpush.msra.mxu0 0.0
    %1428 = vmatpush.msra.mxu0 0.0
    %1429 = vmatpush.msra.mxu0 0.0
    %1430 = vmatpush.msra.mxu0 0.0
    %1431 = vmatpush.msra.mxu0 0.0
    %1432 = vmatpush.msra.mxu0 0.0
    %1433 = vmatpush.msra.mxu0 0.0
    %1434 = vmatpush.msra.mxu0 0.0
    %1435 = vmatpush.msra.mxu0 0.0
    %1436 = vmatpush.msra.mxu0 0.0
    %1437 = vmatpush.msra.mxu0 0.0
    %1438 = vmatpush.msra.mxu0 %v1000
    %1439 = vmatmul.f32.gmra.mxu0 %v1421
    %v1440 = vpop.f32.mrf.mxu0
    %v1441 = vadd.f32 0.0, %v1440
    %1442 = vdwg.mxu0
    %1443 = vrot.lane.b32.xlu0 %v998, 96
    %v1444 = vpop.permute.xlu0 %1443
    %v1447 = vsel %vm202, %v1389, 0
    %1449 = vmatpush.msra.mxu0 0.0
    %1450 = vmatpush.msra.mxu0 0.0
    %1451 = vmatpush.msra.mxu0 0.0
    %1452 = vmatpush.msra.mxu0 0.0
    %1453 = vmatpush.msra.mxu0 0.0
    %1454 = vmatpush.msra.mxu0 0.0
    %1455 = vmatpush.msra.mxu0 0.0
    %1456 = vmatpush.msra.mxu0 0.0
    %1457 = vmatpush.msra.mxu0 0.0
    %1458 = vmatpush.msra.mxu0 0.0
    %1459 = vmatpush.msra.mxu0 0.0
    %1460 = vmatpush.msra.mxu0 0.0
    %1461 = vmatpush.msra.mxu0 0.0
    %1462 = vmatpush.msra.mxu0 0.0
    %1463 = vmatpush.msra.mxu0 0.0
    %1464 = vmatpush.msra.mxu0 %v1444
    %1465 = vmatmul.f32.gmra.mxu0 %v1447
    %v1466 = vpop.f32.mrf.mxu0
    %v1467 = vadd.f32 0.0, %v1466
    %1468 = vdwg.mxu0
    %1469 = vrot.lane.b32.xlu0 %v1000, 96
    %v1470 = vpop.permute.xlu0 %1469
    %v1473 = vsel %vm202, %v1390, 0
    %1475 = vmatpush.msra.mxu0 0.0
    %1476 = vmatpush.msra.mxu0 0.0
    %1477 = vmatpush.msra.mxu0 0.0
    %1478 = vmatpush.msra.mxu0 0.0
    %1479 = vmatpush.msra.mxu0 0.0
    %1480 = vmatpush.msra.mxu0 0.0
    %1481 = vmatpush.msra.mxu0 0.0
    %1482 = vmatpush.msra.mxu0 0.0
    %1483 = vmatpush.msra.mxu0 0.0
    %1484 = vmatpush.msra.mxu0 0.0
    %1485 = vmatpush.msra.mxu0 0.0
    %1486 = vmatpush.msra.mxu0 0.0
    %1487 = vmatpush.msra.mxu0 0.0
    %1488 = vmatpush.msra.mxu0 0.0
    %1489 = vmatpush.msra.mxu0 0.0
    %1490 = vmatpush.msra.mxu0 %v1470
    %1491 = vmatmul.f32.gmra.mxu0 %v1473
    %v1492 = vpop.f32.mrf.mxu0
    %v1493 = vadd.f32 0.0, %v1492
    %1494 = vdwg.mxu0
    %1495 = vrot.lane.b32.xlu0 %v1002, 96
    %v1496 = vpop.permute.xlu0 %1495
    %v1499 = vsel %vm202, %v1391, 0
    %1501 = vmatpush.msra.mxu0 0.0
    %1502 = vmatpush.msra.mxu0 0.0
    %1503 = vmatpush.msra.mxu0 0.0
    %1504 = vmatpush.msra.mxu0 0.0
    %1505 = vmatpush.msra.mxu0 0.0
    %1506 = vmatpush.msra.mxu0 0.0
    %1507 = vmatpush.msra.mxu0 0.0
    %1508 = vmatpush.msra.mxu0 0.0
    %1509 = vmatpush.msra.mxu0 0.0
    %1510 = vmatpush.msra.mxu0 0.0
    %1511 = vmatpush.msra.mxu0 0.0
    %1512 = vmatpush.msra.mxu0 0.0
    %1513 = vmatpush.msra.mxu0 0.0
    %1514 = vmatpush.msra.mxu0 0.0
    %1515 = vmatpush.msra.mxu0 0.0
    %1516 = vmatpush.msra.mxu0 %v1496
    %1517 = vmatmul.f32.gmra.mxu0 %v1499
    %v1518 = vpop.f32.mrf.mxu0
    %v1519 = vadd.f32 0.0, %v1518
    %1520 = vdwg.mxu0
    %1521 = vrot.lane.b32.xlu0 %v1004, 96
    %v1522 = vpop.permute.xlu0 %1521
    %v1525 = vsel %vm202, %v1392, 0
    %1527 = vmatpush.msra.mxu0 0.0
    %1528 = vmatpush.msra.mxu0 0.0
    %1529 = vmatpush.msra.mxu0 0.0
    %1530 = vmatpush.msra.mxu0 0.0
    %1531 = vmatpush.msra.mxu0 0.0
    %1532 = vmatpush.msra.mxu0 0.0
    %1533 = vmatpush.msra.mxu0 0.0
    %1534 = vmatpush.msra.mxu0 0.0
    %1535 = vmatpush.msra.mxu0 0.0
    %1536 = vmatpush.msra.mxu0 0.0
    %1537 = vmatpush.msra.mxu0 0.0
    %1538 = vmatpush.msra.mxu0 0.0
    %1539 = vmatpush.msra.mxu0 0.0
    %1540 = vmatpush.msra.mxu0 0.0
    %1541 = vmatpush.msra.mxu0 0.0
    %1542 = vmatpush.msra.mxu0 %v1522
    %1543 = vmatmul.f32.gmra.mxu0 %v1525
    %v1544 = vpop.f32.mrf.mxu0
    %v1545 = vadd.f32 0.0, %v1544
    %1546 = vdwg.mxu0
    %1547 = vrot.lane.b32.xlu0 %v1008, 96
    %v1548 = vpop.permute.xlu0 %1547
    %v1551 = vsel %vm202, %v1393, 0
    %1553 = vmatpush.msra.mxu0 0.0
    %1554 = vmatpush.msra.mxu0 0.0
    %1555 = vmatpush.msra.mxu0 0.0
    %1556 = vmatpush.msra.mxu0 0.0
    %1557 = vmatpush.msra.mxu0 0.0
    %1558 = vmatpush.msra.mxu0 0.0
    %1559 = vmatpush.msra.mxu0 0.0
    %1560 = vmatpush.msra.mxu0 0.0
    %1561 = vmatpush.msra.mxu0 0.0
    %1562 = vmatpush.msra.mxu0 0.0
    %1563 = vmatpush.msra.mxu0 0.0
    %1564 = vmatpush.msra.mxu0 0.0
    %1565 = vmatpush.msra.mxu0 0.0
    %1566 = vmatpush.msra.mxu0 0.0
    %1567 = vmatpush.msra.mxu0 0.0
    %1568 = vmatpush.msra.mxu0 %v1548
    %1569 = vmatmul.f32.gmra.mxu0 %v1551
    %v1570 = vpop.f32.mrf.mxu0
    %v1571 = vadd.f32 0.0, %v1570
    %1572 = vdwg.mxu0
    %1573 = vrot.lane.b32.xlu0 %v1010, 96
    %v1574 = vpop.permute.xlu0 %1573
    %v1577 = vsel %vm202, %v1394, 0
    %1579 = vmatpush.msra.mxu0 0.0
    %1580 = vmatpush.msra.mxu0 0.0
    %1581 = vmatpush.msra.mxu0 0.0
    %1582 = vmatpush.msra.mxu0 0.0
    %1583 = vmatpush.msra.mxu0 0.0
    %1584 = vmatpush.msra.mxu0 0.0
    %1585 = vmatpush.msra.mxu0 0.0
    %1586 = vmatpush.msra.mxu0 0.0
    %1587 = vmatpush.msra.mxu0 0.0
    %1588 = vmatpush.msra.mxu0 0.0
    %1589 = vmatpush.msra.mxu0 0.0
    %1590 = vmatpush.msra.mxu0 0.0
    %1591 = vmatpush.msra.mxu0 0.0
    %1592 = vmatpush.msra.mxu0 0.0
    %1593 = vmatpush.msra.mxu0 0.0
    %1594 = vmatpush.msra.mxu0 %v1574
    %1595 = vmatmul.f32.gmra.mxu0 %v1577
    %v1596 = vpop.f32.mrf.mxu0
    %v1597 = vadd.f32 0.0, %v1596
    %1598 = vdwg.mxu0
    %v1599 = vadd.f32 %v1417, %v1467
    %v1600 = vadd.f32 %v1441, %v1493
    %v1601 = vadd.f32 %v1599, %v1519
    %v1602 = vadd.f32 %v1600, %v1545
    %v1603 = vadd.f32 %v1601, %v1571
    %v1604 = vadd.f32 %v1602, %v1597
    %v1605 = vadd.f32 %v816, %v1603
    %v1606 = vadd.f32 %v817, %v1604
    %v1607 = vld [vmem:[%s5 + $0x4] ss:$0 sm:$0xff]
    %v1608 = vadd.f32 %v1605, %v1607
    %v1609 = vadd.f32 %v1606, %v1607
    %v1610 = vld [vmem:[%s5 + $0x11] ss:$0 sm:$0xff]
    %v1611 = vld [vmem:[%s5 + $0x14] ss:$0 sm:$0xff]
    %v1612 = vsel %vm52, %v1608, 0.0
    %1613 = vadd.xlane.f32.xlu0 %v1612
    %v1614 = vpop.xlane.xlu0 %1613
    %v1615 = vsel %vm52, %v1609, 0.0
    %1616 = vadd.xlane.f32.xlu0 %v1615
    %v1617 = vpop.xlane.xlu0 %1616
    %v1618 = vmul.f32 %v1614, %v65
    %v1619 = vmul.f32 %v1617, %v65
    %v1620 = vsub.f32 %v1608, %v1618
    %v1621 = vsub.f32 %v1609, %v1619
    %v1622 = vmul.f32 %v1620, %v1620
    %v1623 = vmul.f32 %v1621, %v1621
    %v1624 = vsel %vm52, %v1622, 0.0
    %1625 = vadd.xlane.f32.xlu0 %v1624
    %v1626 = vpop.xlane.xlu0 %1625
    %v1627 = vsel %vm52, %v1623, 0.0
    %1628 = vadd.xlane.f32.xlu0 %v1627
    %v1629 = vpop.xlane.xlu0 %1628
    %v1630 = vmul.f32 %v1626, %v65
    %v1631 = vmul.f32 %v1629, %v65
    %v1632 = vadd.f32 %v1630, 1e-05
    %v1633 = vadd.f32 %v1631, 1e-05
    %v1634 = vrsqrt.pop %v1632
    %v1635 = vmul.f32 %v1634, %v1632
    %v1636 = vmul.f32 %v1635, %v1634
    %v1637 = vmul.f32 0.5, %v1636
    %v1638 = vsub.f32 1.5, %v1637
    %v1639 = vmul.f32 %v1634, %v1638
    %vm1640 = vweird.f32 %v1632
    %vm1641 = vweird.f32 %v1634
    %vm1642 = vmor %vm1640, %vm1641
    %v1643 = vsel %vm1642, %v1634, %v1639
    %v1644 = vrsqrt.pop %v1633
    %v1645 = vmul.f32 %v1644, %v1633
    %v1646 = vmul.f32 %v1645, %v1644
    %v1647 = vmul.f32 0.5, %v1646
    %v1648 = vsub.f32 1.5, %v1647
    %v1649 = vmul.f32 %v1644, %v1648
    %vm1650 = vweird.f32 %v1633
    %vm1651 = vweird.f32 %v1644
    %vm1652 = vmor %vm1650, %vm1651
    %v1653 = vsel %vm1652, %v1644, %v1649
    %v1654 = vmul.f32 %v1620, %v1643
    %v1655 = vmul.f32 %v1621, %v1653
    %v1656 = vmul.f32 %v1654, %v1610
    %v1657 = vmul.f32 %v1655, %v1610
    %v1658 = vadd.f32 %v1656, %v1611
    %v1659 = vadd.f32 %v1657, %v1611
    %v1660 = vld [vmem:[#allocation2 + $0x28] sm:$0xff]
    %v1661 = vld [vmem:[#allocation2 + $0x58] sm:$0xff]
    %v1662 = vld [vmem:[#allocation2 + $0x88] sm:$0xff]
    %v1663 = vld [vmem:[#allocation2 + $0xb8] sm:$0xff]
    %v1664 = vld [vmem:[%s5 + $0x5] ss:$0 sm:$0xff]
    %v1666 = vsel %vm52, %v1658, 0
    %v1669 = vsel %vm52, %v1659, 0
    %1671 = vmatpush.msra.mxu0 0.0
    %1672 = vmatpush.msra.mxu0 0.0
    %1673 = vmatpush.msra.mxu0 0.0
    %1674 = vmatpush.msra.mxu0 0.0
    %1675 = vmatpush.msra.mxu0 0.0
    %1676 = vmatpush.msra.mxu0 0.0
    %1677 = vmatpush.msra.mxu0 0.0
    %1678 = vmatpush.msra.mxu0 0.0
    %1679 = vmatpush.msra.mxu0 0.0
    %1680 = vmatpush.msra.mxu0 0.0
    %1681 = vmatpush.msra.mxu0 0.0
    %1682 = vmatpush.msra.mxu0 0.0
    %1683 = vmatpush.msra.mxu0 %v1663
    %1684 = vmatpush.msra.mxu0 %v1662
    %1685 = vmatpush.msra.mxu0 %v1661
    %1686 = vmatpush.msra.mxu0 %v1660
    %1687 = vmatmul.f32.gmra.mxu0 %v1666
    %v1688 = vpop.f32.mrf.mxu0
    %v1689 = vadd.f32 %v1664, %v1688
    %1690 = vmatmul.f32.gmra.mxu0 %v1669
    %v1691 = vpop.f32.mrf.mxu0
    %v1692 = vadd.f32 %v1664, %v1691
    %1693 = vdwg.mxu0
    %v1694 = vmax.f32 %v1689, 0.0
    %v1695 = vmax.f32 %v1692, 0.0
    %v1696 = vld [vmem:[%s4] sm:$0xff]
    %v1697 = vld [vmem:[%s4 + $0x8] sm:$0xff]
    %v1698 = vld [vmem:[%s4 + $0x10] sm:$0xff]
    %v1699 = vld [vmem:[%s4 + $0x18] sm:$0xff]
    %v1700 = vld [vmem:[%s4 + $0x20] sm:$0xff]
    %v1701 = vld [vmem:[%s4 + $0x28] sm:$0xff]
    %v1702 = vld [vmem:[%s4 + $0x30] sm:$0xff]
    %v1703 = vld [vmem:[%s4 + $0x38] sm:$0xff]
    %vm1704 = vcmask 523264
    %v1706 = vsel %vm1704, %v1694, 0
    %v1709 = vsel %vm1704, %v1695, 0
    %1711 = vmatpush.msra.mxu0 0.0
    %1712 = vmatpush.msra.mxu0 0.0
    %1713 = vmatpush.msra.mxu0 0.0
    %1714 = vmatpush.msra.mxu0 0.0
    %1715 = vmatpush.msra.mxu0 0.0
    %1716 = vmatpush.msra.mxu0 0.0
    %1717 = vmatpush.msra.mxu0 0.0
    %1718 = vmatpush.msra.mxu0 0.0
    %1719 = vmatpush.msra.mxu0 %v1703
    %1720 = vmatpush.msra.mxu0 %v1702
    %1721 = vmatpush.msra.mxu0 %v1701
    %1722 = vmatpush.msra.mxu0 %v1700
    %1723 = vmatpush.msra.mxu0 %v1699
    %1724 = vmatpush.msra.mxu0 %v1698
    %1725 = vmatpush.msra.mxu0 %v1697
    %1726 = vmatpush.msra.mxu0 %v1696
    %1727 = vmatmul.f32.gmra.mxu0 %v1706
    %v1728 = vpop.f32.mrf.mxu0
    %v1729 = vadd.f32 0.0, %v1728
    %1730 = vmatmul.f32.gmra.mxu0 %v1709
    %v1731 = vpop.f32.mrf.mxu0
    %v1732 = vadd.f32 0.0, %v1731
    %1733 = vdwg.mxu0
    %v1734 = vadd.f32 %v1608, %v1729
    %v1735 = vadd.f32 %v1609, %v1732
    %v1736 = vld [vmem:[%s5 + $0x6] ss:$0 sm:$0xff]
    %v1737 = vadd.f32 %v1734, %v1736
    %v1738 = vadd.f32 %v1735, %v1736
    %v1739 = vld [vmem:[%s5 + $0x24] ss:$0 sm:$0xff]
    %v1740 = vld [vmem:[%s5 + $0x27] ss:$0 sm:$0xff]
    %v1741 = vsel %vm52, %v1737, 0.0
    %1742 = vadd.xlane.f32.xlu0 %v1741
    %v1743 = vpop.xlane.xlu0 %1742
    %v1744 = vsel %vm52, %v1738, 0.0
    %1745 = vadd.xlane.f32.xlu0 %v1744
    %v1746 = vpop.xlane.xlu0 %1745
    %v1747 = vmul.f32 %v1743, %v65
    %v1748 = vmul.f32 %v1746, %v65
    %v1749 = vsub.f32 %v1737, %v1747
    %v1750 = vsub.f32 %v1738, %v1748
    %v1751 = vmul.f32 %v1749, %v1749
    %v1752 = vmul.f32 %v1750, %v1750
    %v1753 = vsel %vm52, %v1751, 0.0
    %1754 = vadd.xlane.f32.xlu0 %v1753
    %v1755 = vpop.xlane.xlu0 %1754
    %v1756 = vsel %vm52, %v1752, 0.0
    %1757 = vadd.xlane.f32.xlu0 %v1756
    %v1758 = vpop.xlane.xlu0 %1757
    %v1759 = vmul.f32 %v1755, %v65
    %v1760 = vmul.f32 %v1758, %v65
    %v1761 = vadd.f32 %v1759, 1e-05
    %v1762 = vadd.f32 %v1760, 1e-05
    %v1763 = vrsqrt.pop %v1761
    %v1764 = vmul.f32 %v1763, %v1761
    %v1765 = vmul.f32 %v1764, %v1763
    %v1766 = vmul.f32 0.5, %v1765
    %v1767 = vsub.f32 1.5, %v1766
    %v1768 = vmul.f32 %v1763, %v1767
    %vm1769 = vweird.f32 %v1761
    %vm1770 = vweird.f32 %v1763
    %vm1771 = vmor %vm1769, %vm1770
    %v1772 = vsel %vm1771, %v1763, %v1768
    %v1773 = vrsqrt.pop %v1762
    %v1774 = vmul.f32 %v1773, %v1762
    %v1775 = vmul.f32 %v1774, %v1773
    %v1776 = vmul.f32 0.5, %v1775
    %v1777 = vsub.f32 1.5, %v1776
    %v1778 = vmul.f32 %v1773, %v1777
    %vm1779 = vweird.f32 %v1762
    %vm1780 = vweird.f32 %v1773
    %vm1781 = vmor %vm1779, %vm1780
    %v1782 = vsel %vm1781, %v1773, %v1778
    %v1783 = vmul.f32 %v1749, %v1772
    %v1784 = vmul.f32 %v1750, %v1782
    %v1785 = vmul.f32 %v1783, %v1739
    %v1786 = vmul.f32 %v1784, %v1739
    %v1787 = vadd.f32 %v1785, %v1740
    %v1788 = vadd.f32 %v1786, %v1740
    %v1789 = vld [vmem:[#allocation2 + $0xc0] sm:$0xff]
    %v1790 = vld [vmem:[#allocation2 + $0xc8] sm:$0xff]
    %v1791 = vld [vmem:[#allocation2 + $0xf0] sm:$0xff]
    %v1792 = vld [vmem:[#allocation2 + $0xf8] sm:$0xff]
    %v1793 = vld [vmem:[#allocation2 + $0x120] sm:$0xff]
    %v1794 = vld [vmem:[#allocation2 + $0x128] sm:$0xff]
    %v1795 = vld [vmem:[#allocation2 + $0x150] sm:$0xff]
    %v1796 = vld [vmem:[#allocation2 + $0x158] sm:$0xff]
    %s1797 = scalar_lea.vmem %s5, 21
    %v1798 = vld [vmem:[%s1797] ss:$8 sm:$0x3]
    %v1800 = vperm.slane %v1798, 0
    %v1801 = vperm.slane %v1798, 1
    %v1805 = vsel %vm52, %v1787, 0
    %v1808 = vsel %vm52, %v1788, 0
    %1810 = vmatpush.msra.mxu0 0.0
    %1811 = vmatpush.msra.mxu0 0.0
    %1812 = vmatpush.msra.mxu0 0.0
    %1813 = vmatpush.msra.mxu0 0.0
    %1814 = vmatpush.msra.mxu0 0.0
    %1815 = vmatpush.msra.mxu0 0.0
    %1816 = vmatpush.msra.mxu0 0.0
    %1817 = vmatpush.msra.mxu0 0.0
    %1818 = vmatpush.msra.mxu0 0.0
    %1819 = vmatpush.msra.mxu0 0.0
    %1820 = vmatpush.msra.mxu0 0.0
    %1821 = vmatpush.msra.mxu0 0.0
    %1822 = vmatpush.msra.mxu0 %v1795
    %1823 = vmatpush.msra.mxu0 %v1793
    %1824 = vmatpush.msra.mxu0 %v1791
    %1825 = vmatpush.msra.mxu0 %v1789
    %1826 = vmatmul.f32.gmra.mxu0 %v1805
    %v1827 = vpop.f32.mrf.mxu0
    %v1828 = vadd.f32 %v1800, %v1827
    %1829 = vmatmul.f32.gmra.mxu0 %v1808
    %v1830 = vpop.f32.mrf.mxu0
    %v1831 = vadd.f32 %v1800, %v1830
    %1832 = vdwg.mxu0
    %1833 = vmatpush.msra.mxu0 0.0
    %1834 = vmatpush.msra.mxu0 0.0
    %1835 = vmatpush.msra.mxu0 0.0
    %1836 = vmatpush.msra.mxu0 0.0
    %1837 = vmatpush.msra.mxu0 0.0
    %1838 = vmatpush.msra.mxu0 0.0
    %1839 = vmatpush.msra.mxu0 0.0
    %1840 = vmatpush.msra.mxu0 0.0
    %1841 = vmatpush.msra.mxu0 0.0
    %1842 = vmatpush.msra.mxu0 0.0
    %1843 = vmatpush.msra.mxu0 0.0
    %1844 = vmatpush.msra.mxu0 0.0
    %1845 = vmatpush.msra.mxu0 %v1796
    %1846 = vmatpush.msra.mxu0 %v1794
    %1847 = vmatpush.msra.mxu0 %v1792
    %1848 = vmatpush.msra.mxu0 %v1790
    %1849 = vmatmul.f32.gmra.mxu0 %v1805
    %v1850 = vpop.f32.mrf.mxu0
    %v1851 = vadd.f32 %v1801, %v1850
    %1852 = vmatmul.f32.gmra.mxu0 %v1808
    %v1853 = vpop.f32.mrf.mxu0
    %v1854 = vadd.f32 %v1801, %v1853
    %1855 = vdwg.mxu0
    %1858 = vrot.lane.b32.xlu0 %v1828, 120
    %v1859 = vpop.permute.xlu0 %1858
    %1860 = vrot.lane.b32.xlu0 %v1831, 120
    %v1861 = vpop.permute.xlu0 %1860
    %1862 = vrot.lane.b32.xlu0 %v1828, 112
    %v1863 = vpop.permute.xlu0 %1862
    %1864 = vrot.lane.b32.xlu0 %v1831, 112
    %v1865 = vpop.permute.xlu0 %1864
    %1866 = vrot.lane.b32.xlu0 %v1828, 104
    %v1867 = vpop.permute.xlu0 %1866
    %1868 = vrot.lane.b32.xlu0 %v1831, 104
    %v1869 = vpop.permute.xlu0 %1868
    %1870 = vrot.lane.b32.xlu0 %v1828, 96
    %v1871 = vpop.permute.xlu0 %1870
    %1872 = vrot.lane.b32.xlu0 %v1831, 96
    %v1873 = vpop.permute.xlu0 %1872
    %1876 = vrot.lane.b32.xlu0 %v1851, 64
    %v1877 = vpop.permute.xlu0 %1876
    %1878 = vrot.lane.b32.xlu0 %v1854, 64
    %v1879 = vpop.permute.xlu0 %1878
    %1880 = vrot.lane.b32.xlu0 %v1851, 32
    %v1881 = vpop.permute.xlu0 %1880
    %1882 = vrot.lane.b32.xlu0 %v1854, 32
    %v1883 = vpop.permute.xlu0 %1882
    %v1884 = vsel %vm202, %v1828, 0
    %v1886 = vsel %vm202, %v1871, 0
    %1888 = vmatpush.xpose.msra.mxu0 0.0
    %1889 = vmatpush.xpose.msra.mxu0 0.0
    %1890 = vmatpush.xpose.msra.mxu0 0.0
    %1891 = vmatpush.xpose.msra.mxu0 0.0
    %1892 = vmatpush.xpose.msra.mxu0 0.0
    %1893 = vmatpush.xpose.msra.mxu0 0.0
    %1894 = vmatpush.xpose.msra.mxu0 0.0
    %1895 = vmatpush.xpose.msra.mxu0 0.0
    %1896 = vmatpush.xpose.msra.mxu0 0.0
    %1897 = vmatpush.xpose.msra.mxu0 0.0
    %1898 = vmatpush.xpose.msra.mxu0 0.0
    %1899 = vmatpush.xpose.msra.mxu0 0.0
    %1900 = vmatpush.xpose.msra.mxu0 0.0
    %1901 = vmatpush.xpose.msra.mxu0 0.0
    %1902 = vmatpush.xpose.msra.mxu0 0.0
    %1903 = vmatpush.xpose.msra.mxu0 %v1886
    %1904 = vmatmul.f32.gmra.mxu0 %v1884
    %v1905 = vpop.f32.mrf.mxu0
    %v1906 = vadd.f32 %v48, %v1905
    %1907 = vdwg.mxu0
    %v1908 = vsel %vm202, %v1831, 0
    %v1910 = vsel %vm202, %v1873, 0
    %1912 = vmatpush.xpose.msra.mxu0 0.0
    %1913 = vmatpush.xpose.msra.mxu0 0.0
    %1914 = vmatpush.xpose.msra.mxu0 0.0
    %1915 = vmatpush.xpose.msra.mxu0 0.0
    %1916 = vmatpush.xpose.msra.mxu0 0.0
    %1917 = vmatpush.xpose.msra.mxu0 0.0
    %1918 = vmatpush.xpose.msra.mxu0 0.0
    %1919 = vmatpush.xpose.msra.mxu0 0.0
    %1920 = vmatpush.xpose.msra.mxu0 0.0
    %1921 = vmatpush.xpose.msra.mxu0 0.0
    %1922 = vmatpush.xpose.msra.mxu0 0.0
    %1923 = vmatpush.xpose.msra.mxu0 0.0
    %1924 = vmatpush.xpose.msra.mxu0 0.0
    %1925 = vmatpush.xpose.msra.mxu0 0.0
    %1926 = vmatpush.xpose.msra.mxu0 0.0
    %1927 = vmatpush.xpose.msra.mxu0 %v1910
    %1928 = vmatmul.f32.gmra.mxu0 %v1908
    %v1929 = vpop.f32.mrf.mxu0
    %v1930 = vadd.f32 %v49, %v1929
    %1931 = vdwg.mxu0
    %1932 = vrot.lane.b32.xlu0 %v1859, 96
    %v1933 = vpop.permute.xlu0 %1932
    %v1934 = vsel %vm202, %v1859, 0
    %v1936 = vsel %vm202, %v1933, 0
    %1938 = vmatpush.xpose.msra.mxu0 0.0
    %1939 = vmatpush.xpose.msra.mxu0 0.0
    %1940 = vmatpush.xpose.msra.mxu0 0.0
    %1941 = vmatpush.xpose.msra.mxu0 0.0
    %1942 = vmatpush.xpose.msra.mxu0 0.0
    %1943 = vmatpush.xpose.msra.mxu0 0.0
    %1944 = vmatpush.xpose.msra.mxu0 0.0
    %1945 = vmatpush.xpose.msra.mxu0 0.0
    %1946 = vmatpush.xpose.msra.mxu0 0.0
    %1947 = vmatpush.xpose.msra.mxu0 0.0
    %1948 = vmatpush.xpose.msra.mxu0 0.0
    %1949 = vmatpush.xpose.msra.mxu0 0.0
    %1950 = vmatpush.xpose.msra.mxu0 0.0
    %1951 = vmatpush.xpose.msra.mxu0 0.0
    %1952 = vmatpush.xpose.msra.mxu0 0.0
    %1953 = vmatpush.xpose.msra.mxu0 %v1936
    %1954 = vmatmul.f32.gmra.mxu0 %v1934
    %v1955 = vpop.f32.mrf.mxu0
    %v1956 = vadd.f32 %v48, %v1955
    %1957 = vdwg.mxu0
    %1958 = vrot.lane.b32.xlu0 %v1861, 96
    %v1959 = vpop.permute.xlu0 %1958
    %v1960 = vsel %vm202, %v1861, 0
    %v1962 = vsel %vm202, %v1959, 0
    %1964 = vmatpush.xpose.msra.mxu0 0.0
    %1965 = vmatpush.xpose.msra.mxu0 0.0
    %1966 = vmatpush.xpose.msra.mxu0 0.0
    %1967 = vmatpush.xpose.msra.mxu0 0.0
    %1968 = vmatpush.xpose.msra.mxu0 0.0
    %1969 = vmatpush.xpose.msra.mxu0 0.0
    %1970 = vmatpush.xpose.msra.mxu0 0.0
    %1971 = vmatpush.xpose.msra.mxu0 0.0
    %1972 = vmatpush.xpose.msra.mxu0 0.0
    %1973 = vmatpush.xpose.msra.mxu0 0.0
    %1974 = vmatpush.xpose.msra.mxu0 0.0
    %1975 = vmatpush.xpose.msra.mxu0 0.0
    %1976 = vmatpush.xpose.msra.mxu0 0.0
    %1977 = vmatpush.xpose.msra.mxu0 0.0
    %1978 = vmatpush.xpose.msra.mxu0 0.0
    %1979 = vmatpush.xpose.msra.mxu0 %v1962
    %1980 = vmatmul.f32.gmra.mxu0 %v1960
    %v1981 = vpop.f32.mrf.mxu0
    %v1982 = vadd.f32 %v49, %v1981
    %1983 = vdwg.mxu0
    %1984 = vrot.lane.b32.xlu0 %v1863, 96
    %v1985 = vpop.permute.xlu0 %1984
    %v1986 = vsel %vm202, %v1863, 0
    %v1988 = vsel %vm202, %v1985, 0
    %1990 = vmatpush.xpose.msra.mxu0 0.0
    %1991 = vmatpush.xpose.msra.mxu0 0.0
    %1992 = vmatpush.xpose.msra.mxu0 0.0
    %1993 = vmatpush.xpose.msra.mxu0 0.0
    %1994 = vmatpush.xpose.msra.mxu0 0.0
    %1995 = vmatpush.xpose.msra.mxu0 0.0
    %1996 = vmatpush.xpose.msra.mxu0 0.0
    %1997 = vmatpush.xpose.msra.mxu0 0.0
    %1998 = vmatpush.xpose.msra.mxu0 0.0
    %1999 = vmatpush.xpose.msra.mxu0 0.0
    %2000 = vmatpush.xpose.msra.mxu0 0.0
    %2001 = vmatpush.xpose.msra.mxu0 0.0
    %2002 = vmatpush.xpose.msra.mxu0 0.0
    %2003 = vmatpush.xpose.msra.mxu0 0.0
    %2004 = vmatpush.xpose.msra.mxu0 0.0
    %2005 = vmatpush.xpose.msra.mxu0 %v1988
    %2006 = vmatmul.f32.gmra.mxu0 %v1986
    %v2007 = vpop.f32.mrf.mxu0
    %v2008 = vadd.f32 %v48, %v2007
    %2009 = vdwg.mxu0
    %2010 = vrot.lane.b32.xlu0 %v1865, 96
    %v2011 = vpop.permute.xlu0 %2010
    %v2012 = vsel %vm202, %v1865, 0
    %v2014 = vsel %vm202, %v2011, 0
    %2016 = vmatpush.xpose.msra.mxu0 0.0
    %2017 = vmatpush.xpose.msra.mxu0 0.0
    %2018 = vmatpush.xpose.msra.mxu0 0.0
    %2019 = vmatpush.xpose.msra.mxu0 0.0
    %2020 = vmatpush.xpose.msra.mxu0 0.0
    %2021 = vmatpush.xpose.msra.mxu0 0.0
    %2022 = vmatpush.xpose.msra.mxu0 0.0
    %2023 = vmatpush.xpose.msra.mxu0 0.0
    %2024 = vmatpush.xpose.msra.mxu0 0.0
    %2025 = vmatpush.xpose.msra.mxu0 0.0
    %2026 = vmatpush.xpose.msra.mxu0 0.0
    %2027 = vmatpush.xpose.msra.mxu0 0.0
    %2028 = vmatpush.xpose.msra.mxu0 0.0
    %2029 = vmatpush.xpose.msra.mxu0 0.0
    %2030 = vmatpush.xpose.msra.mxu0 0.0
    %2031 = vmatpush.xpose.msra.mxu0 %v2014
    %2032 = vmatmul.f32.gmra.mxu0 %v2012
    %v2033 = vpop.f32.mrf.mxu0
    %v2034 = vadd.f32 %v49, %v2033
    %2035 = vdwg.mxu0
    %2036 = vrot.lane.b32.xlu0 %v1867, 96
    %v2037 = vpop.permute.xlu0 %2036
    %v2038 = vsel %vm202, %v1867, 0
    %v2040 = vsel %vm202, %v2037, 0
    %2042 = vmatpush.xpose.msra.mxu0 0.0
    %2043 = vmatpush.xpose.msra.mxu0 0.0
    %2044 = vmatpush.xpose.msra.mxu0 0.0
    %2045 = vmatpush.xpose.msra.mxu0 0.0
    %2046 = vmatpush.xpose.msra.mxu0 0.0
    %2047 = vmatpush.xpose.msra.mxu0 0.0
    %2048 = vmatpush.xpose.msra.mxu0 0.0
    %2049 = vmatpush.xpose.msra.mxu0 0.0
    %2050 = vmatpush.xpose.msra.mxu0 0.0
    %2051 = vmatpush.xpose.msra.mxu0 0.0
    %2052 = vmatpush.xpose.msra.mxu0 0.0
    %2053 = vmatpush.xpose.msra.mxu0 0.0
    %2054 = vmatpush.xpose.msra.mxu0 0.0
    %2055 = vmatpush.xpose.msra.mxu0 0.0
    %2056 = vmatpush.xpose.msra.mxu0 0.0
    %2057 = vmatpush.xpose.msra.mxu0 %v2040
    %2058 = vmatmul.f32.gmra.mxu0 %v2038
    %v2059 = vpop.f32.mrf.mxu0
    %v2060 = vadd.f32 %v48, %v2059
    %2061 = vdwg.mxu0
    %2062 = vrot.lane.b32.xlu0 %v1869, 96
    %v2063 = vpop.permute.xlu0 %2062
    %v2064 = vsel %vm202, %v1869, 0
    %v2066 = vsel %vm202, %v2063, 0
    %2068 = vmatpush.xpose.msra.mxu0 0.0
    %2069 = vmatpush.xpose.msra.mxu0 0.0
    %2070 = vmatpush.xpose.msra.mxu0 0.0
    %2071 = vmatpush.xpose.msra.mxu0 0.0
    %2072 = vmatpush.xpose.msra.mxu0 0.0
    %2073 = vmatpush.xpose.msra.mxu0 0.0
    %2074 = vmatpush.xpose.msra.mxu0 0.0
    %2075 = vmatpush.xpose.msra.mxu0 0.0
    %2076 = vmatpush.xpose.msra.mxu0 0.0
    %2077 = vmatpush.xpose.msra.mxu0 0.0
    %2078 = vmatpush.xpose.msra.mxu0 0.0
    %2079 = vmatpush.xpose.msra.mxu0 0.0
    %2080 = vmatpush.xpose.msra.mxu0 0.0
    %2081 = vmatpush.xpose.msra.mxu0 0.0
    %2082 = vmatpush.xpose.msra.mxu0 0.0
    %2083 = vmatpush.xpose.msra.mxu0 %v2066
    %2084 = vmatmul.f32.gmra.mxu0 %v2064
    %v2085 = vpop.f32.mrf.mxu0
    %v2086 = vadd.f32 %v49, %v2085
    %2087 = vdwg.mxu0
    %v2088 = vsel %vm202, %v1906, -inf
    %2089 = vmax.xlane.f32.xlu0 %v2088
    %v2090 = vpop.xlane.xlu0 %2089
    %v2091 = vsel %vm202, %v1930, -inf
    %2092 = vmax.xlane.f32.xlu0 %v2091
    %v2093 = vpop.xlane.xlu0 %2092
    %v2094 = vsel %vm202, %v1956, -inf
    %2095 = vmax.xlane.f32.xlu0 %v2094
    %v2096 = vpop.xlane.xlu0 %2095
    %v2097 = vsel %vm202, %v1982, -inf
    %2098 = vmax.xlane.f32.xlu0 %v2097
    %v2099 = vpop.xlane.xlu0 %2098
    %v2100 = vsel %vm202, %v2008, -inf
    %2101 = vmax.xlane.f32.xlu0 %v2100
    %v2102 = vpop.xlane.xlu0 %2101
    %v2103 = vsel %vm202, %v2034, -inf
    %2104 = vmax.xlane.f32.xlu0 %v2103
    %v2105 = vpop.xlane.xlu0 %2104
    %v2106 = vsel %vm202, %v2060, -inf
    %2107 = vmax.xlane.f32.xlu0 %v2106
    %v2108 = vpop.xlane.xlu0 %2107
    %v2109 = vsel %vm202, %v2086, -inf
    %2110 = vmax.xlane.f32.xlu0 %v2109
    %v2111 = vpop.xlane.xlu0 %2110
    %v2112 = vsub.f32 %v1906, %v2090
    %v2113 = vsub.f32 %v1930, %v2093
    %v2114 = vsub.f32 %v1956, %v2096
    %v2115 = vsub.f32 %v1982, %v2099
    %v2116 = vsub.f32 %v2008, %v2102
    %v2117 = vsub.f32 %v2034, %v2105
    %v2118 = vsub.f32 %v2060, %v2108
    %v2119 = vsub.f32 %v2086, %v2111
    %v2120 = vmul.f32 %v2112, 1.442695
    %v2121 = vpow.pop %v2120
    %v2122 = vmul.f32 %v2113, 1.442695
    %v2123 = vpow.pop %v2122
    %v2124 = vmul.f32 %v2114, 1.442695
    %v2125 = vpow.pop %v2124
    %v2126 = vmul.f32 %v2115, 1.442695
    %v2127 = vpow.pop %v2126
    %v2128 = vmul.f32 %v2116, 1.442695
    %v2129 = vpow.pop %v2128
    %v2130 = vmul.f32 %v2117, 1.442695
    %v2131 = vpow.pop %v2130
    %v2132 = vmul.f32 %v2118, 1.442695
    %v2133 = vpow.pop %v2132
    %v2134 = vmul.f32 %v2119, 1.442695
    %v2135 = vpow.pop %v2134
    %v2136 = vsel %vm202, %v2121, 0.0
    %2137 = vadd.xlane.f32.xlu0 %v2136
    %v2138 = vpop.xlane.xlu0 %2137
    %v2139 = vsel %vm202, %v2123, 0.0
    %2140 = vadd.xlane.f32.xlu0 %v2139
    %v2141 = vpop.xlane.xlu0 %2140
    %v2142 = vsel %vm202, %v2125, 0.0
    %2143 = vadd.xlane.f32.xlu0 %v2142
    %v2144 = vpop.xlane.xlu0 %2143
    %v2145 = vsel %vm202, %v2127, 0.0
    %2146 = vadd.xlane.f32.xlu0 %v2145
    %v2147 = vpop.xlane.xlu0 %2146
    %v2148 = vsel %vm202, %v2129, 0.0
    %2149 = vadd.xlane.f32.xlu0 %v2148
    %v2150 = vpop.xlane.xlu0 %2149
    %v2151 = vsel %vm202, %v2131, 0.0
    %2152 = vadd.xlane.f32.xlu0 %v2151
    %v2153 = vpop.xlane.xlu0 %2152
    %v2154 = vsel %vm202, %v2133, 0.0
    %2155 = vadd.xlane.f32.xlu0 %v2154
    %v2156 = vpop.xlane.xlu0 %2155
    %v2157 = vsel %vm202, %v2135, 0.0
    %2158 = vadd.xlane.f32.xlu0 %v2157
    %v2159 = vpop.xlane.xlu0 %2158
    %v2160 = vrcp.pop %v2138
    %v2161 = vmul.f32 %v2138, %v2160
    %v2162 = vsub.f32 1.0, %v2161
    %v2163 = vmul.f32 %v2160, %v2162
    %v2164 = vadd.f32 %v2160, %v2163
    %vm2165 = vweird.f32 %v2138
    %vm2166 = vweird.f32 %v2160
    %vm2167 = vmor %vm2165, %vm2166
    %v2168 = vsel %vm2167, %v2160, %v2164
    %v2169 = vand.u32 2147483647, %v2138
    %vm2170 = vcmp.eq.f32.partialorder %v2169, 8.507059e+37
    %v2171 = vand.u32 %v2138, 2147483648
    %v2172 = vor.u32 1.1754944e-38, %v2171
    %v2173 = vsel %vm2170, %v2172, %v2168
    %v2174 = vrcp.pop %v2141
    %v2175 = vmul.f32 %v2141, %v2174
    %v2176 = vsub.f32 1.0, %v2175
    %v2177 = vmul.f32 %v2174, %v2176
    %v2178 = vadd.f32 %v2174, %v2177
    %vm2179 = vweird.f32 %v2141
    %vm2180 = vweird.f32 %v2174
    %vm2181 = vmor %vm2179, %vm2180
    %v2182 = vsel %vm2181, %v2174, %v2178
    %v2183 = vand.u32 2147483647, %v2141
    %vm2184 = vcmp.eq.f32.partialorder %v2183, 8.507059e+37
    %v2185 = vand.u32 %v2141, 2147483648
    %v2186 = vor.u32 1.1754944e-38, %v2185
    %v2187 = vsel %vm2184, %v2186, %v2182
    %v2188 = vrcp.pop %v2144
    %v2189 = vmul.f32 %v2144, %v2188
    %v2190 = vsub.f32 1.0, %v2189
    %v2191 = vmul.f32 %v2188, %v2190
    %v2192 = vadd.f32 %v2188, %v2191
    %vm2193 = vweird.f32 %v2144
    %vm2194 = vweird.f32 %v2188
    %vm2195 = vmor %vm2193, %vm2194
    %v2196 = vsel %vm2195, %v2188, %v2192
    %v2197 = vand.u32 2147483647, %v2144
    %vm2198 = vcmp.eq.f32.partialorder %v2197, 8.507059e+37
    %v2199 = vand.u32 %v2144, 2147483648
    %v2200 = vor.u32 1.1754944e-38, %v2199
    %v2201 = vsel %vm2198, %v2200, %v2196
    %v2202 = vrcp.pop %v2147
    %v2203 = vmul.f32 %v2147, %v2202
    %v2204 = vsub.f32 1.0, %v2203
    %v2205 = vmul.f32 %v2202, %v2204
    %v2206 = vadd.f32 %v2202, %v2205
    %vm2207 = vweird.f32 %v2147
    %vm2208 = vweird.f32 %v2202
    %vm2209 = vmor %vm2207, %vm2208
    %v2210 = vsel %vm2209, %v2202, %v2206
    %v2211 = vand.u32 2147483647, %v2147
    %vm2212 = vcmp.eq.f32.partialorder %v2211, 8.507059e+37
    %v2213 = vand.u32 %v2147, 2147483648
    %v2214 = vor.u32 1.1754944e-38, %v2213
    %v2215 = vsel %vm2212, %v2214, %v2210
    %v2216 = vrcp.pop %v2150
    %v2217 = vmul.f32 %v2150, %v2216
    %v2218 = vsub.f32 1.0, %v2217
    %v2219 = vmul.f32 %v2216, %v2218
    %v2220 = vadd.f32 %v2216, %v2219
    %vm2221 = vweird.f32 %v2150
    %vm2222 = vweird.f32 %v2216
    %vm2223 = vmor %vm2221, %vm2222
    %v2224 = vsel %vm2223, %v2216, %v2220
    %v2225 = vand.u32 2147483647, %v2150
    %vm2226 = vcmp.eq.f32.partialorder %v2225, 8.507059e+37
    %v2227 = vand.u32 %v2150, 2147483648
    %v2228 = vor.u32 1.1754944e-38, %v2227
    %v2229 = vsel %vm2226, %v2228, %v2224
    %v2230 = vrcp.pop %v2153
    %v2231 = vmul.f32 %v2153, %v2230
    %v2232 = vsub.f32 1.0, %v2231
    %v2233 = vmul.f32 %v2230, %v2232
    %v2234 = vadd.f32 %v2230, %v2233
    %vm2235 = vweird.f32 %v2153
    %vm2236 = vweird.f32 %v2230
    %vm2237 = vmor %vm2235, %vm2236
    %v2238 = vsel %vm2237, %v2230, %v2234
    %v2239 = vand.u32 2147483647, %v2153
    %vm2240 = vcmp.eq.f32.partialorder %v2239, 8.507059e+37
    %v2241 = vand.u32 %v2153, 2147483648
    %v2242 = vor.u32 1.1754944e-38, %v2241
    %v2243 = vsel %vm2240, %v2242, %v2238
    %v2244 = vrcp.pop %v2156
    %v2245 = vmul.f32 %v2156, %v2244
    %v2246 = vsub.f32 1.0, %v2245
    %v2247 = vmul.f32 %v2244, %v2246
    %v2248 = vadd.f32 %v2244, %v2247
    %vm2249 = vweird.f32 %v2156
    %vm2250 = vweird.f32 %v2244
    %vm2251 = vmor %vm2249, %vm2250
    %v2252 = vsel %vm2251, %v2244, %v2248
    %v2253 = vand.u32 2147483647, %v2156
    %vm2254 = vcmp.eq.f32.partialorder %v2253, 8.507059e+37
    %v2255 = vand.u32 %v2156, 2147483648
    %v2256 = vor.u32 1.1754944e-38, %v2255
    %v2257 = vsel %vm2254, %v2256, %v2252
    %v2258 = vrcp.pop %v2159
    %v2259 = vmul.f32 %v2159, %v2258
    %v2260 = vsub.f32 1.0, %v2259
    %v2261 = vmul.f32 %v2258, %v2260
    %v2262 = vadd.f32 %v2258, %v2261
    %vm2263 = vweird.f32 %v2159
    %vm2264 = vweird.f32 %v2258
    %vm2265 = vmor %vm2263, %vm2264
    %v2266 = vsel %vm2265, %v2258, %v2262
    %v2267 = vand.u32 2147483647, %v2159
    %vm2268 = vcmp.eq.f32.partialorder %v2267, 8.507059e+37
    %v2269 = vand.u32 %v2159, 2147483648
    %v2270 = vor.u32 1.1754944e-38, %v2269
    %v2271 = vsel %vm2268, %v2270, %v2266
    %v2272 = vmul.f32 %v2121, %v2173
    %v2273 = vmul.f32 %v2123, %v2187
    %v2274 = vmul.f32 %v2125, %v2201
    %v2275 = vmul.f32 %v2127, %v2215
    %v2276 = vmul.f32 %v2129, %v2229
    %v2277 = vmul.f32 %v2131, %v2243
    %v2278 = vmul.f32 %v2133, %v2257
    %v2279 = vmul.f32 %v2135, %v2271
    %2280 = vrot.lane.b32.xlu0 %v1828, 64
    %v2281 = vpop.permute.xlu0 %2280
    %v2284 = vsel %vm202, %v2272, 0
    %2286 = vmatpush.msra.mxu0 0.0
    %2287 = vmatpush.msra.mxu0 0.0
    %2288 = vmatpush.msra.mxu0 0.0
    %2289 = vmatpush.msra.mxu0 0.0
    %2290 = vmatpush.msra.mxu0 0.0
    %2291 = vmatpush.msra.mxu0 0.0
    %2292 = vmatpush.msra.mxu0 0.0
    %2293 = vmatpush.msra.mxu0 0.0
    %2294 = vmatpush.msra.mxu0 0.0
    %2295 = vmatpush.msra.mxu0 0.0
    %2296 = vmatpush.msra.mxu0 0.0
    %2297 = vmatpush.msra.mxu0 0.0
    %2298 = vmatpush.msra.mxu0 0.0
    %2299 = vmatpush.msra.mxu0 0.0
    %2300 = vmatpush.msra.mxu0 0.0
    %2301 = vmatpush.msra.mxu0 %v2281
    %2302 = vmatmul.f32.gmra.mxu0 %v2284
    %v2303 = vpop.f32.mrf.mxu0
    %v2304 = vadd.f32 0.0, %v2303
    %2305 = vdwg.mxu0
    %2306 = vrot.lane.b32.xlu0 %v1831, 64
    %v2307 = vpop.permute.xlu0 %2306
    %v2310 = vsel %vm202, %v2273, 0
    %2312 = vmatpush.msra.mxu0 0.0
    %2313 = vmatpush.msra.mxu0 0.0
    %2314 = vmatpush.msra.mxu0 0.0
    %2315 = vmatpush.msra.mxu0 0.0
    %2316 = vmatpush.msra.mxu0 0.0
    %2317 = vmatpush.msra.mxu0 0.0
    %2318 = vmatpush.msra.mxu0 0.0
    %2319 = vmatpush.msra.mxu0 0.0
    %2320 = vmatpush.msra.mxu0 0.0
    %2321 = vmatpush.msra.mxu0 0.0
    %2322 = vmatpush.msra.mxu0 0.0
    %2323 = vmatpush.msra.mxu0 0.0
    %2324 = vmatpush.msra.mxu0 0.0
    %2325 = vmatpush.msra.mxu0 0.0
    %2326 = vmatpush.msra.mxu0 0.0
    %2327 = vmatpush.msra.mxu0 %v2307
    %2328 = vmatmul.f32.gmra.mxu0 %v2310
    %v2329 = vpop.f32.mrf.mxu0
    %v2330 = vadd.f32 0.0, %v2329
    %2331 = vdwg.mxu0
    %2332 = vrot.lane.b32.xlu0 %v1871, 64
    %v2333 = vpop.permute.xlu0 %2332
    %v2336 = vsel %vm202, %v2274, 0
    %2338 = vmatpush.msra.mxu0 0.0
    %2339 = vmatpush.msra.mxu0 0.0
    %2340 = vmatpush.msra.mxu0 0.0
    %2341 = vmatpush.msra.mxu0 0.0
    %2342 = vmatpush.msra.mxu0 0.0
    %2343 = vmatpush.msra.mxu0 0.0
    %2344 = vmatpush.msra.mxu0 0.0
    %2345 = vmatpush.msra.mxu0 0.0
    %2346 = vmatpush.msra.mxu0 0.0
    %2347 = vmatpush.msra.mxu0 0.0
    %2348 = vmatpush.msra.mxu0 0.0
    %2349 = vmatpush.msra.mxu0 0.0
    %2350 = vmatpush.msra.mxu0 0.0
    %2351 = vmatpush.msra.mxu0 0.0
    %2352 = vmatpush.msra.mxu0 0.0
    %2353 = vmatpush.msra.mxu0 %v2333
    %2354 = vmatmul.f32.gmra.mxu0 %v2336
    %v2355 = vpop.f32.mrf.mxu0
    %v2356 = vadd.f32 0.0, %v2355
    %2357 = vdwg.mxu0
    %2358 = vrot.lane.b32.xlu0 %v1873, 64
    %v2359 = vpop.permute.xlu0 %2358
    %v2362 = vsel %vm202, %v2275, 0
    %2364 = vmatpush.msra.mxu0 0.0
    %2365 = vmatpush.msra.mxu0 0.0
    %2366 = vmatpush.msra.mxu0 0.0
    %2367 = vmatpush.msra.mxu0 0.0
    %2368 = vmatpush.msra.mxu0 0.0
    %2369 = vmatpush.msra.mxu0 0.0
    %2370 = vmatpush.msra.mxu0 0.0
    %2371 = vmatpush.msra.mxu0 0.0
    %2372 = vmatpush.msra.mxu0 0.0
    %2373 = vmatpush.msra.mxu0 0.0
    %2374 = vmatpush.msra.mxu0 0.0
    %2375 = vmatpush.msra.mxu0 0.0
    %2376 = vmatpush.msra.mxu0 0.0
    %2377 = vmatpush.msra.mxu0 0.0
    %2378 = vmatpush.msra.mxu0 0.0
    %2379 = vmatpush.msra.mxu0 %v2359
    %2380 = vmatmul.f32.gmra.mxu0 %v2362
    %v2381 = vpop.f32.mrf.mxu0
    %v2382 = vadd.f32 0.0, %v2381
    %2383 = vdwg.mxu0
    %2384 = vrot.lane.b32.xlu0 %v1877, 64
    %v2385 = vpop.permute.xlu0 %2384
    %v2388 = vsel %vm202, %v2276, 0
    %2390 = vmatpush.msra.mxu0 0.0
    %2391 = vmatpush.msra.mxu0 0.0
    %2392 = vmatpush.msra.mxu0 0.0
    %2393 = vmatpush.msra.mxu0 0.0
    %2394 = vmatpush.msra.mxu0 0.0
    %2395 = vmatpush.msra.mxu0 0.0
    %2396 = vmatpush.msra.mxu0 0.0
    %2397 = vmatpush.msra.mxu0 0.0
    %2398 = vmatpush.msra.mxu0 0.0
    %2399 = vmatpush.msra.mxu0 0.0
    %2400 = vmatpush.msra.mxu0 0.0
    %2401 = vmatpush.msra.mxu0 0.0
    %2402 = vmatpush.msra.mxu0 0.0
    %2403 = vmatpush.msra.mxu0 0.0
    %2404 = vmatpush.msra.mxu0 0.0
    %2405 = vmatpush.msra.mxu0 %v2385
    %2406 = vmatmul.f32.gmra.mxu0 %v2388
    %v2407 = vpop.f32.mrf.mxu0
    %v2408 = vadd.f32 0.0, %v2407
    %2409 = vdwg.mxu0
    %2410 = vrot.lane.b32.xlu0 %v1879, 64
    %v2411 = vpop.permute.xlu0 %2410
    %v2414 = vsel %vm202, %v2277, 0
    %2416 = vmatpush.msra.mxu0 0.0
    %2417 = vmatpush.msra.mxu0 0.0
    %2418 = vmatpush.msra.mxu0 0.0
    %2419 = vmatpush.msra.mxu0 0.0
    %2420 = vmatpush.msra.mxu0 0.0
    %2421 = vmatpush.msra.mxu0 0.0
    %2422 = vmatpush.msra.mxu0 0.0
    %2423 = vmatpush.msra.mxu0 0.0
    %2424 = vmatpush.msra.mxu0 0.0
    %2425 = vmatpush.msra.mxu0 0.0
    %2426 = vmatpush.msra.mxu0 0.0
    %2427 = vmatpush.msra.mxu0 0.0
    %2428 = vmatpush.msra.mxu0 0.0
    %2429 = vmatpush.msra.mxu0 0.0
    %2430 = vmatpush.msra.mxu0 0.0
    %2431 = vmatpush.msra.mxu0 %v2411
    %2432 = vmatmul.f32.gmra.mxu0 %v2414
    %v2433 = vpop.f32.mrf.mxu0
    %v2434 = vadd.f32 0.0, %v2433
    %2435 = vdwg.mxu0
    %2436 = vrot.lane.b32.xlu0 %v1881, 64
    %v2437 = vpop.permute.xlu0 %2436
    %v2440 = vsel %vm202, %v2278, 0
    %2442 = vmatpush.msra.mxu0 0.0
    %2443 = vmatpush.msra.mxu0 0.0
    %2444 = vmatpush.msra.mxu0 0.0
    %2445 = vmatpush.msra.mxu0 0.0
    %2446 = vmatpush.msra.mxu0 0.0
    %2447 = vmatpush.msra.mxu0 0.0
    %2448 = vmatpush.msra.mxu0 0.0
    %2449 = vmatpush.msra.mxu0 0.0
    %2450 = vmatpush.msra.mxu0 0.0
    %2451 = vmatpush.msra.mxu0 0.0
    %2452 = vmatpush.msra.mxu0 0.0
    %2453 = vmatpush.msra.mxu0 0.0
    %2454 = vmatpush.msra.mxu0 0.0
    %2455 = vmatpush.msra.mxu0 0.0
    %2456 = vmatpush.msra.mxu0 0.0
    %2457 = vmatpush.msra.mxu0 %v2437
    %2458 = vmatmul.f32.gmra.mxu0 %v2440
    %v2459 = vpop.f32.mrf.mxu0
    %v2460 = vadd.f32 0.0, %v2459
    %2461 = vdwg.mxu0
    %2462 = vrot.lane.b32.xlu0 %v1883, 64
    %v2463 = vpop.permute.xlu0 %2462
    %v2466 = vsel %vm202, %v2279, 0
    %2468 = vmatpush.msra.mxu0 0.0
    %2469 = vmatpush.msra.mxu0 0.0
    %2470 = vmatpush.msra.mxu0 0.0
    %2471 = vmatpush.msra.mxu0 0.0
    %2472 = vmatpush.msra.mxu0 0.0
    %2473 = vmatpush.msra.mxu0 0.0
    %2474 = vmatpush.msra.mxu0 0.0
    %2475 = vmatpush.msra.mxu0 0.0
    %2476 = vmatpush.msra.mxu0 0.0
    %2477 = vmatpush.msra.mxu0 0.0
    %2478 = vmatpush.msra.mxu0 0.0
    %2479 = vmatpush.msra.mxu0 0.0
    %2480 = vmatpush.msra.mxu0 0.0
    %2481 = vmatpush.msra.mxu0 0.0
    %2482 = vmatpush.msra.mxu0 0.0
    %2483 = vmatpush.msra.mxu0 %v2463
    %2484 = vmatmul.f32.gmra.mxu0 %v2466
    %v2485 = vpop.f32.mrf.mxu0
    %v2486 = vadd.f32 0.0, %v2485
    %2487 = vdwg.mxu0
    %v2488 = vadd.f32 %v2304, %v2356
    %v2489 = vadd.f32 %v2330, %v2382
    %v2490 = vadd.f32 %v2488, %v2408
    %v2491 = vadd.f32 %v2489, %v2434
    %v2492 = vadd.f32 %v2490, %v2460
    %v2493 = vadd.f32 %v2491, %v2486
    %v2494 = vadd.f32 %v1737, %v2492
    %v2495 = vadd.f32 %v1738, %v2493
    %v2496 = vld [vmem:[%s5 + $0x16] ss:$0 sm:$0xff]
    %v2497 = vadd.f32 %v2494, %v2496
    %v2498 = vadd.f32 %v2495, %v2496
    %v2499 = vld [vmem:[%s5 + $0x25] ss:$0 sm:$0xff]
    %v2500 = vld [vmem:[%s5 + $0x30] ss:$0 sm:$0xff]
    %v2501 = vsel %vm52, %v2497, 0.0
    %2502 = vadd.xlane.f32.xlu0 %v2501
    %v2503 = vpop.xlane.xlu0 %2502
    %v2504 = vsel %vm52, %v2498, 0.0
    %2505 = vadd.xlane.f32.xlu0 %v2504
    %v2506 = vpop.xlane.xlu0 %2505
    %v2507 = vmul.f32 %v2503, %v65
    %v2508 = vmul.f32 %v2506, %v65
    %v2509 = vsub.f32 %v2497, %v2507
    %v2510 = vsub.f32 %v2498, %v2508
    %v2511 = vmul.f32 %v2509, %v2509
    %v2512 = vmul.f32 %v2510, %v2510
    %v2513 = vsel %vm52, %v2511, 0.0
    %2514 = vadd.xlane.f32.xlu0 %v2513
    %v2515 = vpop.xlane.xlu0 %2514
    %v2516 = vsel %vm52, %v2512, 0.0
    %2517 = vadd.xlane.f32.xlu0 %v2516
    %v2518 = vpop.xlane.xlu0 %2517
    %v2519 = vmul.f32 %v2515, %v65
    %v2520 = vmul.f32 %v2518, %v65
    %v2521 = vadd.f32 %v2519, 1e-05
    %v2522 = vadd.f32 %v2520, 1e-05
    %v2523 = vrsqrt.pop %v2521
    %v2524 = vmul.f32 %v2523, %v2521
    %v2525 = vmul.f32 %v2524, %v2523
    %v2526 = vmul.f32 0.5, %v2525
    %v2527 = vsub.f32 1.5, %v2526
    %v2528 = vmul.f32 %v2523, %v2527
    %vm2529 = vweird.f32 %v2521
    %vm2530 = vweird.f32 %v2523
    %vm2531 = vmor %vm2529, %vm2530
    %v2532 = vsel %vm2531, %v2523, %v2528
    %v2533 = vrsqrt.pop %v2522
    %v2534 = vmul.f32 %v2533, %v2522
    %v2535 = vmul.f32 %v2534, %v2533
    %v2536 = vmul.f32 0.5, %v2535
    %v2537 = vsub.f32 1.5, %v2536
    %v2538 = vmul.f32 %v2533, %v2537
    %vm2539 = vweird.f32 %v2522
    %vm2540 = vweird.f32 %v2533
    %vm2541 = vmor %vm2539, %vm2540
    %v2542 = vsel %vm2541, %v2533, %v2538
    %v2543 = vmul.f32 %v2509, %v2532
    %v2544 = vmul.f32 %v2510, %v2542
    %v2545 = vmul.f32 %v2543, %v2499
    %v2546 = vmul.f32 %v2544, %v2499
    %v2547 = vadd.f32 %v2545, %v2500
    %v2548 = vadd.f32 %v2546, %v2500
    %v2549 = vld [vmem:[#allocation2 + $0xd0] sm:$0xff]
    %v2550 = vld [vmem:[#allocation2 + $0x100] sm:$0xff]
    %v2551 = vld [vmem:[#allocation2 + $0x130] sm:$0xff]
    %v2552 = vld [vmem:[#allocation2 + $0x160] sm:$0xff]
    %v2553 = vld [vmem:[%s5 + $0x17] ss:$0 sm:$0xff]
    %v2555 = vsel %vm52, %v2547, 0
    %v2558 = vsel %vm52, %v2548, 0
    %2560 = vmatpush.msra.mxu0 0.0
    %2561 = vmatpush.msra.mxu0 0.0
    %2562 = vmatpush.msra.mxu0 0.0
    %2563 = vmatpush.msra.mxu0 0.0
    %2564 = vmatpush.msra.mxu0 0.0
    %2565 = vmatpush.msra.mxu0 0.0
    %2566 = vmatpush.msra.mxu0 0.0
    %2567 = vmatpush.msra.mxu0 0.0
    %2568 = vmatpush.msra.mxu0 0.0
    %2569 = vmatpush.msra.mxu0 0.0
    %2570 = vmatpush.msra.mxu0 0.0
    %2571 = vmatpush.msra.mxu0 0.0
    %2572 = vmatpush.msra.mxu0 %v2552
    %2573 = vmatpush.msra.mxu0 %v2551
    %2574 = vmatpush.msra.mxu0 %v2550
    %2575 = vmatpush.msra.mxu0 %v2549
    %2576 = vmatmul.f32.gmra.mxu0 %v2555
    %v2577 = vpop.f32.mrf.mxu0
    %v2578 = vadd.f32 %v2553, %v2577
    %2579 = vmatmul.f32.gmra.mxu0 %v2558
    %v2580 = vpop.f32.mrf.mxu0
    %v2581 = vadd.f32 %v2553, %v2580
    %2582 = vdwg.mxu0
    %v2583 = vld [vmem:[#allocation2 + $0xd8] sm:$0xff]
    %v2584 = vld [vmem:[#allocation2 + $0xe0] sm:$0xff]
    %v2585 = vld [vmem:[#allocation2 + $0x108] sm:$0xff]
    %v2586 = vld [vmem:[#allocation2 + $0x110] sm:$0xff]
    %v2587 = vld [vmem:[#allocation2 + $0x138] sm:$0xff]
    %v2588 = vld [vmem:[#allocation2 + $0x140] sm:$0xff]
    %v2589 = vld [vmem:[#allocation2 + $0x168] sm:$0xff]
    %v2590 = vld [vmem:[#allocation2 + $0x170] sm:$0xff]
    %s2591 = scalar_lea.vmem %s5, 32
    %v2592 = vld [vmem:[%s2591] ss:$8 sm:$0x3]
    %v2594 = vperm.slane %v2592, 0
    %v2595 = vperm.slane %v2592, 1
    %2598 = vmatpush.msra.mxu0 0.0
    %2599 = vmatpush.msra.mxu0 0.0
    %2600 = vmatpush.msra.mxu0 0.0
    %2601 = vmatpush.msra.mxu0 0.0
    %2602 = vmatpush.msra.mxu0 0.0
    %2603 = vmatpush.msra.mxu0 0.0
    %2604 = vmatpush.msra.mxu0 0.0
    %2605 = vmatpush.msra.mxu0 0.0
    %2606 = vmatpush.msra.mxu0 0.0
    %2607 = vmatpush.msra.mxu0 0.0
    %2608 = vmatpush.msra.mxu0 0.0
    %2609 = vmatpush.msra.mxu0 0.0
    %2610 = vmatpush.msra.mxu0 %v2589
    %2611 = vmatpush.msra.mxu0 %v2587
    %2612 = vmatpush.msra.mxu0 %v2585
    %2613 = vmatpush.msra.mxu0 %v2583
    %2614 = vmatmul.f32.gmra.mxu0 %v918
    %v2615 = vpop.f32.mrf.mxu0
    %v2616 = vadd.f32 %v2594, %v2615
    %2617 = vmatmul.f32.gmra.mxu0 %v921
    %v2618 = vpop.f32.mrf.mxu0
    %v2619 = vadd.f32 %v2594, %v2618
    %2620 = vdwg.mxu0
    %2621 = vmatpush.msra.mxu0 0.0
    %2622 = vmatpush.msra.mxu0 0.0
    %2623 = vmatpush.msra.mxu0 0.0
    %2624 = vmatpush.msra.mxu0 0.0
    %2625 = vmatpush.msra.mxu0 0.0
    %2626 = vmatpush.msra.mxu0 0.0
    %2627 = vmatpush.msra.mxu0 0.0
    %2628 = vmatpush.msra.mxu0 0.0
    %2629 = vmatpush.msra.mxu0 0.0
    %2630 = vmatpush.msra.mxu0 0.0
    %2631 = vmatpush.msra.mxu0 0.0
    %2632 = vmatpush.msra.mxu0 0.0
    %2633 = vmatpush.msra.mxu0 %v2590
    %2634 = vmatpush.msra.mxu0 %v2588
    %2635 = vmatpush.msra.mxu0 %v2586
    %2636 = vmatpush.msra.mxu0 %v2584
    %2637 = vmatmul.f32.gmra.mxu0 %v918
    %v2638 = vpop.f32.mrf.mxu0
    %v2639 = vadd.f32 %v2595, %v2638
    %2640 = vmatmul.f32.gmra.mxu0 %v921
    %v2641 = vpop.f32.mrf.mxu0
    %v2642 = vadd.f32 %v2595, %v2641
    %2643 = vdwg.mxu0
    %2646 = vrot.lane.b32.xlu0 %v2578, 120
    %v2647 = vpop.permute.xlu0 %2646
    %2648 = vrot.lane.b32.xlu0 %v2581, 120
    %v2649 = vpop.permute.xlu0 %2648
    %2650 = vrot.lane.b32.xlu0 %v2578, 112
    %v2651 = vpop.permute.xlu0 %2650
    %2652 = vrot.lane.b32.xlu0 %v2581, 112
    %v2653 = vpop.permute.xlu0 %2652
    %2654 = vrot.lane.b32.xlu0 %v2578, 104
    %v2655 = vpop.permute.xlu0 %2654
    %2656 = vrot.lane.b32.xlu0 %v2581, 104
    %v2657 = vpop.permute.xlu0 %2656
    %2660 = vrot.lane.b32.xlu0 %v2616, 120
    %v2661 = vpop.permute.xlu0 %2660
    %2662 = vrot.lane.b32.xlu0 %v2619, 120
    %v2663 = vpop.permute.xlu0 %2662
    %2664 = vrot.lane.b32.xlu0 %v2616, 112
    %v2665 = vpop.permute.xlu0 %2664
    %2666 = vrot.lane.b32.xlu0 %v2619, 112
    %v2667 = vpop.permute.xlu0 %2666
    %2668 = vrot.lane.b32.xlu0 %v2616, 104
    %v2669 = vpop.permute.xlu0 %2668
    %2670 = vrot.lane.b32.xlu0 %v2619, 104
    %v2671 = vpop.permute.xlu0 %2670
    %2672 = vrot.lane.b32.xlu0 %v2616, 96
    %v2673 = vpop.permute.xlu0 %2672
    %2674 = vrot.lane.b32.xlu0 %v2619, 96
    %v2675 = vpop.permute.xlu0 %2674
    %2676 = vrot.lane.b32.xlu0 %v2616, 64
    %v2677 = vpop.permute.xlu0 %2676
    %2678 = vrot.lane.b32.xlu0 %v2619, 64
    %v2679 = vpop.permute.xlu0 %2678
    %2682 = vrot.lane.b32.xlu0 %v2639, 32
    %v2683 = vpop.permute.xlu0 %2682
    %2684 = vrot.lane.b32.xlu0 %v2642, 32
    %v2685 = vpop.permute.xlu0 %2684
    %v2686 = vsel %vm202, %v2578, 0
    %v2688 = vsel %vm202, %v2616, 0
    %2690 = vmatpush.xpose.msra.mxu0 0.0
    %2691 = vmatpush.xpose.msra.mxu0 0.0
    %2692 = vmatpush.xpose.msra.mxu0 0.0
    %2693 = vmatpush.xpose.msra.mxu0 0.0
    %2694 = vmatpush.xpose.msra.mxu0 0.0
    %2695 = vmatpush.xpose.msra.mxu0 0.0
    %2696 = vmatpush.xpose.msra.mxu0 0.0
    %2697 = vmatpush.xpose.msra.mxu0 0.0
    %2698 = vmatpush.xpose.msra.mxu0 0.0
    %2699 = vmatpush.xpose.msra.mxu0 0.0
    %2700 = vmatpush.xpose.msra.mxu0 0.0
    %2701 = vmatpush.xpose.msra.mxu0 0.0
    %2702 = vmatpush.xpose.msra.mxu0 0.0
    %2703 = vmatpush.xpose.msra.mxu0 0.0
    %2704 = vmatpush.xpose.msra.mxu0 0.0
    %2705 = vmatpush.xpose.msra.mxu0 %v2688
    %2706 = vmatmul.f32.gmra.mxu0 %v2686
    %v2707 = vpop.f32.mrf.mxu0
    %v2708 = vadd.f32 0.0, %v2707
    %2709 = vdwg.mxu0
    %v2710 = vsel %vm202, %v2581, 0
    %v2712 = vsel %vm202, %v2619, 0
    %2714 = vmatpush.xpose.msra.mxu0 0.0
    %2715 = vmatpush.xpose.msra.mxu0 0.0
    %2716 = vmatpush.xpose.msra.mxu0 0.0
    %2717 = vmatpush.xpose.msra.mxu0 0.0
    %2718 = vmatpush.xpose.msra.mxu0 0.0
    %2719 = vmatpush.xpose.msra.mxu0 0.0
    %2720 = vmatpush.xpose.msra.mxu0 0.0
    %2721 = vmatpush.xpose.msra.mxu0 0.0
    %2722 = vmatpush.xpose.msra.mxu0 0.0
    %2723 = vmatpush.xpose.msra.mxu0 0.0
    %2724 = vmatpush.xpose.msra.mxu0 0.0
    %2725 = vmatpush.xpose.msra.mxu0 0.0
    %2726 = vmatpush.xpose.msra.mxu0 0.0
    %2727 = vmatpush.xpose.msra.mxu0 0.0
    %2728 = vmatpush.xpose.msra.mxu0 0.0
    %2729 = vmatpush.xpose.msra.mxu0 %v2712
    %2730 = vmatmul.f32.gmra.mxu0 %v2710
    %v2731 = vpop.f32.mrf.mxu0
    %v2732 = vadd.f32 0.0, %v2731
    %2733 = vdwg.mxu0
    %v2734 = vsel %vm202, %v2647, 0
    %v2736 = vsel %vm202, %v2661, 0
    %2738 = vmatpush.xpose.msra.mxu0 0.0
    %2739 = vmatpush.xpose.msra.mxu0 0.0
    %2740 = vmatpush.xpose.msra.mxu0 0.0
    %2741 = vmatpush.xpose.msra.mxu0 0.0
    %2742 = vmatpush.xpose.msra.mxu0 0.0
    %2743 = vmatpush.xpose.msra.mxu0 0.0
    %2744 = vmatpush.xpose.msra.mxu0 0.0
    %2745 = vmatpush.xpose.msra.mxu0 0.0
    %2746 = vmatpush.xpose.msra.mxu0 0.0
    %2747 = vmatpush.xpose.msra.mxu0 0.0
    %2748 = vmatpush.xpose.msra.mxu0 0.0
    %2749 = vmatpush.xpose.msra.mxu0 0.0
    %2750 = vmatpush.xpose.msra.mxu0 0.0
    %2751 = vmatpush.xpose.msra.mxu0 0.0
    %2752 = vmatpush.xpose.msra.mxu0 0.0
    %2753 = vmatpush.xpose.msra.mxu0 %v2736
    %2754 = vmatmul.f32.gmra.mxu0 %v2734
    %v2755 = vpop.f32.mrf.mxu0
    %v2756 = vadd.f32 0.0, %v2755
    %2757 = vdwg.mxu0
    %v2758 = vsel %vm202, %v2649, 0
    %v2760 = vsel %vm202, %v2663, 0
    %2762 = vmatpush.xpose.msra.mxu0 0.0
    %2763 = vmatpush.xpose.msra.mxu0 0.0
    %2764 = vmatpush.xpose.msra.mxu0 0.0
    %2765 = vmatpush.xpose.msra.mxu0 0.0
    %2766 = vmatpush.xpose.msra.mxu0 0.0
    %2767 = vmatpush.xpose.msra.mxu0 0.0
    %2768 = vmatpush.xpose.msra.mxu0 0.0
    %2769 = vmatpush.xpose.msra.mxu0 0.0
    %2770 = vmatpush.xpose.msra.mxu0 0.0
    %2771 = vmatpush.xpose.msra.mxu0 0.0
    %2772 = vmatpush.xpose.msra.mxu0 0.0
    %2773 = vmatpush.xpose.msra.mxu0 0.0
    %2774 = vmatpush.xpose.msra.mxu0 0.0
    %2775 = vmatpush.xpose.msra.mxu0 0.0
    %2776 = vmatpush.xpose.msra.mxu0 0.0
    %2777 = vmatpush.xpose.msra.mxu0 %v2760
    %2778 = vmatmul.f32.gmra.mxu0 %v2758
    %v2779 = vpop.f32.mrf.mxu0
    %v2780 = vadd.f32 0.0, %v2779
    %2781 = vdwg.mxu0
    %v2782 = vsel %vm202, %v2651, 0
    %v2784 = vsel %vm202, %v2665, 0
    %2786 = vmatpush.xpose.msra.mxu0 0.0
    %2787 = vmatpush.xpose.msra.mxu0 0.0
    %2788 = vmatpush.xpose.msra.mxu0 0.0
    %2789 = vmatpush.xpose.msra.mxu0 0.0
    %2790 = vmatpush.xpose.msra.mxu0 0.0
    %2791 = vmatpush.xpose.msra.mxu0 0.0
    %2792 = vmatpush.xpose.msra.mxu0 0.0
    %2793 = vmatpush.xpose.msra.mxu0 0.0
    %2794 = vmatpush.xpose.msra.mxu0 0.0
    %2795 = vmatpush.xpose.msra.mxu0 0.0
    %2796 = vmatpush.xpose.msra.mxu0 0.0
    %2797 = vmatpush.xpose.msra.mxu0 0.0
    %2798 = vmatpush.xpose.msra.mxu0 0.0
    %2799 = vmatpush.xpose.msra.mxu0 0.0
    %2800 = vmatpush.xpose.msra.mxu0 0.0
    %2801 = vmatpush.xpose.msra.mxu0 %v2784
    %2802 = vmatmul.f32.gmra.mxu0 %v2782
    %v2803 = vpop.f32.mrf.mxu0
    %v2804 = vadd.f32 0.0, %v2803
    %2805 = vdwg.mxu0
    %v2806 = vsel %vm202, %v2653, 0
    %v2808 = vsel %vm202, %v2667, 0
    %2810 = vmatpush.xpose.msra.mxu0 0.0
    %2811 = vmatpush.xpose.msra.mxu0 0.0
    %2812 = vmatpush.xpose.msra.mxu0 0.0
    %2813 = vmatpush.xpose.msra.mxu0 0.0
    %2814 = vmatpush.xpose.msra.mxu0 0.0
    %2815 = vmatpush.xpose.msra.mxu0 0.0
    %2816 = vmatpush.xpose.msra.mxu0 0.0
    %2817 = vmatpush.xpose.msra.mxu0 0.0
    %2818 = vmatpush.xpose.msra.mxu0 0.0
    %2819 = vmatpush.xpose.msra.mxu0 0.0
    %2820 = vmatpush.xpose.msra.mxu0 0.0
    %2821 = vmatpush.xpose.msra.mxu0 0.0
    %2822 = vmatpush.xpose.msra.mxu0 0.0
    %2823 = vmatpush.xpose.msra.mxu0 0.0
    %2824 = vmatpush.xpose.msra.mxu0 0.0
    %2825 = vmatpush.xpose.msra.mxu0 %v2808
    %2826 = vmatmul.f32.gmra.mxu0 %v2806
    %v2827 = vpop.f32.mrf.mxu0
    %v2828 = vadd.f32 0.0, %v2827
    %2829 = vdwg.mxu0
    %v2830 = vsel %vm202, %v2655, 0
    %v2832 = vsel %vm202, %v2669, 0
    %2834 = vmatpush.xpose.msra.mxu0 0.0
    %2835 = vmatpush.xpose.msra.mxu0 0.0
    %2836 = vmatpush.xpose.msra.mxu0 0.0
    %2837 = vmatpush.xpose.msra.mxu0 0.0
    %2838 = vmatpush.xpose.msra.mxu0 0.0
    %2839 = vmatpush.xpose.msra.mxu0 0.0
    %2840 = vmatpush.xpose.msra.mxu0 0.0
    %2841 = vmatpush.xpose.msra.mxu0 0.0
    %2842 = vmatpush.xpose.msra.mxu0 0.0
    %2843 = vmatpush.xpose.msra.mxu0 0.0
    %2844 = vmatpush.xpose.msra.mxu0 0.0
    %2845 = vmatpush.xpose.msra.mxu0 0.0
    %2846 = vmatpush.xpose.msra.mxu0 0.0
    %2847 = vmatpush.xpose.msra.mxu0 0.0
    %2848 = vmatpush.xpose.msra.mxu0 0.0
    %2849 = vmatpush.xpose.msra.mxu0 %v2832
    %2850 = vmatmul.f32.gmra.mxu0 %v2830
    %v2851 = vpop.f32.mrf.mxu0
    %v2852 = vadd.f32 0.0, %v2851
    %2853 = vdwg.mxu0
    %v2854 = vsel %vm202, %v2657, 0
    %v2856 = vsel %vm202, %v2671, 0
    %2858 = vmatpush.xpose.msra.mxu0 0.0
    %2859 = vmatpush.xpose.msra.mxu0 0.0
    %2860 = vmatpush.xpose.msra.mxu0 0.0
    %2861 = vmatpush.xpose.msra.mxu0 0.0
    %2862 = vmatpush.xpose.msra.mxu0 0.0
    %2863 = vmatpush.xpose.msra.mxu0 0.0
    %2864 = vmatpush.xpose.msra.mxu0 0.0
    %2865 = vmatpush.xpose.msra.mxu0 0.0
    %2866 = vmatpush.xpose.msra.mxu0 0.0
    %2867 = vmatpush.xpose.msra.mxu0 0.0
    %2868 = vmatpush.xpose.msra.mxu0 0.0
    %2869 = vmatpush.xpose.msra.mxu0 0.0
    %2870 = vmatpush.xpose.msra.mxu0 0.0
    %2871 = vmatpush.xpose.msra.mxu0 0.0
    %2872 = vmatpush.xpose.msra.mxu0 0.0
    %2873 = vmatpush.xpose.msra.mxu0 %v2856
    %2874 = vmatmul.f32.gmra.mxu0 %v2854
    %v2875 = vpop.f32.mrf.mxu0
    %v2876 = vadd.f32 0.0, %v2875
    %2877 = vdwg.mxu0
    %v2878 = vsel %vm202, %v2708, -inf
    %2879 = vmax.xlane.f32.xlu0 %v2878
    %v2880 = vpop.xlane.xlu0 %2879
    %v2881 = vsel %vm202, %v2732, -inf
    %2882 = vmax.xlane.f32.xlu0 %v2881
    %v2883 = vpop.xlane.xlu0 %2882
    %v2884 = vsel %vm202, %v2756, -inf
    %2885 = vmax.xlane.f32.xlu0 %v2884
    %v2886 = vpop.xlane.xlu0 %2885
    %v2887 = vsel %vm202, %v2780, -inf
    %2888 = vmax.xlane.f32.xlu0 %v2887
    %v2889 = vpop.xlane.xlu0 %2888
    %v2890 = vsel %vm202, %v2804, -inf
    %2891 = vmax.xlane.f32.xlu0 %v2890
    %v2892 = vpop.xlane.xlu0 %2891
    %v2893 = vsel %vm202, %v2828, -inf
    %2894 = vmax.xlane.f32.xlu0 %v2893
    %v2895 = vpop.xlane.xlu0 %2894
    %v2896 = vsel %vm202, %v2852, -inf
    %2897 = vmax.xlane.f32.xlu0 %v2896
    %v2898 = vpop.xlane.xlu0 %2897
    %v2899 = vsel %vm202, %v2876, -inf
    %2900 = vmax.xlane.f32.xlu0 %v2899
    %v2901 = vpop.xlane.xlu0 %2900
    %v2902 = vsub.f32 %v2708, %v2880
    %v2903 = vsub.f32 %v2732, %v2883
    %v2904 = vsub.f32 %v2756, %v2886
    %v2905 = vsub.f32 %v2780, %v2889
    %v2906 = vsub.f32 %v2804, %v2892
    %v2907 = vsub.f32 %v2828, %v2895
    %v2908 = vsub.f32 %v2852, %v2898
    %v2909 = vsub.f32 %v2876, %v2901
    %v2910 = vmul.f32 %v2902, 1.442695
    %v2911 = vpow.pop %v2910
    %v2912 = vmul.f32 %v2903, 1.442695
    %v2913 = vpow.pop %v2912
    %v2914 = vmul.f32 %v2904, 1.442695
    %v2915 = vpow.pop %v2914
    %v2916 = vmul.f32 %v2905, 1.442695
    %v2917 = vpow.pop %v2916
    %v2918 = vmul.f32 %v2906, 1.442695
    %v2919 = vpow.pop %v2918
    %v2920 = vmul.f32 %v2907, 1.442695
    %v2921 = vpow.pop %v2920
    %v2922 = vmul.f32 %v2908, 1.442695
    %v2923 = vpow.pop %v2922
    %v2924 = vmul.f32 %v2909, 1.442695
    %v2925 = vpow.pop %v2924
    %v2926 = vsel %vm202, %v2911, 0.0
    %2927 = vadd.xlane.f32.xlu0 %v2926
    %v2928 = vpop.xlane.xlu0 %2927
    %v2929 = vsel %vm202, %v2913, 0.0
    %2930 = vadd.xlane.f32.xlu0 %v2929
    %v2931 = vpop.xlane.xlu0 %2930
    %v2932 = vsel %vm202, %v2915, 0.0
    %2933 = vadd.xlane.f32.xlu0 %v2932
    %v2934 = vpop.xlane.xlu0 %2933
    %v2935 = vsel %vm202, %v2917, 0.0
    %2936 = vadd.xlane.f32.xlu0 %v2935
    %v2937 = vpop.xlane.xlu0 %2936
    %v2938 = vsel %vm202, %v2919, 0.0
    %2939 = vadd.xlane.f32.xlu0 %v2938
    %v2940 = vpop.xlane.xlu0 %2939
    %v2941 = vsel %vm202, %v2921, 0.0
    %2942 = vadd.xlane.f32.xlu0 %v2941
    %v2943 = vpop.xlane.xlu0 %2942
    %v2944 = vsel %vm202, %v2923, 0.0
    %2945 = vadd.xlane.f32.xlu0 %v2944
    %v2946 = vpop.xlane.xlu0 %2945
    %v2947 = vsel %vm202, %v2925, 0.0
    %2948 = vadd.xlane.f32.xlu0 %v2947
    %v2949 = vpop.xlane.xlu0 %2948
    %v2950 = vrcp.pop %v2928
    %v2951 = vmul.f32 %v2928, %v2950
    %v2952 = vsub.f32 1.0, %v2951
    %v2953 = vmul.f32 %v2950, %v2952
    %v2954 = vadd.f32 %v2950, %v2953
    %vm2955 = vweird.f32 %v2928
    %vm2956 = vweird.f32 %v2950
    %vm2957 = vmor %vm2955, %vm2956
    %v2958 = vsel %vm2957, %v2950, %v2954
    %v2959 = vand.u32 2147483647, %v2928
    %vm2960 = vcmp.eq.f32.partialorder %v2959, 8.507059e+37
    %v2961 = vand.u32 %v2928, 2147483648
    %v2962 = vor.u32 1.1754944e-38, %v2961
    %v2963 = vsel %vm2960, %v2962, %v2958
    %v2964 = vrcp.pop %v2931
    %v2965 = vmul.f32 %v2931, %v2964
    %v2966 = vsub.f32 1.0, %v2965
    %v2967 = vmul.f32 %v2964, %v2966
    %v2968 = vadd.f32 %v2964, %v2967
    %vm2969 = vweird.f32 %v2931
    %vm2970 = vweird.f32 %v2964
    %vm2971 = vmor %vm2969, %vm2970
    %v2972 = vsel %vm2971, %v2964, %v2968
    %v2973 = vand.u32 2147483647, %v2931
    %vm2974 = vcmp.eq.f32.partialorder %v2973, 8.507059e+37
    %v2975 = vand.u32 %v2931, 2147483648
    %v2976 = vor.u32 1.1754944e-38, %v2975
    %v2977 = vsel %vm2974, %v2976, %v2972
    %v2978 = vrcp.pop %v2934
    %v2979 = vmul.f32 %v2934, %v2978
    %v2980 = vsub.f32 1.0, %v2979
    %v2981 = vmul.f32 %v2978, %v2980
    %v2982 = vadd.f32 %v2978, %v2981
    %vm2983 = vweird.f32 %v2934
    %vm2984 = vweird.f32 %v2978
    %vm2985 = vmor %vm2983, %vm2984
    %v2986 = vsel %vm2985, %v2978, %v2982
    %v2987 = vand.u32 2147483647, %v2934
    %vm2988 = vcmp.eq.f32.partialorder %v2987, 8.507059e+37
    %v2989 = vand.u32 %v2934, 2147483648
    %v2990 = vor.u32 1.1754944e-38, %v2989
    %v2991 = vsel %vm2988, %v2990, %v2986
    %v2992 = vrcp.pop %v2937
    %v2993 = vmul.f32 %v2937, %v2992
    %v2994 = vsub.f32 1.0, %v2993
    %v2995 = vmul.f32 %v2992, %v2994
    %v2996 = vadd.f32 %v2992, %v2995
    %vm2997 = vweird.f32 %v2937
    %vm2998 = vweird.f32 %v2992
    %vm2999 = vmor %vm2997, %vm2998
    %v3000 = vsel %vm2999, %v2992, %v2996
    %v3001 = vand.u32 2147483647, %v2937
    %vm3002 = vcmp.eq.f32.partialorder %v3001, 8.507059e+37
    %v3003 = vand.u32 %v2937, 2147483648
    %v3004 = vor.u32 1.1754944e-38, %v3003
    %v3005 = vsel %vm3002, %v3004, %v3000
    %v3006 = vrcp.pop %v2940
    %v3007 = vmul.f32 %v2940, %v3006
    %v3008 = vsub.f32 1.0, %v3007
    %v3009 = vmul.f32 %v3006, %v3008
    %v3010 = vadd.f32 %v3006, %v3009
    %vm3011 = vweird.f32 %v2940
    %vm3012 = vweird.f32 %v3006
    %vm3013 = vmor %vm3011, %vm3012
    %v3014 = vsel %vm3013, %v3006, %v3010
    %v3015 = vand.u32 2147483647, %v2940
    %vm3016 = vcmp.eq.f32.partialorder %v3015, 8.507059e+37
    %v3017 = vand.u32 %v2940, 2147483648
    %v3018 = vor.u32 1.1754944e-38, %v3017
    %v3019 = vsel %vm3016, %v3018, %v3014
    %v3020 = vrcp.pop %v2943
    %v3021 = vmul.f32 %v2943, %v3020
    %v3022 = vsub.f32 1.0, %v3021
    %v3023 = vmul.f32 %v3020, %v3022
    %v3024 = vadd.f32 %v3020, %v3023
    %vm3025 = vweird.f32 %v2943
    %vm3026 = vweird.f32 %v3020
    %vm3027 = vmor %vm3025, %vm3026
    %v3028 = vsel %vm3027, %v3020, %v3024
    %v3029 = vand.u32 2147483647, %v2943
    %vm3030 = vcmp.eq.f32.partialorder %v3029, 8.507059e+37
    %v3031 = vand.u32 %v2943, 2147483648
    %v3032 = vor.u32 1.1754944e-38, %v3031
    %v3033 = vsel %vm3030, %v3032, %v3028
    %v3034 = vrcp.pop %v2946
    %v3035 = vmul.f32 %v2946, %v3034
    %v3036 = vsub.f32 1.0, %v3035
    %v3037 = vmul.f32 %v3034, %v3036
    %v3038 = vadd.f32 %v3034, %v3037
    %vm3039 = vweird.f32 %v2946
    %vm3040 = vweird.f32 %v3034
    %vm3041 = vmor %vm3039, %vm3040
    %v3042 = vsel %vm3041, %v3034, %v3038
    %v3043 = vand.u32 2147483647, %v2946
    %vm3044 = vcmp.eq.f32.partialorder %v3043, 8.507059e+37
    %v3045 = vand.u32 %v2946, 2147483648
    %v3046 = vor.u32 1.1754944e-38, %v3045
    %v3047 = vsel %vm3044, %v3046, %v3042
    %v3048 = vrcp.pop %v2949
    %v3049 = vmul.f32 %v2949, %v3048
    %v3050 = vsub.f32 1.0, %v3049
    %v3051 = vmul.f32 %v3048, %v3050
    %v3052 = vadd.f32 %v3048, %v3051
    %vm3053 = vweird.f32 %v2949
    %vm3054 = vweird.f32 %v3048
    %vm3055 = vmor %vm3053, %vm3054
    %v3056 = vsel %vm3055, %v3048, %v3052
    %v3057 = vand.u32 2147483647, %v2949
    %vm3058 = vcmp.eq.f32.partialorder %v3057, 8.507059e+37
    %v3059 = vand.u32 %v2949, 2147483648
    %v3060 = vor.u32 1.1754944e-38, %v3059
    %v3061 = vsel %vm3058, %v3060, %v3056
    %v3062 = vmul.f32 %v2911, %v2963
    %v3063 = vmul.f32 %v2913, %v2977
    %v3064 = vmul.f32 %v2915, %v2991
    %v3065 = vmul.f32 %v2917, %v3005
    %v3066 = vmul.f32 %v2919, %v3019
    %v3067 = vmul.f32 %v2921, %v3033
    %v3068 = vmul.f32 %v2923, %v3047
    %v3069 = vmul.f32 %v2925, %v3061
    %v3072 = vsel %vm202, %v3062, 0
    %3074 = vmatpush.msra.mxu0 0.0
    %3075 = vmatpush.msra.mxu0 0.0
    %3076 = vmatpush.msra.mxu0 0.0
    %3077 = vmatpush.msra.mxu0 0.0
    %3078 = vmatpush.msra.mxu0 0.0
    %3079 = vmatpush.msra.mxu0 0.0
    %3080 = vmatpush.msra.mxu0 0.0
    %3081 = vmatpush.msra.mxu0 0.0
    %3082 = vmatpush.msra.mxu0 0.0
    %3083 = vmatpush.msra.mxu0 0.0
    %3084 = vmatpush.msra.mxu0 0.0
    %3085 = vmatpush.msra.mxu0 0.0
    %3086 = vmatpush.msra.mxu0 0.0
    %3087 = vmatpush.msra.mxu0 0.0
    %3088 = vmatpush.msra.mxu0 0.0
    %3089 = vmatpush.msra.mxu0 %v2673
    %3090 = vmatmul.f32.gmra.mxu0 %v3072
    %v3091 = vpop.f32.mrf.mxu0
    %v3092 = vadd.f32 0.0, %v3091
    %3093 = vdwg.mxu0
    %v3096 = vsel %vm202, %v3063, 0
    %3098 = vmatpush.msra.mxu0 0.0
    %3099 = vmatpush.msra.mxu0 0.0
    %3100 = vmatpush.msra.mxu0 0.0
    %3101 = vmatpush.msra.mxu0 0.0
    %3102 = vmatpush.msra.mxu0 0.0
    %3103 = vmatpush.msra.mxu0 0.0
    %3104 = vmatpush.msra.mxu0 0.0
    %3105 = vmatpush.msra.mxu0 0.0
    %3106 = vmatpush.msra.mxu0 0.0
    %3107 = vmatpush.msra.mxu0 0.0
    %3108 = vmatpush.msra.mxu0 0.0
    %3109 = vmatpush.msra.mxu0 0.0
    %3110 = vmatpush.msra.mxu0 0.0
    %3111 = vmatpush.msra.mxu0 0.0
    %3112 = vmatpush.msra.mxu0 0.0
    %3113 = vmatpush.msra.mxu0 %v2675
    %3114 = vmatmul.f32.gmra.mxu0 %v3096
    %v3115 = vpop.f32.mrf.mxu0
    %v3116 = vadd.f32 0.0, %v3115
    %3117 = vdwg.mxu0
    %3118 = vrot.lane.b32.xlu0 %v2673, 96
    %v3119 = vpop.permute.xlu0 %3118
    %v3122 = vsel %vm202, %v3064, 0
    %3124 = vmatpush.msra.mxu0 0.0
    %3125 = vmatpush.msra.mxu0 0.0
    %3126 = vmatpush.msra.mxu0 0.0
    %3127 = vmatpush.msra.mxu0 0.0
    %3128 = vmatpush.msra.mxu0 0.0
    %3129 = vmatpush.msra.mxu0 0.0
    %3130 = vmatpush.msra.mxu0 0.0
    %3131 = vmatpush.msra.mxu0 0.0
    %3132 = vmatpush.msra.mxu0 0.0
    %3133 = vmatpush.msra.mxu0 0.0
    %3134 = vmatpush.msra.mxu0 0.0
    %3135 = vmatpush.msra.mxu0 0.0
    %3136 = vmatpush.msra.mxu0 0.0
    %3137 = vmatpush.msra.mxu0 0.0
    %3138 = vmatpush.msra.mxu0 0.0
    %3139 = vmatpush.msra.mxu0 %v3119
    %3140 = vmatmul.f32.gmra.mxu0 %v3122
    %v3141 = vpop.f32.mrf.mxu0
    %v3142 = vadd.f32 0.0, %v3141
    %3143 = vdwg.mxu0
    %3144 = vrot.lane.b32.xlu0 %v2675, 96
    %v3145 = vpop.permute.xlu0 %3144
    %v3148 = vsel %vm202, %v3065, 0
    %3150 = vmatpush.msra.mxu0 0.0
    %3151 = vmatpush.msra.mxu0 0.0
    %3152 = vmatpush.msra.mxu0 0.0
    %3153 = vmatpush.msra.mxu0 0.0
    %3154 = vmatpush.msra.mxu0 0.0
    %3155 = vmatpush.msra.mxu0 0.0
    %3156 = vmatpush.msra.mxu0 0.0
    %3157 = vmatpush.msra.mxu0 0.0
    %3158 = vmatpush.msra.mxu0 0.0
    %3159 = vmatpush.msra.mxu0 0.0
    %3160 = vmatpush.msra.mxu0 0.0
    %3161 = vmatpush.msra.mxu0 0.0
    %3162 = vmatpush.msra.mxu0 0.0
    %3163 = vmatpush.msra.mxu0 0.0
    %3164 = vmatpush.msra.mxu0 0.0
    %3165 = vmatpush.msra.mxu0 %v3145
    %3166 = vmatmul.f32.gmra.mxu0 %v3148
    %v3167 = vpop.f32.mrf.mxu0
    %v3168 = vadd.f32 0.0, %v3167
    %3169 = vdwg.mxu0
    %3170 = vrot.lane.b32.xlu0 %v2677, 96
    %v3171 = vpop.permute.xlu0 %3170
    %v3174 = vsel %vm202, %v3066, 0
    %3176 = vmatpush.msra.mxu0 0.0
    %3177 = vmatpush.msra.mxu0 0.0
    %3178 = vmatpush.msra.mxu0 0.0
    %3179 = vmatpush.msra.mxu0 0.0
    %3180 = vmatpush.msra.mxu0 0.0
    %3181 = vmatpush.msra.mxu0 0.0
    %3182 = vmatpush.msra.mxu0 0.0
    %3183 = vmatpush.msra.mxu0 0.0
    %3184 = vmatpush.msra.mxu0 0.0
    %3185 = vmatpush.msra.mxu0 0.0
    %3186 = vmatpush.msra.mxu0 0.0
    %3187 = vmatpush.msra.mxu0 0.0
    %3188 = vmatpush.msra.mxu0 0.0
    %3189 = vmatpush.msra.mxu0 0.0
    %3190 = vmatpush.msra.mxu0 0.0
    %3191 = vmatpush.msra.mxu0 %v3171
    %3192 = vmatmul.f32.gmra.mxu0 %v3174
    %v3193 = vpop.f32.mrf.mxu0
    %v3194 = vadd.f32 0.0, %v3193
    %3195 = vdwg.mxu0
    %3196 = vrot.lane.b32.xlu0 %v2679, 96
    %v3197 = vpop.permute.xlu0 %3196
    %v3200 = vsel %vm202, %v3067, 0
    %3202 = vmatpush.msra.mxu0 0.0
    %3203 = vmatpush.msra.mxu0 0.0
    %3204 = vmatpush.msra.mxu0 0.0
    %3205 = vmatpush.msra.mxu0 0.0
    %3206 = vmatpush.msra.mxu0 0.0
    %3207 = vmatpush.msra.mxu0 0.0
    %3208 = vmatpush.msra.mxu0 0.0
    %3209 = vmatpush.msra.mxu0 0.0
    %3210 = vmatpush.msra.mxu0 0.0
    %3211 = vmatpush.msra.mxu0 0.0
    %3212 = vmatpush.msra.mxu0 0.0
    %3213 = vmatpush.msra.mxu0 0.0
    %3214 = vmatpush.msra.mxu0 0.0
    %3215 = vmatpush.msra.mxu0 0.0
    %3216 = vmatpush.msra.mxu0 0.0
    %3217 = vmatpush.msra.mxu0 %v3197
    %3218 = vmatmul.f32.gmra.mxu0 %v3200
    %v3219 = vpop.f32.mrf.mxu0
    %v3220 = vadd.f32 0.0, %v3219
    %3221 = vdwg.mxu0
    %3222 = vrot.lane.b32.xlu0 %v2683, 96
    %v3223 = vpop.permute.xlu0 %3222
    %v3226 = vsel %vm202, %v3068, 0
    %3228 = vmatpush.msra.mxu0 0.0
    %3229 = vmatpush.msra.mxu0 0.0
    %3230 = vmatpush.msra.mxu0 0.0
    %3231 = vmatpush.msra.mxu0 0.0
    %3232 = vmatpush.msra.mxu0 0.0
    %3233 = vmatpush.msra.mxu0 0.0
    %3234 = vmatpush.msra.mxu0 0.0
    %3235 = vmatpush.msra.mxu0 0.0
    %3236 = vmatpush.msra.mxu0 0.0
    %3237 = vmatpush.msra.mxu0 0.0
    %3238 = vmatpush.msra.mxu0 0.0
    %3239 = vmatpush.msra.mxu0 0.0
    %3240 = vmatpush.msra.mxu0 0.0
    %3241 = vmatpush.msra.mxu0 0.0
    %3242 = vmatpush.msra.mxu0 0.0
    %3243 = vmatpush.msra.mxu0 %v3223
    %3244 = vmatmul.f32.gmra.mxu0 %v3226
    %v3245 = vpop.f32.mrf.mxu0
    %v3246 = vadd.f32 0.0, %v3245
    %3247 = vdwg.mxu0
    %3248 = vrot.lane.b32.xlu0 %v2685, 96
    %v3249 = vpop.permute.xlu0 %3248
    %v3252 = vsel %vm202, %v3069, 0
    %3254 = vmatpush.msra.mxu0 0.0
    %3255 = vmatpush.msra.mxu0 0.0
    %3256 = vmatpush.msra.mxu0 0.0
    %3257 = vmatpush.msra.mxu0 0.0
    %3258 = vmatpush.msra.mxu0 0.0
    %3259 = vmatpush.msra.mxu0 0.0
    %3260 = vmatpush.msra.mxu0 0.0
    %3261 = vmatpush.msra.mxu0 0.0
    %3262 = vmatpush.msra.mxu0 0.0
    %3263 = vmatpush.msra.mxu0 0.0
    %3264 = vmatpush.msra.mxu0 0.0
    %3265 = vmatpush.msra.mxu0 0.0
    %3266 = vmatpush.msra.mxu0 0.0
    %3267 = vmatpush.msra.mxu0 0.0
    %3268 = vmatpush.msra.mxu0 0.0
    %3269 = vmatpush.msra.mxu0 %v3249
    %3270 = vmatmul.f32.gmra.mxu0 %v3252
    %v3271 = vpop.f32.mrf.mxu0
    %v3272 = vadd.f32 0.0, %v3271
    %3273 = vdwg.mxu0
    %v3274 = vadd.f32 %v3092, %v3142
    %v3275 = vadd.f32 %v3116, %v3168
    %v3276 = vadd.f32 %v3274, %v3194
    %v3277 = vadd.f32 %v3275, %v3220
    %v3278 = vadd.f32 %v3276, %v3246
    %v3279 = vadd.f32 %v3277, %v3272
    %v3280 = vadd.f32 %v2497, %v3278
    %v3281 = vadd.f32 %v2498, %v3279
    %v3282 = vld [vmem:[%s5 + $0x21] ss:$0 sm:$0xff]
    %v3283 = vadd.f32 %v3280, %v3282
    %v3284 = vadd.f32 %v3281, %v3282
    %v3285 = vld [vmem:[%s5 + $0x26] ss:$0 sm:$0xff]
    %v3286 = vld [vmem:[%s5 + $0x31] ss:$0 sm:$0xff]
    %v3287 = vsel %vm52, %v3283, 0.0
    %3288 = vadd.xlane.f32.xlu0 %v3287
    %v3289 = vpop.xlane.xlu0 %3288
    %v3290 = vsel %vm52, %v3284, 0.0
    %3291 = vadd.xlane.f32.xlu0 %v3290
    %v3292 = vpop.xlane.xlu0 %3291
    %v3293 = vmul.f32 %v3289, %v65
    %v3294 = vmul.f32 %v3292, %v65
    %v3295 = vsub.f32 %v3283, %v3293
    %v3296 = vsub.f32 %v3284, %v3294
    %v3297 = vmul.f32 %v3295, %v3295
    %v3298 = vmul.f32 %v3296, %v3296
    %v3299 = vsel %vm52, %v3297, 0.0
    %3300 = vadd.xlane.f32.xlu0 %v3299
    %v3301 = vpop.xlane.xlu0 %3300
    %v3302 = vsel %vm52, %v3298, 0.0
    %3303 = vadd.xlane.f32.xlu0 %v3302
    %v3304 = vpop.xlane.xlu0 %3303
    %v3305 = vmul.f32 %v3301, %v65
    %v3306 = vmul.f32 %v3304, %v65
    %v3307 = vadd.f32 %v3305, 1e-05
    %v3308 = vadd.f32 %v3306, 1e-05
    %v3309 = vrsqrt.pop %v3307
    %v3310 = vmul.f32 %v3309, %v3307
    %v3311 = vmul.f32 %v3310, %v3309
    %v3312 = vmul.f32 0.5, %v3311
    %v3313 = vsub.f32 1.5, %v3312
    %v3314 = vmul.f32 %v3309, %v3313
    %vm3315 = vweird.f32 %v3307
    %vm3316 = vweird.f32 %v3309
    %vm3317 = vmor %vm3315, %vm3316
    %v3318 = vsel %vm3317, %v3309, %v3314
    %v3319 = vrsqrt.pop %v3308
    %v3320 = vmul.f32 %v3319, %v3308
    %v3321 = vmul.f32 %v3320, %v3319
    %v3322 = vmul.f32 0.5, %v3321
    %v3323 = vsub.f32 1.5, %v3322
    %v3324 = vmul.f32 %v3319, %v3323
    %vm3325 = vweird.f32 %v3308
    %vm3326 = vweird.f32 %v3319
    %vm3327 = vmor %vm3325, %vm3326
    %v3328 = vsel %vm3327, %v3319, %v3324
    %v3329 = vmul.f32 %v3295, %v3318
    %v3330 = vmul.f32 %v3296, %v3328
    %v3331 = vmul.f32 %v3329, %v3285
    %v3332 = vmul.f32 %v3330, %v3285
    %v3333 = vadd.f32 %v3331, %v3286
    %v3334 = vadd.f32 %v3332, %v3286
    %v3335 = vld [vmem:[#allocation2 + $0xe8] sm:$0xff]
    %v3336 = vld [vmem:[#allocation2 + $0x118] sm:$0xff]
    %v3337 = vld [vmem:[#allocation2 + $0x148] sm:$0xff]
    %v3338 = vld [vmem:[#allocation2 + $0x178] sm:$0xff]
    %v3339 = vld [vmem:[%s5 + $0x22] ss:$0 sm:$0xff]
    %v3341 = vsel %vm52, %v3333, 0
    %v3344 = vsel %vm52, %v3334, 0
    %3346 = vmatpush.msra.mxu0 0.0
    %3347 = vmatpush.msra.mxu0 0.0
    %3348 = vmatpush.msra.mxu0 0.0
    %3349 = vmatpush.msra.mxu0 0.0
    %3350 = vmatpush.msra.mxu0 0.0
    %3351 = vmatpush.msra.mxu0 0.0
    %3352 = vmatpush.msra.mxu0 0.0
    %3353 = vmatpush.msra.mxu0 0.0
    %3354 = vmatpush.msra.mxu0 0.0
    %3355 = vmatpush.msra.mxu0 0.0
    %3356 = vmatpush.msra.mxu0 0.0
    %3357 = vmatpush.msra.mxu0 0.0
    %3358 = vmatpush.msra.mxu0 %v3338
    %3359 = vmatpush.msra.mxu0 %v3337
    %3360 = vmatpush.msra.mxu0 %v3336
    %3361 = vmatpush.msra.mxu0 %v3335
    %3362 = vmatmul.f32.gmra.mxu0 %v3341
    %v3363 = vpop.f32.mrf.mxu0
    %v3364 = vadd.f32 %v3339, %v3363
    %3365 = vmatmul.f32.gmra.mxu0 %v3344
    %v3366 = vpop.f32.mrf.mxu0
    %v3367 = vadd.f32 %v3339, %v3366
    %3368 = vdwg.mxu0
    %v3369 = vmax.f32 %v3364, 0.0
    %v3370 = vmax.f32 %v3367, 0.0
    %v3371 = vld [vmem:[%s4 + $0x40] sm:$0xff]
    %v3372 = vld [vmem:[%s4 + $0x48] sm:$0xff]
    %v3373 = vld [vmem:[%s4 + $0x50] sm:$0xff]
    %v3374 = vld [vmem:[%s4 + $0x58] sm:$0xff]
    %v3375 = vld [vmem:[%s4 + $0x60] sm:$0xff]
    %v3376 = vld [vmem:[%s4 + $0x68] sm:$0xff]
    %v3377 = vld [vmem:[%s4 + $0x70] sm:$0xff]
    %v3378 = vld [vmem:[%s4 + $0x78] sm:$0xff]
    %v3380 = vsel %vm1704, %v3369, 0
    %v3383 = vsel %vm1704, %v3370, 0
    %3385 = vmatpush.msra.mxu0 0.0
    %3386 = vmatpush.msra.mxu0 0.0
    %3387 = vmatpush.msra.mxu0 0.0
    %3388 = vmatpush.msra.mxu0 0.0
    %3389 = vmatpush.msra.mxu0 0.0
    %3390 = vmatpush.msra.mxu0 0.0
    %3391 = vmatpush.msra.mxu0 0.0
    %3392 = vmatpush.msra.mxu0 0.0
    %3393 = vmatpush.msra.mxu0 %v3378
    %3394 = vmatpush.msra.mxu0 %v3377
    %3395 = vmatpush.msra.mxu0 %v3376
    %3396 = vmatpush.msra.mxu0 %v3375
    %3397 = vmatpush.msra.mxu0 %v3374
    %3398 = vmatpush.msra.mxu0 %v3373
    %3399 = vmatpush.msra.mxu0 %v3372
    %3400 = vmatpush.msra.mxu0 %v3371
    %3401 = vmatmul.f32.gmra.mxu0 %v3380
    %v3402 = vpop.f32.mrf.mxu0
    %v3403 = vadd.f32 0.0, %v3402
    %3404 = vmatmul.f32.gmra.mxu0 %v3383
    %v3405 = vpop.f32.mrf.mxu0
    %v3406 = vadd.f32 0.0, %v3405
    %3407 = vdwg.mxu0
    %v3408 = vadd.f32 %v3283, %v3403
    %v3409 = vadd.f32 %v3284, %v3406
    %v3410 = vld [vmem:[%s5 + $0x23] ss:$0 sm:$0xff]
    %v3411 = vadd.f32 %v3408, %v3410
    %v3412 = vadd.f32 %v3409, %v3410
    %v3413 = vld [vmem:[%s5 + $0x32] ss:$0 sm:$0xff]
    %v3414 = vld [vmem:[%s5 + $0x33] ss:$0 sm:$0xff]
    %v3415 = vsel %vm52, %v3411, 0.0
    %3416 = vadd.xlane.f32.xlu0 %v3415
    %v3417 = vpop.xlane.xlu0 %3416
    %v3418 = vsel %vm52, %v3412, 0.0
    %3419 = vadd.xlane.f32.xlu0 %v3418
    %v3420 = vpop.xlane.xlu0 %3419
    %v3421 = vmul.f32 %v3417, %v65
    %v3422 = vmul.f32 %v3420, %v65
    %v3423 = vsub.f32 %v3411, %v3421
    %v3424 = vsub.f32 %v3412, %v3422
    %v3425 = vmul.f32 %v3423, %v3423
    %v3426 = vmul.f32 %v3424, %v3424
    %v3427 = vsel %vm52, %v3425, 0.0
    %3428 = vadd.xlane.f32.xlu0 %v3427
    %v3429 = vpop.xlane.xlu0 %3428
    %v3430 = vsel %vm52, %v3426, 0.0
    %3431 = vadd.xlane.f32.xlu0 %v3430
    %v3432 = vpop.xlane.xlu0 %3431
    %v3433 = vmul.f32 %v3429, %v65
    %v3434 = vmul.f32 %v3432, %v65
    %v3435 = vadd.f32 %v3433, 1e-05
    %v3436 = vadd.f32 %v3434, 1e-05
    %v3437 = vrsqrt.pop %v3435
    %v3438 = vmul.f32 %v3437, %v3435
    %v3439 = vmul.f32 %v3438, %v3437
    %v3440 = vmul.f32 0.5, %v3439
    %v3441 = vsub.f32 1.5, %v3440
    %v3442 = vmul.f32 %v3437, %v3441
    %vm3443 = vweird.f32 %v3435
    %vm3444 = vweird.f32 %v3437
    %vm3445 = vmor %vm3443, %vm3444
    %v3446 = vsel %vm3445, %v3437, %v3442
    %v3447 = vrsqrt.pop %v3436
    %v3448 = vmul.f32 %v3447, %v3436
    %v3449 = vmul.f32 %v3448, %v3447
    %v3450 = vmul.f32 0.5, %v3449
    %v3451 = vsub.f32 1.5, %v3450
    %v3452 = vmul.f32 %v3447, %v3451
    %vm3453 = vweird.f32 %v3436
    %vm3454 = vweird.f32 %v3447
    %vm3455 = vmor %vm3453, %vm3454
    %v3456 = vsel %vm3455, %v3447, %v3452
    %v3457 = vmul.f32 %v3423, %v3446
    %v3458 = vmul.f32 %v3424, %v3456
    %v3459 = vmul.f32 %v3457, %v3413
    %v3460 = vmul.f32 %v3458, %v3413
    %v3461 = vadd.f32 %v3459, %v3414
    %v3462 = vadd.f32 %v3460, %v3414
    %3463 = vst.msk [vmem:[#allocation5] sm:$0xff] %vm52, %v3461
    %3464 = vst.msk [vmem:[#allocation5 + $0x8] sm:$0xff] %vm52, %v3462
    // Predicated region
    $region30: #{tpu_custom_call.1} parent=1 // pred_check
      _
    $region31: #{tpu_custom_call.1} parent=1 // pred_check_branch
      %3466 = sbr.rel (0) target = $region33
    $region32: #{tpu_custom_call.1} parent=1 // pred_region
      %3468 = vsyncadd [#allocation4], 0
      %s3469 = sshll.u32 [#allocation5], 4
      %s3470 = int_to_ptr.vmem [resolvable:$true] %s3469
      %s3471 = sshll.u32 %s6, 4
      %s3472 = int_to_ptr.hbm [resolvable:$true] %s3471
      %3477 = dma.vmem_to_hbm [thread:$0]  %s3470, 256, %s3472, [#allocation4], 128, 128, 8
    $region33: #{tpu_custom_call.1} parent=1 // pred_fallthru
      _
    // Predicated region
    $region34: #{tpu_custom_call.1} parent=1 // pred_check
      _
    $region35: #{tpu_custom_call.1} parent=1 // pred_check_branch
      %3479 = sbr.rel (0) target = $region37
    $region36: #{tpu_custom_call.1} parent=1 // pred_region
      %3481 = dma.done [#allocation4], 256
    $region37: #{tpu_custom_call.1} parent=1 // pred_fallthru
      _
    %3482 = vsyncpa [#allocation3], 1
    %3483 = vsyncpa [#allocation4], 1

</llo_original>
